<compile_context>
chip_gen: v7x
topology: tpu7x:2x2x1
jax: 0.10.0
libtpu: 0.0.40
codegen_flags: <defaults>
</compile_context>

<pallas_src>
import numpy as np

import jax
import jax.numpy as jnp
from jax import lax
from jax.experimental import pallas as pl
from jax.experimental.pallas import tpu as pltpu


# ----------------------------------------------------------------------------
# Small helpers
# ----------------------------------------------------------------------------
def _shift_lanes(a, shift):
    """Return b with b[:, q] = a[:, (q + shift) mod n].

    Wrapped lanes are zeroed afterwards by the boundary mask, so only the
    direction of the shift matters for correctness of interior pixels.
    """
    n = a.shape[-1]
    s = shift % n
    if s == 0:
        return a
    return jnp.concatenate([a[:, s:], a[:, :s]], axis=-1)


def _const_spec(a):
    """BlockSpec for a weight that is resident in VMEM for the whole grid."""
    nd = a.ndim
    return pl.BlockSpec(a.shape, lambda b, s, _nd=nd: (0,) * _nd)


def _build_tap_masks(K, H, W):
    """(K*K, H*W) 0/1 masks implementing zero 'SAME' padding for a KxK conv."""
    off = (K - 1) // 2
    m = np.zeros((K * K, H * W), np.float32)
    for dy in range(K):
        for dx in range(K):
            t = dy * K + dx
            for r in range(H):
                rr = r + dy - off
                if not (0 <= rr < H):
                    continue
                for c in range(W):
                    cc = c + dx - off
                    if 0 <= cc < W:
                        m[t, r * W + c] = 1.0
    return m


def _build_sa_matrix(sa_w, H, W):
    """Fold the CBAM KxK spatial-attention conv into a (2*H*W, H*W) matrix.

    Rows [0:P)   : contribution of the channel-mean map.
    Rows [P:2P)  : contribution of the channel-max map.
    """
    Ks = sa_w.shape[0]
    off = (Ks - 1) // 2
    P = H * W
    sa_w = np.asarray(sa_w, np.float32)
    mat = np.zeros((2 * P, P), np.float32)
    for dy in range(Ks):
        for dx in range(Ks):
            for r in range(H):
                rr = r + dy - off
                if not (0 <= rr < H):
                    continue
                for c in range(W):
                    cc = c + dx - off
                    if not (0 <= cc < W):
                        continue
                    q = r * W + c
                    qp = rr * W + cc
                    mat[qp, q] = sa_w[dy, dx, 0]
                    mat[P + qp, q] = sa_w[dy, dx, 1]
    return mat


# ----------------------------------------------------------------------------
# Fused kernel: CBAM -> embed -> ConvLSTM stack -> output head, whole sequence
# ----------------------------------------------------------------------------
def _build_kernel(T, W, K, layer_dims):
    KK = K * K
    off = (K - 1) // 2
    L = len(layer_dims)

    def kernel(prefix_ref, spatial_ref, ca_w1_ref, ca_w2_ref, sa_mat_ref,
               emb_w_ref, emb_b_ref, masks_ref, *rest):
        cell_wb = [(rest[2 * l], rest[2 * l + 1]) for l in range(L)]
        out_w_ref = rest[2 * L]
        out_b_ref = rest[2 * L + 1]
        y_out_ref = rest[2 * L + 2]
        cols_ref = rest[2 * L + 3]
        state = [(rest[2 * L + 4 + 2 * l], rest[2 * L + 5 + 2 * l])
                 for l in range(L)]
        yprev_ref = rest[2 * L + 4 + 2 * L]

        s = pl.program_id(1)      # time step within this batch element

        @pl.when(s == 0)
        def _init():
            for h_ref, c_ref in state:
                h_ref[...] = jnp.zeros_like(h_ref)
                c_ref[...] = jnp.zeros_like(c_ref)
            yprev_ref[...] = jnp.zeros_like(yprev_ref)

        # ---- assemble the step input [frame ; spatial] in (C, P) layout ----
        # warm-up (s < T-1): prefix[s]; first prediction (s == T-1): prefix[-1];
        # later predictions: previous output (autoregressive feedback).
        use_prev = (s >= T).astype(jnp.float32)
        frame = (1.0 - use_prev) * prefix_ref[0, 0] + use_prev * yprev_ref[...]
        x = jnp.concatenate([frame, spatial_ref[0]], axis=0)        # (Cin, P)

        # ---- CBAM channel attention (shared bias-free MLP on avg/max pool) ----
        pooled = jnp.concatenate(
            [jnp.mean(x, axis=1, keepdims=True),
             jnp.max(x, axis=1, keepdims=True)], axis=1)            # (Cin, 2)
        hid = jnp.maximum(
            jnp.dot(ca_w1_ref[...], pooled,
                    preferred_element_type=jnp.float32), 0.0)       # (Cr, 2)
        z = jnp.dot(ca_w2_ref[...], hid,
                    preferred_element_type=jnp.float32)             # (Cin, 2)
        ca = jax.nn.sigmoid(z[:, 0:1] + z[:, 1:2])                  # (Cin, 1)
        x = x * ca

        # ---- CBAM spatial attention: 7x7 conv folded into one matmul ----
        sa_in = jnp.concatenate(
            [jnp.mean(x, axis=0, keepdims=True),
             jnp.max(x, axis=0, keepdims=True)], axis=1)            # (1, 2P)
        sa = jax.nn.sigmoid(
            jnp.dot(sa_in, sa_mat_ref[...],
                    preferred_element_type=jnp.float32))            # (1, P)
        x = x * sa

        # ---- embed (1x1 conv) + ReLU ----
        inp = jnp.maximum(
            jnp.dot(emb_w_ref[...], x, preferred_element_type=jnp.float32)
            + emb_b_ref[...], 0.0)                                  # (Ch0, P)

        # ---- ConvLSTM stack: shift/mask im2col + one MXU matmul per cell ----
        for l in range(L):
            cin_l, ch_l = layer_dims[l]
            ctot = cin_l + ch_l
            w_ref, b_ref = cell_wb[l]
            h_ref, c_ref = state[l]
            # joint [x ; h] tensor, shifted once per tap (halves shift count)
            z_cat = jnp.concatenate([inp, h_ref[...]], axis=0)      # (Ctot, P)
            for t in range(KK):
                dy, dx = t // K, t % K
                shift = (dy - off) * W + (dx - off)
                base = t * ctot
                if dy == off and dx == off:
                    cols_ref[base:base + ctot, :] = z_cat           # center tap
                else:
                    cols_ref[base:base + ctot, :] = (
                        _shift_lanes(z_cat, shift) * masks_ref[t:t + 1, :])
            gates = (jnp.dot(w_ref[...], cols_ref[0:KK * ctot, :],
                             preferred_element_type=jnp.float32)
                     + b_ref[...])                                  # (4Ch, P)
            # gate slices land on sublane-tile boundaries (Ch is a mult. of 8)
            i_g = jax.nn.sigmoid(gates[0 * ch_l:1 * ch_l])
            f_g = jax.nn.sigmoid(gates[1 * ch_l:2 * ch_l])
            o_g = jax.nn.sigmoid(gates[2 * ch_l:3 * ch_l])
            g_g = jnp.tanh(gates[3 * ch_l:4 * ch_l])
            c_new = f_g * c_ref[...] + i_g * g_g
            h_new = o_g * jnp.tanh(c_new)
            c_ref[...] = c_new
            h_ref[...] = h_new
            inp = h_new

        # ---- output head (1x1 conv + sigmoid) + autoregressive feedback ----
        # Only needed on prediction steps (warm-up outputs are discarded).
        @pl.when(s >= T - 1)
        def _head():
            y = jax.nn.sigmoid(
                jnp.dot(out_w_ref[...], inp,
                        preferred_element_type=jnp.float32)
                + out_b_ref[...])                                   # (1, P)
            yprev_ref[...] = y
            y_out_ref[0, 0] = y

    return kernel


# ----------------------------------------------------------------------------
# Parameter construction (canonical shapes, deterministic)
# ----------------------------------------------------------------------------
def make_params(key, in_channels, hidden_channels, num_layers,
                kernel_size, sa_kernel_size):
    ks = jax.random.split(key, 7 + 2 * num_layers)
    cr = max(in_channels // 2, 1)
    s = 0.1
    params = {
        "ca_w1": s * jax.random.normal(ks[0], (cr, in_channels), jnp.float32),
        "ca_w2": s * jax.random.normal(ks[1], (in_channels, cr), jnp.float32),
        "sa_w": s * jax.random.normal(
            ks[2], (sa_kernel_size, sa_kernel_size, 2), jnp.float32),
        "emb_w": s * jax.random.normal(
            ks[3], (hidden_channels[0], in_channels), jnp.float32),
        "emb_b": s * jax.random.normal(ks[4], (hidden_channels[0],), jnp.float32),
        "out_w": s * jax.random.normal(ks[5], (1, hidden_channels[-1]), jnp.float32),
        "out_b": s * jax.random.normal(ks[6], (1,), jnp.float32),
        "cells": [],
    }
    for i in range(num_layers):
        cin = hidden_channels[i]
        ch = hidden_channels[i + 1]
        k = kernel_size[i]
        params["cells"].append({
            # HWIO, input channels ordered [x ; h], outputs ordered [i,f,o,g]
            "w": s * jax.random.normal(ks[7 + 2 * i],
                                       (k, k, cin + ch, 4 * ch), jnp.float32),
            "b": s * jax.random.normal(ks[8 + 2 * i], (4 * ch,), jnp.float32),
        })
    return params


def _prepare_kernel_params(params, H, W, K):
    cells = []
    for cell in params["cells"]:
        w = np.asarray(cell["w"], np.float32)          # (K, K, Ctot, 4Ch)
        k, _, ctot, c4 = w.shape
        # column order (tap, channel) -> single (4Ch, K*K*Ctot) matmul weight
        wr = np.transpose(w, (3, 0, 1, 2)).reshape(c4, k * k * ctot)
        b = np.asarray(cell["b"], np.float32).reshape(c4, 1)
        cells.append((jnp.asarray(wr), jnp.asarray(b)))
    return {
        "ca_w1": params["ca_w1"],
        "ca_w2": params["ca_w2"],
        "sa_mat": jnp.asarray(_build_sa_matrix(params["sa_w"], H, W)),
        "emb_w": params["emb_w"],
        "emb_b": params["emb_b"].reshape(-1, 1),
        "masks": jnp.asarray(_build_tap_masks(K, H, W)),
        "cells": cells,
        "out_w": params["out_w"],
        "out_b": params["out_b"].reshape(1, 1),
    }


# ----------------------------------------------------------------------------
# Forward pass (mirrors CbamConvLSTM.forward with teacher_tensor=None)
# ----------------------------------------------------------------------------
def cbam_convlstm_forward(prefix, spatial, pred_len, params):
    # prefix : (T, B, 1, H, W)   spatial : (B, Cs, H, W)   (PyTorch NCHW)
    T, B, Cp, H, W = prefix.shape
    assert Cp == 1, "autoregressive feedback requires a single prefix channel"
    _, Cs, Hs, Ws = spatial.shape
    assert (Hs, Ws) == (H, W)
    P = H * W

    cells = params["cells"]
    L = len(cells)
    K = cells[0]["w"].shape[0]
    assert all(c["w"].shape[0] == K for c in cells), \
        "this translation requires all ConvLSTM kernel sizes to be equal"

    ch0 = params["emb_w"].shape[0]
    layer_dims = []
    cin_l = ch0
    for c in cells:
        ch_l = c["b"].shape[0] // 4
        layer_dims.append((cin_l, ch_l))
        cin_l = ch_l
    ctot_max = max(ci + ch for ci, ch in layer_dims)
    n_steps = (T - 1) + pred_len

    kp = _prepare_kernel_params(params, H, W, K)

    # channels-on-sublanes x pixels-on-lanes layout
    prefix_f = prefix.astype(jnp.float32).reshape(T, B, 1, P)
    spatial_f = spatial.astype(jnp.float32).reshape(B, Cs, P)

    ins = [prefix_f, spatial_f, kp["ca_w1"], kp["ca_w2"], kp["sa_mat"],
           kp["emb_w"], kp["emb_b"], kp["masks"]]
    in_specs = [
        pl.BlockSpec((1, 1, 1, P),
                     lambda b, s: (jnp.minimum(s, T - 1), b, 0, 0)),
        pl.BlockSpec((1, Cs, P), lambda b, s: (b, 0, 0)),
    ] + [_const_spec(a) for a in ins[2:]]
    for wl, bl in kp["cells"]:
        ins += [wl, bl]
        in_specs += [_const_spec(wl), _const_spec(bl)]
    ins += [kp["out_w"], kp["out_b"]]
    in_specs += [_const_spec(kp["out_w"]), _const_spec(kp["out_b"])]

    scratch = [pltpu.VMEM((K * K * ctot_max, P), jnp.float32)]      # im2col
    for _, ch in layer_dims:
        scratch += [pltpu.VMEM((ch, P), jnp.float32),               # h
                    pltpu.VMEM((ch, P), jnp.float32)]               # c
    scratch += [pltpu.VMEM((1, P), jnp.float32)]                    # y feedback

    kernel = _build_kernel(T, W, K, layer_dims)

    y = pl.pallas_call(
        kernel,
        out_shape=jax.ShapeDtypeStruct((pred_len, B, 1, P), jnp.float32),
        grid_spec=pltpu.PrefetchScalarGridSpec(
            num_scalar_prefetch=0,
            grid=(B, n_steps),
            in_specs=in_specs,
            out_specs=pl.BlockSpec(
                (1, 1, 1, P),
                lambda b, s: (jnp.maximum(s - (T - 1), 0), b, 0, 0)),
            scratch_shapes=scratch),
        compiler_params=pltpu.CompilerParams(
            dimension_semantics=("parallel", "arbitrary"),
            vmem_limit_bytes=32 * 1024 * 1024),
    )(*ins)

    return y.reshape(pred_len, B, 1, H, W)


# ----------------------------------------------------------------------------
# Pure-JAX reference (NCHW, lax.conv) used as a correctness check
# ----------------------------------------------------------------------------
def reference_forward(prefix, spatial, pred_len, params):
    HI = lax.Precision.HIGHEST
    T, B, Cp, H, W = prefix.shape
    prefix = prefix.astype(jnp.float32)
    spatial = spatial.astype(jnp.float32)

    state = []
    for cell in params["cells"]:
        ch = cell["b"].shape[0] // 4
        state.append((jnp.zeros((B, ch, H, W), jnp.float32),
                      jnp.zeros((B, ch, H, W), jnp.float32)))

    def step(x, state):
        # channel attention
        avg = x.mean(axis=(2, 3))
        mx = x.max(axis=(2, 3))

        def mlp(v):
            h = jnp.maximum(jnp.dot(v, params["ca_w1"].T, precision=HI), 0.0)
            return jnp.dot(h, params["ca_w2"].T, precision=HI)

        ca = jax.nn.sigmoid(mlp(avg) + mlp(mx))
        x = x * ca[:, :, None, None]
        # spatial attention
        sa_in = jnp.concatenate([x.mean(axis=1, keepdims=True),
                                 x.max(axis=1, keepdims=True)], axis=1)
        sa_k = jnp.transpose(params["sa_w"], (2, 0, 1))[None]       # (1,2,Ks,Ks)
        sa_logit = lax.conv_general_dilated(
            sa_in, sa_k, (1, 1), "SAME",
            dimension_numbers=("NCHW", "OIHW", "NCHW"), precision=HI)
        x = x * jax.nn.sigmoid(sa_logit)
        # embed
        x = jnp.maximum(
            jnp.einsum("oc,bchw->bohw", params["emb_w"], x, precision=HI)
            + params["emb_b"][None, :, None, None], 0.0)
        # ConvLSTM stack
        new_state = []
        inp = x
        for (h, c), cell in zip(state, params["cells"]):
            z = jnp.concatenate([inp, h], axis=1)
            w = jnp.transpose(cell["w"], (3, 2, 0, 1))               # OIHW
            gates = lax.conv_general_dilated(
                z, w, (1, 1), "SAME",
                dimension_numbers=("NCHW", "OIHW", "NCHW"),
                precision=HI) + cell["b"][None, :, None, None]
            ch = cell["b"].shape[0] // 4
            i = jax.nn.sigmoid(gates[:, 0:ch])
            f = jax.nn.sigmoid(gates[:, ch:2 * ch])
            o = jax.nn.sigmoid(gates[:, 2 * ch:3 * ch])
            g = jnp.tanh(gates[:, 3 * ch:4 * ch])
            c = f * c + i * g
            h = o * jnp.tanh(c)
            new_state.append((h, c))
            inp = h
        y = jax.nn.sigmoid(
            jnp.einsum("oc,bchw->bohw", params["out_w"], inp, precision=HI)
            + params["out_b"][None, :, None, None])
        return y, new_state

    for t in range(T - 1):
        x = jnp.concatenate([prefix[t], spatial], axis=1)
        _, state = step(x, state)
    ys = []
    for _ in range(pred_len):
        prev = ys[-1] if ys else prefix[-1]
        x = jnp.concatenate([prev, spatial], axis=1)
        y, state = step(x, state)
        ys.append(y)
    return jnp.stack(ys)        # (pred_len, B, 1, H, W)


# ----------------------------------------------------------------------------
if __name__ == "__main__":
    key = jax.random.PRNGKey(0)
    k_prefix, k_spatial, k_params = jax.random.split(key, 3)

    T, B, H, W = 6, 2, 16, 16
    c_prefix, c_spatial = 1, 3          # prefix must be 1 channel (fed back)
    in_channels = c_prefix + c_spatial
    num_layers = 2
    hidden_channels = (8, 16, 16)       # embed -> cell0 -> cell1
    kernel_size = (3, 3)
    sa_kernel_size = 7
    pred_len = 4

    prefix = jax.random.normal(k_prefix, (T, B, c_prefix, H, W), jnp.float32)
    spatial = jax.random.normal(k_spatial, (B, c_spatial, H, W), jnp.float32)
    params = make_params(k_params, in_channels, hidden_channels, num_layers,
                         kernel_size, sa_kernel_size)

    y = cbam_convlstm_forward(prefix, spatial, pred_len, params)
    y = jax.block_until_ready(y)
    assert y.shape == (pred_len, B, 1, H, W)
    assert bool(jnp.all(jnp.isfinite(y)))

    # correctness check against a pure-JAX reference of the same module
    y_ref = jax.block_until_ready(
        reference_forward(prefix, spatial, pred_len, params))
    err = float(jnp.max(jnp.abs(y - y_ref)))
    assert err < 2e-3, f"kernel/reference mismatch: max abs err = {err}"

    print("KERNEL_OK")
</pallas_src>

<mosaic_0001>
module attributes {stable_mosaic.version = 11 : i64} {
  func.func @kernel(%arg0: i32, %arg1: i32, %arg2: memref<1x1x1x256xf32, #tpu.memory_space<vmem>>, %arg3: memref<1x3x256xf32, #tpu.memory_space<vmem>>, %arg4: memref<2x4xf32, #tpu.memory_space<vmem>>, %arg5: memref<4x2xf32, #tpu.memory_space<vmem>>, %arg6: memref<512x256xf32, #tpu.memory_space<vmem>>, %arg7: memref<8x4xf32, #tpu.memory_space<vmem>>, %arg8: memref<8x1xf32, #tpu.memory_space<vmem>>, %arg9: memref<9x256xf32, #tpu.memory_space<vmem>>, %arg10: memref<64x216xf32, #tpu.memory_space<vmem>>, %arg11: memref<64x1xf32, #tpu.memory_space<vmem>>, %arg12: memref<64x288xf32, #tpu.memory_space<vmem>>, %arg13: memref<64x1xf32, #tpu.memory_space<vmem>>, %arg14: memref<1x16xf32, #tpu.memory_space<vmem>>, %arg15: memref<1x1xf32, #tpu.memory_space<vmem>>, %arg16: memref<1x1x1x256xf32, #tpu.memory_space<vmem>>, %arg17: memref<288x256xf32, #tpu.memory_space<vmem>>, %arg18: memref<16x256xf32, #tpu.memory_space<vmem>>, %arg19: memref<16x256xf32, #tpu.memory_space<vmem>>, %arg20: memref<16x256xf32, #tpu.memory_space<vmem>>, %arg21: memref<16x256xf32, #tpu.memory_space<vmem>>, %arg22: memref<1x256xf32, #tpu.memory_space<vmem>>) attributes {dimension_semantics = [#tpu.dimension_semantics<parallel>, #tpu.dimension_semantics<arbitrary>], iteration_bounds = array<i64: 2, 9>, scalar_prefetch = 0 : i64, scratch_operands = 6 : i64, tpu.core_type = #tpu.core_type<tc>, window_params = [{transform_indices = @transform_0, window_bounds = array<i64: 1, 1, 1, 256>}, {transform_indices = @transform_1, window_bounds = array<i64: 1, 3, 256>}, {pipeline_mode = #tpu.pipeline_mode<synchronous>, transform_indices = @transform_2, window_bounds = array<i64: 2, 4>}, {pipeline_mode = #tpu.pipeline_mode<synchronous>, transform_indices = @transform_3, window_bounds = array<i64: 4, 2>}, {pipeline_mode = #tpu.pipeline_mode<synchronous>, transform_indices = @transform_4, window_bounds = array<i64: 512, 256>}, {pipeline_mode = #tpu.pipeline_mode<synchronous>, transform_indices = @transform_5, window_bounds = array<i64: 8, 4>}, {pipeline_mode = #tpu.pipeline_mode<synchronous>, transform_indices = @transform_6, window_bounds = array<i64: 8, 1>}, {pipeline_mode = #tpu.pipeline_mode<synchronous>, transform_indices = @transform_7, window_bounds = array<i64: 9, 256>}, {pipeline_mode = #tpu.pipeline_mode<synchronous>, transform_indices = @transform_8, window_bounds = array<i64: 64, 216>}, {pipeline_mode = #tpu.pipeline_mode<synchronous>, transform_indices = @transform_9, window_bounds = array<i64: 64, 1>}, {pipeline_mode = #tpu.pipeline_mode<synchronous>, transform_indices = @transform_10, window_bounds = array<i64: 64, 288>}, {pipeline_mode = #tpu.pipeline_mode<synchronous>, transform_indices = @transform_11, window_bounds = array<i64: 64, 1>}, {pipeline_mode = #tpu.pipeline_mode<synchronous>, transform_indices = @transform_12, window_bounds = array<i64: 1, 16>}, {pipeline_mode = #tpu.pipeline_mode<synchronous>, transform_indices = @transform_13, window_bounds = array<i64: 1, 1>}, {transform_indices = @transform_14, window_bounds = array<i64: 1, 1, 1, 256>}]} {
    %c0_i32 = arith.constant 0 : i32
    %0 = arith.cmpi eq, %arg1, %c0_i32 : i32
    %1 = arith.extui %0 : i1 to i32
    %c0_i32_0 = arith.constant 0 : i32
    %2 = arith.cmpi ne, %1, %c0_i32_0 : i32
    scf.if %2 {
      %cst_117 = arith.constant 0.000000e+00 : f32
      %253 = vector.broadcast %cst_117 : f32 to vector<16x256xf32>
      %c0_118 = arith.constant 0 : index
      %c0_119 = arith.constant 0 : index
      %254 = vector.load %arg18[%c0_118, %c0_119] : memref<16x256xf32, #tpu.memory_space<vmem>>, vector<16x256xf32>
      tpu.vector_store %arg18[%c0_118, %c0_119], %253 {strides = array<i32>} : memref<16x256xf32, #tpu.memory_space<vmem>>, vector<16x256xf32>,
      %cst_120 = arith.constant 0.000000e+00 : f32
      %255 = vector.broadcast %cst_120 : f32 to vector<16x256xf32>
      %c0_121 = arith.constant 0 : index
      %c0_122 = arith.constant 0 : index
      %256 = vector.load %arg19[%c0_121, %c0_122] : memref<16x256xf32, #tpu.memory_space<vmem>>, vector<16x256xf32>
      tpu.vector_store %arg19[%c0_121, %c0_122], %255 {strides = array<i32>} : memref<16x256xf32, #tpu.memory_space<vmem>>, vector<16x256xf32>,
      %cst_123 = arith.constant 0.000000e+00 : f32
      %257 = vector.broadcast %cst_123 : f32 to vector<16x256xf32>
      %c0_124 = arith.constant 0 : index
      %c0_125 = arith.constant 0 : index
      %258 = vector.load %arg20[%c0_124, %c0_125] : memref<16x256xf32, #tpu.memory_space<vmem>>, vector<16x256xf32>
      tpu.vector_store %arg20[%c0_124, %c0_125], %257 {strides = array<i32>} : memref<16x256xf32, #tpu.memory_space<vmem>>, vector<16x256xf32>,
      %cst_126 = arith.constant 0.000000e+00 : f32
      %259 = vector.broadcast %cst_126 : f32 to vector<16x256xf32>
      %c0_127 = arith.constant 0 : index
      %c0_128 = arith.constant 0 : index
      %260 = vector.load %arg21[%c0_127, %c0_128] : memref<16x256xf32, #tpu.memory_space<vmem>>, vector<16x256xf32>
      tpu.vector_store %arg21[%c0_127, %c0_128], %259 {strides = array<i32>} : memref<16x256xf32, #tpu.memory_space<vmem>>, vector<16x256xf32>,
      %cst_129 = arith.constant 0.000000e+00 : f32
      %261 = vector.broadcast %cst_129 : f32 to vector<1x256xf32>
      %c0_130 = arith.constant 0 : index
      %c0_131 = arith.constant 0 : index
      %262 = vector.load %arg22[%c0_130, %c0_131] : memref<1x256xf32, #tpu.memory_space<vmem>>, vector<1x256xf32>
      tpu.vector_store %arg22[%c0_130, %c0_131], %261 {strides = array<i32>} : memref<1x256xf32, #tpu.memory_space<vmem>>, vector<1x256xf32>,
    } else {
    }
    %c6_i32 = arith.constant 6 : i32
    %3 = arith.cmpi sge, %arg1, %c6_i32 : i32
    %4 = arith.extui %3 : i1 to i32
    %5 = arith.sitofp %4 : i32 to f32
    %cst = arith.constant 1.000000e+00 : f32
    %6 = arith.subf %cst, %5 : f32
    %c0 = arith.constant 0 : index
    %c0_1 = arith.constant 0 : index
    %c0_2 = arith.constant 0 : index
    %c0_3 = arith.constant 0 : index
    %7 = vector.load %arg2[%c0, %c0_1, %c0_2, %c0_3] : memref<1x1x1x256xf32, #tpu.memory_space<vmem>>, vector<1x1x1x256xf32>
    %8 = vector.shape_cast %7 : vector<1x1x1x256xf32> to vector<1x256xf32>
    %9 = vector.broadcast %6 : f32 to vector<1x256xf32>
    %10 = arith.mulf %9, %8 : vector<1x256xf32>
    %c0_4 = arith.constant 0 : index
    %c0_5 = arith.constant 0 : index
    %11 = vector.load %arg22[%c0_4, %c0_5] : memref<1x256xf32, #tpu.memory_space<vmem>>, vector<1x256xf32>
    %12 = vector.broadcast %5 : f32 to vector<1x256xf32>
    %13 = arith.mulf %12, %11 : vector<1x256xf32>
    %14 = arith.addf %10, %13 : vector<1x256xf32>
    %c0_6 = arith.constant 0 : index
    %c0_7 = arith.constant 0 : index
    %c0_8 = arith.constant 0 : index
    %15 = vector.load %arg3[%c0_6, %c0_7, %c0_8] : memref<1x3x256xf32, #tpu.memory_space<vmem>>, vector<1x3x256xf32>
    %16 = vector.shape_cast %15 : vector<1x3x256xf32> to vector<3x256xf32>
    %17 = tpu.concatenate %14, %16 in 0 : vector<1x256xf32>, vector<3x256xf32> -> vector<4x256xf32>
    %cst_9 = arith.constant dense<0.000000e+00> : vector<4xf32>
    %18 = vector.multi_reduction <add>, %17, %cst_9 [1] : vector<4x256xf32> to vector<4xf32>
    %19 = vector.shape_cast %18 : vector<4xf32> to vector<4x1xf32>
    %cst_10 = arith.constant 2.560000e+02 : f32
    %20 = vector.broadcast %cst_10 : f32 to vector<4x1xf32>
    %21 = arith.divf %19, %20 : vector<4x1xf32>
    %cst_11 = arith.constant dense<0xFF800000> : vector<4xf32>
    %22 = vector.multi_reduction <maximumf>, %17, %cst_11 [1] : vector<4x256xf32> to vector<4xf32>
    %23 = vector.shape_cast %22 : vector<4xf32> to vector<4x1xf32>
    %24 = tpu.concatenate %21, %23 in 1 : vector<4x1xf32>, vector<4x1xf32> -> vector<4x2xf32>
    %c0_12 = arith.constant 0 : index
    %c0_13 = arith.constant 0 : index
    %25 = vector.load %arg4[%c0_12, %c0_13] : memref<2x4xf32, #tpu.memory_space<vmem>>, vector<2x4xf32>
    %cst_14 = arith.constant dense<0.000000e+00> : vector<2x2xf32>
    %26 = tpu.matmul %25, %24, %cst_14 {dimension_numbers = #tpu.dot_dimension_numbers<[1], [0], [0], [1], [0, 0, 1, 1], [], []>} : vector<2x4xf32>, vector<4x2xf32>, vector<2x2xf32> -> vector<2x2xf32>
    %cst_15 = arith.constant 0.000000e+00 : f32
    %27 = vector.broadcast %cst_15 : f32 to vector<2x2xf32>
    %28 = arith.maximumf %26, %27 : vector<2x2xf32>
    %c0_16 = arith.constant 0 : index
    %c0_17 = arith.constant 0 : index
    %29 = vector.load %arg5[%c0_16, %c0_17] : memref<4x2xf32, #tpu.memory_space<vmem>>, vector<4x2xf32>
    %cst_18 = arith.constant dense<0.000000e+00> : vector<4x2xf32>
    %30 = tpu.matmul %29, %28, %cst_18 {dimension_numbers = #tpu.dot_dimension_numbers<[1], [0], [0], [1], [0, 0, 1, 1], [], []>} : vector<4x2xf32>, vector<2x2xf32>, vector<4x2xf32> -> vector<4x2xf32>
    %31 = vector.extract_strided_slice %30 {offsets = [0, 0], sizes = [4, 1], strides = [1, 1]} : vector<4x2xf32> to vector<4x1xf32>
    %32 = vector.extract_strided_slice %30 {offsets = [0, 1], sizes = [4, 1], strides = [1, 1]} : vector<4x2xf32> to vector<4x1xf32>
    %33 = arith.addf %31, %32 : vector<4x1xf32>
    %34 = arith.negf %33 : vector<4x1xf32>
    %35 = math.exp %34 : vector<4x1xf32>
    %cst_19 = arith.constant 1.000000e+00 : f32
    %36 = vector.broadcast %cst_19 : f32 to vector<4x1xf32>
    %37 = arith.addf %36, %35 : vector<4x1xf32>
    %38 = arith.divf %36, %37 : vector<4x1xf32>
    %39 = vector.broadcast %38 : vector<4x1xf32> to vector<4x256xf32>
    %40 = arith.mulf %17, %39 : vector<4x256xf32>
    %cst_20 = arith.constant dense<0.000000e+00> : vector<256xf32>
    %41 = vector.multi_reduction <add>, %40, %cst_20 [0] : vector<4x256xf32> to vector<256xf32>
    %42 = vector.shape_cast %41 : vector<256xf32> to vector<1x256xf32>
    %cst_21 = arith.constant 4.000000e+00 : f32
    %43 = vector.broadcast %cst_21 : f32 to vector<1x256xf32>
    %44 = arith.divf %42, %43 : vector<1x256xf32>
    %cst_22 = arith.constant dense<0xFF800000> : vector<256xf32>
    %45 = vector.multi_reduction <maximumf>, %40, %cst_22 [0] : vector<4x256xf32> to vector<256xf32>
    %46 = vector.shape_cast %45 : vector<256xf32> to vector<1x256xf32>
    %47 = tpu.concatenate %44, %46 in 1 : vector<1x256xf32>, vector<1x256xf32> -> vector<1x512xf32>
    %c0_23 = arith.constant 0 : index
    %c0_24 = arith.constant 0 : index
    %48 = vector.load %arg6[%c0_23, %c0_24] : memref<512x256xf32, #tpu.memory_space<vmem>>, vector<512x256xf32>
    %cst_25 = arith.constant dense<0.000000e+00> : vector<1x256xf32>
    %49 = tpu.matmul %47, %48, %cst_25 {dimension_numbers = #tpu.dot_dimension_numbers<[1], [0], [0], [1], [0, 0, 1, 1], [], []>} : vector<1x512xf32>, vector<512x256xf32>, vector<1x256xf32> -> vector<1x256xf32>
    %50 = arith.negf %49 : vector<1x256xf32>
    %51 = math.exp %50 : vector<1x256xf32>
    %cst_26 = arith.constant 1.000000e+00 : f32
    %52 = vector.broadcast %cst_26 : f32 to vector<1x256xf32>
    %53 = arith.addf %52, %51 : vector<1x256xf32>
    %54 = arith.divf %52, %53 : vector<1x256xf32>
    %55 = vector.broadcast %54 : vector<1x256xf32> to vector<4x256xf32>
    %56 = arith.mulf %40, %55 : vector<4x256xf32>
    %c0_27 = arith.constant 0 : index
    %c0_28 = arith.constant 0 : index
    %57 = vector.load %arg7[%c0_27, %c0_28] : memref<8x4xf32, #tpu.memory_space<vmem>>, vector<8x4xf32>
    %cst_29 = arith.constant dense<0.000000e+00> : vector<8x256xf32>
    %58 = tpu.matmul %57, %56, %cst_29 {dimension_numbers = #tpu.dot_dimension_numbers<[1], [0], [0], [1], [0, 0, 1, 1], [], []>} : vector<8x4xf32>, vector<4x256xf32>, vector<8x256xf32> -> vector<8x256xf32>
    %c0_30 = arith.constant 0 : index
    %c0_31 = arith.constant 0 : index
    %59 = vector.load %arg8[%c0_30, %c0_31] : memref<8x1xf32, #tpu.memory_space<vmem>>, vector<8x1xf32>
    %60 = vector.broadcast %59 : vector<8x1xf32> to vector<8x256xf32>
    %61 = arith.addf %58, %60 : vector<8x256xf32>
    %cst_32 = arith.constant 0.000000e+00 : f32
    %62 = vector.broadcast %cst_32 : f32 to vector<8x256xf32>
    %63 = arith.maximumf %61, %62 : vector<8x256xf32>
    %c0_33 = arith.constant 0 : index
    %c0_34 = arith.constant 0 : index
    %64 = vector.load %arg18[%c0_33, %c0_34] : memref<16x256xf32, #tpu.memory_space<vmem>>, vector<16x256xf32>
    %65 = tpu.concatenate %63, %64 in 0 : vector<8x256xf32>, vector<16x256xf32> -> vector<24x256xf32>
    %66 = vector.extract_strided_slice %65 {offsets = [0, 239], sizes = [24, 17], strides = [1, 1]} : vector<24x256xf32> to vector<24x17xf32>
    %67 = vector.extract_strided_slice %65 {offsets = [0, 0], sizes = [24, 239], strides = [1, 1]} : vector<24x256xf32> to vector<24x239xf32>
    %68 = tpu.concatenate %66, %67 in 1 : vector<24x17xf32>, vector<24x239xf32> -> vector<24x256xf32>
    %c0_35 = arith.constant 0 : index
    %c0_36 = arith.constant 0 : index
    %69 = vector.load %arg9[%c0_35, %c0_36] : memref<9x256xf32, #tpu.memory_space<vmem>>, vector<1x256xf32>
    %70 = vector.broadcast %69 : vector<1x256xf32> to vector<24x256xf32>
    %71 = arith.mulf %68, %70 : vector<24x256xf32>
    %c0_37 = arith.constant 0 : index
    %c0_38 = arith.constant 0 : index
    %72 = vector.load %arg17[%c0_37, %c0_38] : memref<288x256xf32, #tpu.memory_space<vmem>>, vector<24x256xf32>
    tpu.vector_store %arg17[%c0_37, %c0_38], %71 {strides = array<i32>} : memref<288x256xf32, #tpu.memory_space<vmem>>, vector<24x256xf32>,
    %73 = vector.extract_strided_slice %65 {offsets = [0, 240], sizes = [24, 16], strides = [1, 1]} : vector<24x256xf32> to vector<24x16xf32>
    %74 = vector.extract_strided_slice %65 {offsets = [0, 0], sizes = [24, 240], strides = [1, 1]} : vector<24x256xf32> to vector<24x240xf32>
    %75 = tpu.concatenate %73, %74 in 1 : vector<24x16xf32>, vector<24x240xf32> -> vector<24x256xf32>
    %c1 = arith.constant 1 : index
    %c0_39 = arith.constant 0 : index
    %76 = vector.load %arg9[%c1, %c0_39] : memref<9x256xf32, #tpu.memory_space<vmem>>, vector<1x256xf32>
    %77 = vector.broadcast %76 : vector<1x256xf32> to vector<24x256xf32>
    %78 = arith.mulf %75, %77 : vector<24x256xf32>
    %c24 = arith.constant 24 : index
    %c0_40 = arith.constant 0 : index
    %79 = vector.load %arg17[%c24, %c0_40] : memref<288x256xf32, #tpu.memory_space<vmem>>, vector<24x256xf32>
    tpu.vector_store %arg17[%c24, %c0_40], %78 {strides = array<i32>} : memref<288x256xf32, #tpu.memory_space<vmem>>, vector<24x256xf32>,
    %80 = vector.extract_strided_slice %65 {offsets = [0, 241], sizes = [24, 15], strides = [1, 1]} : vector<24x256xf32> to vector<24x15xf32>
    %81 = vector.extract_strided_slice %65 {offsets = [0, 0], sizes = [24, 241], strides = [1, 1]} : vector<24x256xf32> to vector<24x241xf32>
    %82 = tpu.concatenate %80, %81 in 1 : vector<24x15xf32>, vector<24x241xf32> -> vector<24x256xf32>
    %c2 = arith.constant 2 : index
    %c0_41 = arith.constant 0 : index
    %83 = vector.load %arg9[%c2, %c0_41] : memref<9x256xf32, #tpu.memory_space<vmem>>, vector<1x256xf32>
    %84 = vector.broadcast %83 : vector<1x256xf32> to vector<24x256xf32>
    %85 = arith.mulf %82, %84 : vector<24x256xf32>
    %c48 = arith.constant 48 : index
    %c0_42 = arith.constant 0 : index
    %86 = vector.load %arg17[%c48, %c0_42] : memref<288x256xf32, #tpu.memory_space<vmem>>, vector<24x256xf32>
    tpu.vector_store %arg17[%c48, %c0_42], %85 {strides = array<i32>} : memref<288x256xf32, #tpu.memory_space<vmem>>, vector<24x256xf32>,
    %87 = vector.extract_strided_slice %65 {offsets = [0, 255], sizes = [24, 1], strides = [1, 1]} : vector<24x256xf32> to vector<24x1xf32>
    %88 = vector.extract_strided_slice %65 {offsets = [0, 0], sizes = [24, 255], strides = [1, 1]} : vector<24x256xf32> to vector<24x255xf32>
    %89 = tpu.concatenate %87, %88 in 1 : vector<24x1xf32>, vector<24x255xf32> -> vector<24x256xf32>
    %c3 = arith.constant 3 : index
    %c0_43 = arith.constant 0 : index
    %90 = vector.load %arg9[%c3, %c0_43] : memref<9x256xf32, #tpu.memory_space<vmem>>, vector<1x256xf32>
    %91 = vector.broadcast %90 : vector<1x256xf32> to vector<24x256xf32>
    %92 = arith.mulf %89, %91 : vector<24x256xf32>
    %c72 = arith.constant 72 : index
    %c0_44 = arith.constant 0 : index
    %93 = vector.load %arg17[%c72, %c0_44] : memref<288x256xf32, #tpu.memory_space<vmem>>, vector<24x256xf32>
    tpu.vector_store %arg17[%c72, %c0_44], %92 {strides = array<i32>} : memref<288x256xf32, #tpu.memory_space<vmem>>, vector<24x256xf32>,
    %c96 = arith.constant 96 : index
    %c0_45 = arith.constant 0 : index
    %94 = vector.load %arg17[%c96, %c0_45] : memref<288x256xf32, #tpu.memory_space<vmem>>, vector<24x256xf32>
    tpu.vector_store %arg17[%c96, %c0_45], %65 {strides = array<i32>} : memref<288x256xf32, #tpu.memory_space<vmem>>, vector<24x256xf32>,
    %95 = vector.extract_strided_slice %65 {offsets = [0, 1], sizes = [24, 255], strides = [1, 1]} : vector<24x256xf32> to vector<24x255xf32>
    %96 = vector.extract_strided_slice %65 {offsets = [0, 0], sizes = [24, 1], strides = [1, 1]} : vector<24x256xf32> to vector<24x1xf32>
    %97 = tpu.concatenate %95, %96 in 1 : vector<24x255xf32>, vector<24x1xf32> -> vector<24x256xf32>
    %c5 = arith.constant 5 : index
    %c0_46 = arith.constant 0 : index
    %98 = vector.load %arg9[%c5, %c0_46] : memref<9x256xf32, #tpu.memory_space<vmem>>, vector<1x256xf32>
    %99 = vector.broadcast %98 : vector<1x256xf32> to vector<24x256xf32>
    %100 = arith.mulf %97, %99 : vector<24x256xf32>
    %c120 = arith.constant 120 : index
    %c0_47 = arith.constant 0 : index
    %101 = vector.load %arg17[%c120, %c0_47] : memref<288x256xf32, #tpu.memory_space<vmem>>, vector<24x256xf32>
    tpu.vector_store %arg17[%c120, %c0_47], %100 {strides = array<i32>} : memref<288x256xf32, #tpu.memory_space<vmem>>, vector<24x256xf32>,
    %102 = vector.extract_strided_slice %65 {offsets = [0, 15], sizes = [24, 241], strides = [1, 1]} : vector<24x256xf32> to vector<24x241xf32>
    %103 = vector.extract_strided_slice %65 {offsets = [0, 0], sizes = [24, 15], strides = [1, 1]} : vector<24x256xf32> to vector<24x15xf32>
    %104 = tpu.concatenate %102, %103 in 1 : vector<24x241xf32>, vector<24x15xf32> -> vector<24x256xf32>
    %c6 = arith.constant 6 : index
    %c0_48 = arith.constant 0 : index
    %105 = vector.load %arg9[%c6, %c0_48] : memref<9x256xf32, #tpu.memory_space<vmem>>, vector<1x256xf32>
    %106 = vector.broadcast %105 : vector<1x256xf32> to vector<24x256xf32>
    %107 = arith.mulf %104, %106 : vector<24x256xf32>
    %c144 = arith.constant 144 : index
    %c0_49 = arith.constant 0 : index
    %108 = vector.load %arg17[%c144, %c0_49] : memref<288x256xf32, #tpu.memory_space<vmem>>, vector<24x256xf32>
    tpu.vector_store %arg17[%c144, %c0_49], %107 {strides = array<i32>} : memref<288x256xf32, #tpu.memory_space<vmem>>, vector<24x256xf32>,
    %109 = vector.extract_strided_slice %65 {offsets = [0, 16], sizes = [24, 240], strides = [1, 1]} : vector<24x256xf32> to vector<24x240xf32>
    %110 = vector.extract_strided_slice %65 {offsets = [0, 0], sizes = [24, 16], strides = [1, 1]} : vector<24x256xf32> to vector<24x16xf32>
    %111 = tpu.concatenate %109, %110 in 1 : vector<24x240xf32>, vector<24x16xf32> -> vector<24x256xf32>
    %c7 = arith.constant 7 : index
    %c0_50 = arith.constant 0 : index
    %112 = vector.load %arg9[%c7, %c0_50] : memref<9x256xf32, #tpu.memory_space<vmem>>, vector<1x256xf32>
    %113 = vector.broadcast %112 : vector<1x256xf32> to vector<24x256xf32>
    %114 = arith.mulf %111, %113 : vector<24x256xf32>
    %c168 = arith.constant 168 : index
    %c0_51 = arith.constant 0 : index
    %115 = vector.load %arg17[%c168, %c0_51] : memref<288x256xf32, #tpu.memory_space<vmem>>, vector<24x256xf32>
    tpu.vector_store %arg17[%c168, %c0_51], %114 {strides = array<i32>} : memref<288x256xf32, #tpu.memory_space<vmem>>, vector<24x256xf32>,
    %116 = vector.extract_strided_slice %65 {offsets = [0, 17], sizes = [24, 239], strides = [1, 1]} : vector<24x256xf32> to vector<24x239xf32>
    %117 = vector.extract_strided_slice %65 {offsets = [0, 0], sizes = [24, 17], strides = [1, 1]} : vector<24x256xf32> to vector<24x17xf32>
    %118 = tpu.concatenate %116, %117 in 1 : vector<24x239xf32>, vector<24x17xf32> -> vector<24x256xf32>
    %c8 = arith.constant 8 : index
    %c0_52 = arith.constant 0 : index
    %119 = vector.load %arg9[%c8, %c0_52] : memref<9x256xf32, #tpu.memory_space<vmem>>, vector<1x256xf32>
    %120 = vector.broadcast %119 : vector<1x256xf32> to vector<24x256xf32>
    %121 = arith.mulf %118, %120 : vector<24x256xf32>
    %c192 = arith.constant 192 : index
    %c0_53 = arith.constant 0 : index
    %122 = vector.load %arg17[%c192, %c0_53] : memref<288x256xf32, #tpu.memory_space<vmem>>, vector<24x256xf32>
    tpu.vector_store %arg17[%c192, %c0_53], %121 {strides = array<i32>} : memref<288x256xf32, #tpu.memory_space<vmem>>, vector<24x256xf32>,
    %c0_54 = arith.constant 0 : index
    %c0_55 = arith.constant 0 : index
    %123 = vector.load %arg10[%c0_54, %c0_55] : memref<64x216xf32, #tpu.memory_space<vmem>>, vector<64x216xf32>
    %c0_56 = arith.constant 0 : index
    %c0_57 = arith.constant 0 : index
    %124 = vector.load %arg17[%c0_56, %c0_57] : memref<288x256xf32, #tpu.memory_space<vmem>>, vector<216x256xf32>
    %cst_58 = arith.constant dense<0.000000e+00> : vector<64x256xf32>
    %125 = tpu.matmul %123, %124, %cst_58 {dimension_numbers = #tpu.dot_dimension_numbers<[1], [0], [0], [1], [0, 0, 1, 1], [], []>} : vector<64x216xf32>, vector<216x256xf32>, vector<64x256xf32> -> vector<64x256xf32>
    %c0_59 = arith.constant 0 : index
    %c0_60 = arith.constant 0 : index
    %126 = vector.load %arg11[%c0_59, %c0_60] : memref<64x1xf32, #tpu.memory_space<vmem>>, vector<64x1xf32>
    %127 = vector.broadcast %126 : vector<64x1xf32> to vector<64x256xf32>
    %128 = arith.addf %125, %127 : vector<64x256xf32>
    %129 = vector.extract_strided_slice %128 {offsets = [0, 0], sizes = [16, 256], strides = [1, 1]} : vector<64x256xf32> to vector<16x256xf32>
    %130 = arith.negf %129 : vector<16x256xf32>
    %131 = math.exp %130 : vector<16x256xf32>
    %cst_61 = arith.constant 1.000000e+00 : f32
    %132 = vector.broadcast %cst_61 : f32 to vector<16x256xf32>
    %133 = arith.addf %132, %131 : vector<16x256xf32>
    %134 = arith.divf %132, %133 : vector<16x256xf32>
    %135 = vector.extract_strided_slice %128 {offsets = [16, 0], sizes = [16, 256], strides = [1, 1]} : vector<64x256xf32> to vector<16x256xf32>
    %136 = arith.negf %135 : vector<16x256xf32>
    %137 = math.exp %136 : vector<16x256xf32>
    %cst_62 = arith.constant 1.000000e+00 : f32
    %138 = vector.broadcast %cst_62 : f32 to vector<16x256xf32>
    %139 = arith.addf %138, %137 : vector<16x256xf32>
    %140 = arith.divf %138, %139 : vector<16x256xf32>
    %141 = vector.extract_strided_slice %128 {offsets = [32, 0], sizes = [16, 256], strides = [1, 1]} : vector<64x256xf32> to vector<16x256xf32>
    %142 = arith.negf %141 : vector<16x256xf32>
    %143 = math.exp %142 : vector<16x256xf32>
    %cst_63 = arith.constant 1.000000e+00 : f32
    %144 = vector.broadcast %cst_63 : f32 to vector<16x256xf32>
    %145 = arith.addf %144, %143 : vector<16x256xf32>
    %146 = arith.divf %144, %145 : vector<16x256xf32>
    %147 = vector.extract_strided_slice %128 {offsets = [48, 0], sizes = [16, 256], strides = [1, 1]} : vector<64x256xf32> to vector<16x256xf32>
    %148 = math.tanh %147 : vector<16x256xf32>
    %c0_64 = arith.constant 0 : index
    %c0_65 = arith.constant 0 : index
    %149 = vector.load %arg19[%c0_64, %c0_65] : memref<16x256xf32, #tpu.memory_space<vmem>>, vector<16x256xf32>
    %150 = arith.mulf %140, %149 : vector<16x256xf32>
    %151 = arith.mulf %134, %148 : vector<16x256xf32>
    %152 = arith.addf %150, %151 : vector<16x256xf32>
    %153 = math.tanh %152 : vector<16x256xf32>
    %154 = arith.mulf %146, %153 : vector<16x256xf32>
    %c0_66 = arith.constant 0 : index
    %c0_67 = arith.constant 0 : index
    %155 = vector.load %arg19[%c0_66, %c0_67] : memref<16x256xf32, #tpu.memory_space<vmem>>, vector<16x256xf32>
    tpu.vector_store %arg19[%c0_66, %c0_67], %152 {strides = array<i32>} : memref<16x256xf32, #tpu.memory_space<vmem>>, vector<16x256xf32>,
    %c0_68 = arith.constant 0 : index
    %c0_69 = arith.constant 0 : index
    %156 = vector.load %arg18[%c0_68, %c0_69] : memref<16x256xf32, #tpu.memory_space<vmem>>, vector<16x256xf32>
    tpu.vector_store %arg18[%c0_68, %c0_69], %154 {strides = array<i32>} : memref<16x256xf32, #tpu.memory_space<vmem>>, vector<16x256xf32>,
    %c0_70 = arith.constant 0 : index
    %c0_71 = arith.constant 0 : index
    %157 = vector.load %arg20[%c0_70, %c0_71] : memref<16x256xf32, #tpu.memory_space<vmem>>, vector<16x256xf32>
    %158 = tpu.concatenate %154, %157 in 0 : vector<16x256xf32>, vector<16x256xf32> -> vector<32x256xf32>
    %159 = vector.extract_strided_slice %158 {offsets = [0, 239], sizes = [32, 17], strides = [1, 1]} : vector<32x256xf32> to vector<32x17xf32>
    %160 = vector.extract_strided_slice %158 {offsets = [0, 0], sizes = [32, 239], strides = [1, 1]} : vector<32x256xf32> to vector<32x239xf32>
    %161 = tpu.concatenate %159, %160 in 1 : vector<32x17xf32>, vector<32x239xf32> -> vector<32x256xf32>
    %c0_72 = arith.constant 0 : index
    %c0_73 = arith.constant 0 : index
    %162 = vector.load %arg9[%c0_72, %c0_73] : memref<9x256xf32, #tpu.memory_space<vmem>>, vector<1x256xf32>
    %163 = vector.broadcast %162 : vector<1x256xf32> to vector<32x256xf32>
    %164 = arith.mulf %161, %163 : vector<32x256xf32>
    %c0_74 = arith.constant 0 : index
    %c0_75 = arith.constant 0 : index
    %165 = vector.load %arg17[%c0_74, %c0_75] : memref<288x256xf32, #tpu.memory_space<vmem>>, vector<32x256xf32>
    tpu.vector_store %arg17[%c0_74, %c0_75], %164 {strides = array<i32>} : memref<288x256xf32, #tpu.memory_space<vmem>>, vector<32x256xf32>,
    %166 = vector.extract_strided_slice %158 {offsets = [0, 240], sizes = [32, 16], strides = [1, 1]} : vector<32x256xf32> to vector<32x16xf32>
    %167 = vector.extract_strided_slice %158 {offsets = [0, 0], sizes = [32, 240], strides = [1, 1]} : vector<32x256xf32> to vector<32x240xf32>
    %168 = tpu.concatenate %166, %167 in 1 : vector<32x16xf32>, vector<32x240xf32> -> vector<32x256xf32>
    %c1_76 = arith.constant 1 : index
    %c0_77 = arith.constant 0 : index
    %169 = vector.load %arg9[%c1_76, %c0_77] : memref<9x256xf32, #tpu.memory_space<vmem>>, vector<1x256xf32>
    %170 = vector.broadcast %169 : vector<1x256xf32> to vector<32x256xf32>
    %171 = arith.mulf %168, %170 : vector<32x256xf32>
    %c32 = arith.constant 32 : index
    %c0_78 = arith.constant 0 : index
    %172 = vector.load %arg17[%c32, %c0_78] : memref<288x256xf32, #tpu.memory_space<vmem>>, vector<32x256xf32>
    tpu.vector_store %arg17[%c32, %c0_78], %171 {strides = array<i32>} : memref<288x256xf32, #tpu.memory_space<vmem>>, vector<32x256xf32>,
    %173 = vector.extract_strided_slice %158 {offsets = [0, 241], sizes = [32, 15], strides = [1, 1]} : vector<32x256xf32> to vector<32x15xf32>
    %174 = vector.extract_strided_slice %158 {offsets = [0, 0], sizes = [32, 241], strides = [1, 1]} : vector<32x256xf32> to vector<32x241xf32>
    %175 = tpu.concatenate %173, %174 in 1 : vector<32x15xf32>, vector<32x241xf32> -> vector<32x256xf32>
    %c2_79 = arith.constant 2 : index
    %c0_80 = arith.constant 0 : index
    %176 = vector.load %arg9[%c2_79, %c0_80] : memref<9x256xf32, #tpu.memory_space<vmem>>, vector<1x256xf32>
    %177 = vector.broadcast %176 : vector<1x256xf32> to vector<32x256xf32>
    %178 = arith.mulf %175, %177 : vector<32x256xf32>
    %c64 = arith.constant 64 : index
    %c0_81 = arith.constant 0 : index
    %179 = vector.load %arg17[%c64, %c0_81] : memref<288x256xf32, #tpu.memory_space<vmem>>, vector<32x256xf32>
    tpu.vector_store %arg17[%c64, %c0_81], %178 {strides = array<i32>} : memref<288x256xf32, #tpu.memory_space<vmem>>, vector<32x256xf32>,
    %180 = vector.extract_strided_slice %158 {offsets = [0, 255], sizes = [32, 1], strides = [1, 1]} : vector<32x256xf32> to vector<32x1xf32>
    %181 = vector.extract_strided_slice %158 {offsets = [0, 0], sizes = [32, 255], strides = [1, 1]} : vector<32x256xf32> to vector<32x255xf32>
    %182 = tpu.concatenate %180, %181 in 1 : vector<32x1xf32>, vector<32x255xf32> -> vector<32x256xf32>
    %c3_82 = arith.constant 3 : index
    %c0_83 = arith.constant 0 : index
    %183 = vector.load %arg9[%c3_82, %c0_83] : memref<9x256xf32, #tpu.memory_space<vmem>>, vector<1x256xf32>
    %184 = vector.broadcast %183 : vector<1x256xf32> to vector<32x256xf32>
    %185 = arith.mulf %182, %184 : vector<32x256xf32>
    %c96_84 = arith.constant 96 : index
    %c0_85 = arith.constant 0 : index
    %186 = vector.load %arg17[%c96_84, %c0_85] : memref<288x256xf32, #tpu.memory_space<vmem>>, vector<32x256xf32>
    tpu.vector_store %arg17[%c96_84, %c0_85], %185 {strides = array<i32>} : memref<288x256xf32, #tpu.memory_space<vmem>>, vector<32x256xf32>,
    %c128 = arith.constant 128 : index
    %c0_86 = arith.constant 0 : index
    %187 = vector.load %arg17[%c128, %c0_86] : memref<288x256xf32, #tpu.memory_space<vmem>>, vector<32x256xf32>
    tpu.vector_store %arg17[%c128, %c0_86], %158 {strides = array<i32>} : memref<288x256xf32, #tpu.memory_space<vmem>>, vector<32x256xf32>,
    %188 = vector.extract_strided_slice %158 {offsets = [0, 1], sizes = [32, 255], strides = [1, 1]} : vector<32x256xf32> to vector<32x255xf32>
    %189 = vector.extract_strided_slice %158 {offsets = [0, 0], sizes = [32, 1], strides = [1, 1]} : vector<32x256xf32> to vector<32x1xf32>
    %190 = tpu.concatenate %188, %189 in 1 : vector<32x255xf32>, vector<32x1xf32> -> vector<32x256xf32>
    %c5_87 = arith.constant 5 : index
    %c0_88 = arith.constant 0 : index
    %191 = vector.load %arg9[%c5_87, %c0_88] : memref<9x256xf32, #tpu.memory_space<vmem>>, vector<1x256xf32>
    %192 = vector.broadcast %191 : vector<1x256xf32> to vector<32x256xf32>
    %193 = arith.mulf %190, %192 : vector<32x256xf32>
    %c160 = arith.constant 160 : index
    %c0_89 = arith.constant 0 : index
    %194 = vector.load %arg17[%c160, %c0_89] : memref<288x256xf32, #tpu.memory_space<vmem>>, vector<32x256xf32>
    tpu.vector_store %arg17[%c160, %c0_89], %193 {strides = array<i32>} : memref<288x256xf32, #tpu.memory_space<vmem>>, vector<32x256xf32>,
    %195 = vector.extract_strided_slice %158 {offsets = [0, 15], sizes = [32, 241], strides = [1, 1]} : vector<32x256xf32> to vector<32x241xf32>
    %196 = vector.extract_strided_slice %158 {offsets = [0, 0], sizes = [32, 15], strides = [1, 1]} : vector<32x256xf32> to vector<32x15xf32>
    %197 = tpu.concatenate %195, %196 in 1 : vector<32x241xf32>, vector<32x15xf32> -> vector<32x256xf32>
    %c6_90 = arith.constant 6 : index
    %c0_91 = arith.constant 0 : index
    %198 = vector.load %arg9[%c6_90, %c0_91] : memref<9x256xf32, #tpu.memory_space<vmem>>, vector<1x256xf32>
    %199 = vector.broadcast %198 : vector<1x256xf32> to vector<32x256xf32>
    %200 = arith.mulf %197, %199 : vector<32x256xf32>
    %c192_92 = arith.constant 192 : index
    %c0_93 = arith.constant 0 : index
    %201 = vector.load %arg17[%c192_92, %c0_93] : memref<288x256xf32, #tpu.memory_space<vmem>>, vector<32x256xf32>
    tpu.vector_store %arg17[%c192_92, %c0_93], %200 {strides = array<i32>} : memref<288x256xf32, #tpu.memory_space<vmem>>, vector<32x256xf32>,
    %202 = vector.extract_strided_slice %158 {offsets = [0, 16], sizes = [32, 240], strides = [1, 1]} : vector<32x256xf32> to vector<32x240xf32>
    %203 = vector.extract_strided_slice %158 {offsets = [0, 0], sizes = [32, 16], strides = [1, 1]} : vector<32x256xf32> to vector<32x16xf32>
    %204 = tpu.concatenate %202, %203 in 1 : vector<32x240xf32>, vector<32x16xf32> -> vector<32x256xf32>
    %c7_94 = arith.constant 7 : index
    %c0_95 = arith.constant 0 : index
    %205 = vector.load %arg9[%c7_94, %c0_95] : memref<9x256xf32, #tpu.memory_space<vmem>>, vector<1x256xf32>
    %206 = vector.broadcast %205 : vector<1x256xf32> to vector<32x256xf32>
    %207 = arith.mulf %204, %206 : vector<32x256xf32>
    %c224 = arith.constant 224 : index
    %c0_96 = arith.constant 0 : index
    %208 = vector.load %arg17[%c224, %c0_96] : memref<288x256xf32, #tpu.memory_space<vmem>>, vector<32x256xf32>
    tpu.vector_store %arg17[%c224, %c0_96], %207 {strides = array<i32>} : memref<288x256xf32, #tpu.memory_space<vmem>>, vector<32x256xf32>,
    %209 = vector.extract_strided_slice %158 {offsets = [0, 17], sizes = [32, 239], strides = [1, 1]} : vector<32x256xf32> to vector<32x239xf32>
    %210 = vector.extract_strided_slice %158 {offsets = [0, 0], sizes = [32, 17], strides = [1, 1]} : vector<32x256xf32> to vector<32x17xf32>
    %211 = tpu.concatenate %209, %210 in 1 : vector<32x239xf32>, vector<32x17xf32> -> vector<32x256xf32>
    %c8_97 = arith.constant 8 : index
    %c0_98 = arith.constant 0 : index
    %212 = vector.load %arg9[%c8_97, %c0_98] : memref<9x256xf32, #tpu.memory_space<vmem>>, vector<1x256xf32>
    %213 = vector.broadcast %212 : vector<1x256xf32> to vector<32x256xf32>
    %214 = arith.mulf %211, %213 : vector<32x256xf32>
    %c256 = arith.constant 256 : index
    %c0_99 = arith.constant 0 : index
    %215 = vector.load %arg17[%c256, %c0_99] : memref<288x256xf32, #tpu.memory_space<vmem>>, vector<32x256xf32>
    tpu.vector_store %arg17[%c256, %c0_99], %214 {strides = array<i32>} : memref<288x256xf32, #tpu.memory_space<vmem>>, vector<32x256xf32>,
    %c0_100 = arith.constant 0 : index
    %c0_101 = arith.constant 0 : index
    %216 = vector.load %arg12[%c0_100, %c0_101] : memref<64x288xf32, #tpu.memory_space<vmem>>, vector<64x288xf32>
    %c0_102 = arith.constant 0 : index
    %c0_103 = arith.constant 0 : index
    %217 = vector.load %arg17[%c0_102, %c0_103] : memref<288x256xf32, #tpu.memory_space<vmem>>, vector<288x256xf32>
    %cst_104 = arith.constant dense<0.000000e+00> : vector<64x256xf32>
    %218 = tpu.matmul %216, %217, %cst_104 {dimension_numbers = #tpu.dot_dimension_numbers<[1], [0], [0], [1], [0, 0, 1, 1], [], []>} : vector<64x288xf32>, vector<288x256xf32>, vector<64x256xf32> -> vector<64x256xf32>
    %c0_105 = arith.constant 0 : index
    %c0_106 = arith.constant 0 : index
    %219 = vector.load %arg13[%c0_105, %c0_106] : memref<64x1xf32, #tpu.memory_space<vmem>>, vector<64x1xf32>
    %220 = vector.broadcast %219 : vector<64x1xf32> to vector<64x256xf32>
    %221 = arith.addf %218, %220 : vector<64x256xf32>
    %222 = vector.extract_strided_slice %221 {offsets = [0, 0], sizes = [16, 256], strides = [1, 1]} : vector<64x256xf32> to vector<16x256xf32>
    %223 = arith.negf %222 : vector<16x256xf32>
    %224 = math.exp %223 : vector<16x256xf32>
    %cst_107 = arith.constant 1.000000e+00 : f32
    %225 = vector.broadcast %cst_107 : f32 to vector<16x256xf32>
    %226 = arith.addf %225, %224 : vector<16x256xf32>
    %227 = arith.divf %225, %226 : vector<16x256xf32>
    %228 = vector.extract_strided_slice %221 {offsets = [16, 0], sizes = [16, 256], strides = [1, 1]} : vector<64x256xf32> to vector<16x256xf32>
    %229 = arith.negf %228 : vector<16x256xf32>
    %230 = math.exp %229 : vector<16x256xf32>
    %cst_108 = arith.constant 1.000000e+00 : f32
    %231 = vector.broadcast %cst_108 : f32 to vector<16x256xf32>
    %232 = arith.addf %231, %230 : vector<16x256xf32>
    %233 = arith.divf %231, %232 : vector<16x256xf32>
    %234 = vector.extract_strided_slice %221 {offsets = [32, 0], sizes = [16, 256], strides = [1, 1]} : vector<64x256xf32> to vector<16x256xf32>
    %235 = arith.negf %234 : vector<16x256xf32>
    %236 = math.exp %235 : vector<16x256xf32>
    %cst_109 = arith.constant 1.000000e+00 : f32
    %237 = vector.broadcast %cst_109 : f32 to vector<16x256xf32>
    %238 = arith.addf %237, %236 : vector<16x256xf32>
    %239 = arith.divf %237, %238 : vector<16x256xf32>
    %240 = vector.extract_strided_slice %221 {offsets = [48, 0], sizes = [16, 256], strides = [1, 1]} : vector<64x256xf32> to vector<16x256xf32>
    %241 = math.tanh %240 : vector<16x256xf32>
    %c0_110 = arith.constant 0 : index
    %c0_111 = arith.constant 0 : index
    %242 = vector.load %arg21[%c0_110, %c0_111] : memref<16x256xf32, #tpu.memory_space<vmem>>, vector<16x256xf32>
    %243 = arith.mulf %233, %242 : vector<16x256xf32>
    %244 = arith.mulf %227, %241 : vector<16x256xf32>
    %245 = arith.addf %243, %244 : vector<16x256xf32>
    %246 = math.tanh %245 : vector<16x256xf32>
    %247 = arith.mulf %239, %246 : vector<16x256xf32>
    %c0_112 = arith.constant 0 : index
    %c0_113 = arith.constant 0 : index
    %248 = vector.load %arg21[%c0_112, %c0_113] : memref<16x256xf32, #tpu.memory_space<vmem>>, vector<16x256xf32>
    tpu.vector_store %arg21[%c0_112, %c0_113], %245 {strides = array<i32>} : memref<16x256xf32, #tpu.memory_space<vmem>>, vector<16x256xf32>,
    %c0_114 = arith.constant 0 : index
    %c0_115 = arith.constant 0 : index
    %249 = vector.load %arg20[%c0_114, %c0_115] : memref<16x256xf32, #tpu.memory_space<vmem>>, vector<16x256xf32>
    tpu.vector_store %arg20[%c0_114, %c0_115], %247 {strides = array<i32>} : memref<16x256xf32, #tpu.memory_space<vmem>>, vector<16x256xf32>,
    %c5_i32 = arith.constant 5 : i32
    %250 = arith.cmpi sge, %arg1, %c5_i32 : i32
    %251 = arith.extui %250 : i1 to i32
    %c0_i32_116 = arith.constant 0 : i32
    %252 = arith.cmpi ne, %251, %c0_i32_116 : i32
    scf.if %252 {
      %c0_117 = arith.constant 0 : index
      %c0_118 = arith.constant 0 : index
      %253 = vector.load %arg14[%c0_117, %c0_118] : memref<1x16xf32, #tpu.memory_space<vmem>>, vector<1x16xf32>
      %cst_119 = arith.constant dense<0.000000e+00> : vector<1x256xf32>
      %254 = tpu.matmul %253, %247, %cst_119 {dimension_numbers = #tpu.dot_dimension_numbers<[1], [0], [0], [1], [0, 0, 1, 1], [], []>} : vector<1x16xf32>, vector<16x256xf32>, vector<1x256xf32> -> vector<1x256xf32>
      %c0_120 = arith.constant 0 : index
      %c0_121 = arith.constant 0 : index
      %255 = vector.load %arg15[%c0_120, %c0_121] : memref<1x1xf32, #tpu.memory_space<vmem>>, vector<1x1xf32>
      %256 = vector.broadcast %255 : vector<1x1xf32> to vector<1x256xf32>
      %257 = arith.addf %254, %256 : vector<1x256xf32>
      %258 = arith.negf %257 : vector<1x256xf32>
      %259 = math.exp %258 : vector<1x256xf32>
      %cst_122 = arith.constant 1.000000e+00 : f32
      %260 = vector.broadcast %cst_122 : f32 to vector<1x256xf32>
      %261 = arith.addf %260, %259 : vector<1x256xf32>
      %262 = arith.divf %260, %261 : vector<1x256xf32>
      %c0_123 = arith.constant 0 : index
      %c0_124 = arith.constant 0 : index
      %263 = vector.load %arg22[%c0_123, %c0_124] : memref<1x256xf32, #tpu.memory_space<vmem>>, vector<1x256xf32>
      tpu.vector_store %arg22[%c0_123, %c0_124], %262 {strides = array<i32>} : memref<1x256xf32, #tpu.memory_space<vmem>>, vector<1x256xf32>,
      %c0_125 = arith.constant 0 : index
      %c0_126 = arith.constant 0 : index
      %c0_127 = arith.constant 0 : index
      %c0_128 = arith.constant 0 : index
      %264 = vector.load %arg16[%c0_125, %c0_126, %c0_127, %c0_128] : memref<1x1x1x256xf32, #tpu.memory_space<vmem>>, vector<1x1x1x256xf32>
      %265 = vector.shape_cast %264 : vector<1x1x1x256xf32> to vector<1x256xf32>
      %266 = vector.shape_cast %262 : vector<1x256xf32> to vector<1x1x1x256xf32>
      tpu.vector_store %arg16[%c0_125, %c0_126, %c0_127, %c0_128], %266 {strides = array<i32>} : memref<1x1x1x256xf32, #tpu.memory_space<vmem>>, vector<1x1x1x256xf32>,
    } else {
    }
    return
  }
  func.func @transform_0(%arg0: i32, %arg1: i32) -> (i32, i32, i32, i32) {
    %c5_i32 = arith.constant 5 : i32
    %0 = arith.minsi %arg1, %c5_i32 : i32
    %c0_i32 = arith.constant 0 : i32
    %c0_i32_0 = arith.constant 0 : i32
    %c0_i32_1 = arith.constant 0 : i32
    return %0, %arg0, %c0_i32, %c0_i32_0 : i32, i32, i32, i32
  }
  func.func @transform_1(%arg0: i32, %arg1: i32) -> (i32, i32, i32) {
    %c0_i32 = arith.constant 0 : i32
    %c0_i32_0 = arith.constant 0 : i32
    %c0_i32_1 = arith.constant 0 : i32
    return %arg0, %c0_i32, %c0_i32_0 : i32, i32, i32
  }
  func.func @transform_2(%arg0: i32, %arg1: i32) -> (i32, i32) {
    %c0_i32 = arith.constant 0 : i32
    %c0_i32_0 = arith.constant 0 : i32
    %c0_i32_1 = arith.constant 0 : i32
    return %c0_i32, %c0_i32_0 : i32, i32
  }
  func.func @transform_3(%arg0: i32, %arg1: i32) -> (i32, i32) {
    %c0_i32 = arith.constant 0 : i32
    %c0_i32_0 = arith.constant 0 : i32
    %c0_i32_1 = arith.constant 0 : i32
    return %c0_i32, %c0_i32_0 : i32, i32
  }
  func.func @transform_4(%arg0: i32, %arg1: i32) -> (i32, i32) {
    %c0_i32 = arith.constant 0 : i32
    %c0_i32_0 = arith.constant 0 : i32
    %c0_i32_1 = arith.constant 0 : i32
    return %c0_i32, %c0_i32_0 : i32, i32
  }
  func.func @transform_5(%arg0: i32, %arg1: i32) -> (i32, i32) {
    %c0_i32 = arith.constant 0 : i32
    %c0_i32_0 = arith.constant 0 : i32
    %c0_i32_1 = arith.constant 0 : i32
    return %c0_i32, %c0_i32_0 : i32, i32
  }
  func.func @transform_6(%arg0: i32, %arg1: i32) -> (i32, i32) {
    %c0_i32 = arith.constant 0 : i32
    %c0_i32_0 = arith.constant 0 : i32
    %c0_i32_1 = arith.constant 0 : i32
    return %c0_i32, %c0_i32_0 : i32, i32
  }
  func.func @transform_7(%arg0: i32, %arg1: i32) -> (i32, i32) {
    %c0_i32 = arith.constant 0 : i32
    %c0_i32_0 = arith.constant 0 : i32
    %c0_i32_1 = arith.constant 0 : i32
    return %c0_i32, %c0_i32_0 : i32, i32
  }
  func.func @transform_8(%arg0: i32, %arg1: i32) -> (i32, i32) {
    %c0_i32 = arith.constant 0 : i32
    %c0_i32_0 = arith.constant 0 : i32
    %c0_i32_1 = arith.constant 0 : i32
    return %c0_i32, %c0_i32_0 : i32, i32
  }
  func.func @transform_9(%arg0: i32, %arg1: i32) -> (i32, i32) {
    %c0_i32 = arith.constant 0 : i32
    %c0_i32_0 = arith.constant 0 : i32
    %c0_i32_1 = arith.constant 0 : i32
    return %c0_i32, %c0_i32_0 : i32, i32
  }
  func.func @transform_10(%arg0: i32, %arg1: i32) -> (i32, i32) {
    %c0_i32 = arith.constant 0 : i32
    %c0_i32_0 = arith.constant 0 : i32
    %c0_i32_1 = arith.constant 0 : i32
    return %c0_i32, %c0_i32_0 : i32, i32
  }
  func.func @transform_11(%arg0: i32, %arg1: i32) -> (i32, i32) {
    %c0_i32 = arith.constant 0 : i32
    %c0_i32_0 = arith.constant 0 : i32
    %c0_i32_1 = arith.constant 0 : i32
    return %c0_i32, %c0_i32_0 : i32, i32
  }
  func.func @transform_12(%arg0: i32, %arg1: i32) -> (i32, i32) {
    %c0_i32 = arith.constant 0 : i32
    %c0_i32_0 = arith.constant 0 : i32
    %c0_i32_1 = arith.constant 0 : i32
    return %c0_i32, %c0_i32_0 : i32, i32
  }
  func.func @transform_13(%arg0: i32, %arg1: i32) -> (i32, i32) {
    %c0_i32 = arith.constant 0 : i32
    %c0_i32_0 = arith.constant 0 : i32
    %c0_i32_1 = arith.constant 0 : i32
    return %c0_i32, %c0_i32_0 : i32, i32
  }
  func.func @transform_14(%arg0: i32, %arg1: i32) -> (i32, i32, i32, i32) {
    %c5_i32 = arith.constant 5 : i32
    %0 = arith.subi %arg1, %c5_i32 : i32
    %c0_i32 = arith.constant 0 : i32
    %1 = arith.maxsi %0, %c0_i32 : i32
    %c0_i32_0 = arith.constant 0 : i32
    %c0_i32_1 = arith.constant 0 : i32
    %c0_i32_2 = arith.constant 0 : i32
    return %1, %arg0, %c0_i32_0, %c0_i32_1 : i32, i32, i32, i32
  }
}

</mosaic_0001>

<llo_original>
// kernel: tpu_custom_call.1
$region0: #{tpu_custom_call.1}
  #allocation0 [shape = 'u32[]', space=smem, size = 0x4, offset = 0x4, fixed_abs, tag = 'smem constant byte address 0x4 - core index']
  #allocation1 [shape = 'u32[144,128]{1,0:T(1,128)}', space=vmem, size = 0x12000, scoped, tag = 'internal scratch']
  #allocation2 [shape = 'f32[288,256]{1,0:T(8,128)}', space=vmem, size = 0x48000, scoped, tag = 'scratch operand']
  #allocation3 [shape = 'f32[16,256]{1,0:T(8,128)}', space=vmem, size = 0x4000, scoped, tag = 'scratch operand']
  #allocation4 [shape = 'f32[16,256]{1,0:T(8,128)}', space=vmem, size = 0x4000, scoped, tag = 'scratch operand']
  #allocation5 [shape = 'f32[16,256]{1,0:T(8,128)}', space=vmem, size = 0x4000, scoped, tag = 'scratch operand']
  #allocation6 [shape = 'f32[16,256]{1,0:T(8,128)}', space=vmem, size = 0x4000, scoped, tag = 'scratch operand']
  #allocation7 [shape = 'f32[1,256]{1,0:T(1,128)}', space=vmem, size = 0x400, scoped, tag = 'scratch operand']
  #allocation8 [shape = 'f32[1,1]{1,0:T(1,128)S(1)}', space=vmem, size = 0x200, scoped, tag = 'scoped memory for tpu_custom_call.1']
  %s0 = inlined_call_operand.hbm [shape: f32[6,2,1,256], index: 0, kind: input, shape index: {}]
  %s1 = inlined_call_operand.vmem [shape: f32[2,3,256], index: 1, kind: input, shape index: {}]
  %s2 = inlined_call_operand.vmem [shape: f32[2,4], index: 2, kind: input, shape index: {}]
  %s3 = inlined_call_operand.vmem [shape: f32[4,2], index: 3, kind: input, shape index: {}]
  %s4 = inlined_call_operand.hbm [shape: f32[512,256], index: 4, kind: input, shape index: {}]
  %s5 = inlined_call_operand.vmem [shape: f32[8,4], index: 5, kind: input, shape index: {}]
  %s6 = inlined_call_operand.vmem [shape: f32[8,1], index: 6, kind: input, shape index: {}]
  %s7 = inlined_call_operand.vmem [shape: f32[9,256], index: 7, kind: input, shape index: {}]
  %s8 = inlined_call_operand.hbm [shape: f32[64,216], index: 8, kind: input, shape index: {}]
  %s9 = inlined_call_operand.vmem [shape: f32[64,1], index: 9, kind: input, shape index: {}]
  %s10 = inlined_call_operand.vmem [shape: f32[64,288], index: 10, kind: input, shape index: {}]
  %s11 = inlined_call_operand.vmem [shape: f32[64,1], index: 11, kind: input, shape index: {}]
  %s12 = inlined_call_operand.vmem [shape: f32[1,16], index: 12, kind: input, shape index: {}]
  %s13 = inlined_call_operand.<no memory space> [shape: f32[1,1], index: 13, kind: input, shape index: {}]
  %s14 = inlined_call_operand.hbm [shape: f32[4,2,1,256], index: 14, kind: output, shape index: {}]
  %s15 = sld [smem:[#allocation0]]
  $region109: #{tpu_custom_call.1} parent=0
    _
  %s17 = ssub.s32 1, %s15
  %s18 = scalar_select 0, %s17, %s15
  %v19 = vstv %s13
  %20 = vst [vmem:[#allocation8] sm:$0x1] %v19
  $region1: #{tpu_custom_call.1} parent=0
    #allocation9 [shape = 'u8[2048]{0}', space=vmem, size = 0x800, scoped, tag = 'input window, operand 0']
    #allocation10 [shape = 's32[2]{0}', space=sflag, size = 0x8, scoped, tag = 'scoped memory for tpu_custom_call.1']
    #allocation11 [shape = 's32[2]{0}', space=sflag, size = 0x8, scoped, tag = 'scoped memory for tpu_custom_call.1']
    #allocation12 [shape = 'u8[524288]{0}', space=vmem, size = 0x80000, scoped, tag = 'input window, operand 4, single buffered']
    #allocation13 [shape = 's32[1]{0}', space=sflag, size = 0x4, scoped, tag = 'scoped memory for tpu_custom_call.1']
    #allocation14 [shape = 'u8[65536]{0}', space=vmem, size = 0x10000, scoped, tag = 'input window, operand 8, single buffered']
    #allocation15 [shape = 'u8[2048]{0}', space=vmem, size = 0x800, scoped, tag = 'output window, operand 0']
    %21 = vsyncpa [#allocation10], 0
    %s22 = scalar_lea.sflag [#allocation10], 1
    %23 = vsyncpa %s22, 0
    %24 = vsyncpa [#allocation13], 0
    %25 = vsyncpa [#allocation11], 0
    %s26 = scalar_lea.sflag [#allocation11], 1
    %27 = vsyncpa %s26, 0
    loop: start=0, step=1, limit=20
    $region2: #{tpu_custom_call.1} parent=1 // loop_pre_header
      _
    $region3: #{tpu_custom_call.1} parent=1 // loop_header
      %s29 = sphi 0, %s33
      %p30 = scmp.ge.s32.totalorder %s29, 20
      %s36 = sphi 0, %s48
      %s37 = sphi 0, %s44
      %s38 = sphi 0, %s36
      %s39 = sphi 0, %s37
      %s40 = sphi 0, %s38
      %s41 = sphi 0, %s39
      %s57 = sphi 0, %s59
      %s60 = sphi 0, %s57
      %s61 = sphi 0, %s60
      %s77 = sphi 0, %s61
      %s83 = sphi 0, %s85
      %s86 = sphi 0, %s83
      %s87 = sphi 0, %s86
      %s103 = sphi 0, %s87
      %s107 = sphi 0, %s107
      %s109 = sphi 0, %s107
      %s110 = sphi 0, %s109
      %s124 = sphi 0, %s110
      %s128 = sphi 0, %s128
      %s130 = sphi 0, %s128
      %s131 = sphi 0, %s130
      %s145 = sphi 0, %s131
      %s149 = sphi 0, %s149
      %s151 = sphi 0, %s149
      %s152 = sphi 0, %s151
      %s166 = sphi 0, %s152
      %s170 = sphi 0, %s170
      %s172 = sphi 0, %s170
      %s173 = sphi 0, %s172
      %s187 = sphi 0, %s173
      %s191 = sphi 0, %s191
      %s193 = sphi 0, %s191
      %s194 = sphi 0, %s193
      %s208 = sphi 0, %s194
      %s212 = sphi 0, %s212
      %s214 = sphi 0, %s212
      %s215 = sphi 0, %s214
      %s229 = sphi 0, %s215
      %s233 = sphi 0, %s233
      %s235 = sphi 0, %s233
      %s236 = sphi 0, %s235
      %s250 = sphi 0, %s236
      %s254 = sphi 0, %s254
      %s256 = sphi 0, %s254
      %s257 = sphi 0, %s256
      %s271 = sphi 0, %s257
      %s275 = sphi 0, %s275
      %s277 = sphi 0, %s275
      %s278 = sphi 0, %s277
      %s292 = sphi 0, %s278
      %s296 = sphi 0, %s296
      %s298 = sphi 0, %s296
      %s299 = sphi 0, %s298
      %s313 = sphi 0, %s299
      %s317 = sphi 0, %s317
      %s319 = sphi 0, %s317
      %s320 = sphi 0, %s319
      %s334 = sphi 0, %s320
      %s338 = sphi 0, %s338
      %s340 = sphi 0, %s338
      %s341 = sphi 0, %s340
      %s355 = sphi 0, %s341
      %s369 = sphi 0, %s371
      %s372 = sphi 0, %s369
      %s373 = sphi 0, %s372
      %s389 = sphi 0, %s373
    $region4: #{tpu_custom_call.1} parent=1 // loop_header_branch
      %32 = sbr.rel (%p30) target = $region8
    $region5: #{tpu_custom_call.1} parent=1 // loop_body
      %s34 = ssub.s32 %s29, 1
      %s35 = ssub.s32 %s29, 2
      %s42 = sadd.s32 1, %s37
      %p43 = scmp.ge.s32.totalorder %s42, 9
      %s44 = scalar_select %p43, 0, %s42
      %s45 = sadd.s32 1, %s36
      %s46 = scalar_select %p43, %s45, %s36
      %p47 = scmp.ge.s32.totalorder %s46, 2
      %s48 = scalar_select %p47, 0, %s46
      %p49 = scmp.lt.s32.totalorder %s37, 5
      %s50 = scalar_select %p49, %s37, 5
      %p51 = scmp.lt.s32.totalorder %s44, 5
      %s52 = scalar_select %p51, %s44, 5
      %s53 = ssub.s32 %s50, %s52
      %s54 = ssub.s32 %s36, %s48
      %s55 = sor.u32 %s53, %s54
      %p56 = scmp.eq.s32.totalorder %s55, 0
      %s58 = sadd.s32 %s57, 1
      %s59 = scalar_select %p56, %s57, %s58
      %p62 = pneg %p56
      %p63 = scmp.eq.s32.totalorder %s29, 17
      %p64 = por %p62, %p63
      %p65 = scmp.ne.s32.totalorder %s57, %s60
      %p66 = scmp.eq.s32.totalorder %s29, 0
      %p67 = por %p65, %p66
      %p68 = scmp.ne.s32.totalorder %s57, %s60
      %p69 = scmp.eq.s32.totalorder %s34, 17
      %p70 = por %p68, %p69
      %p71 = scmp.ne.s32.totalorder %s60, %s61
      %p72 = scmp.eq.s32.totalorder %s34, 0
      %p73 = por %p71, %p72
      %p74 = scmp.ne.s32.totalorder %s60, %s61
      %p75 = scmp.eq.s32.totalorder %s35, 17
      %p76 = por %p74, %p75
      %p78 = scmp.ne.s32.totalorder %s61, %s77
      %p79 = scmp.eq.s32.totalorder %s35, 0
      %p80 = por %p78, %p79
      %s81 = ssub.s32 %s36, %s48
      %p82 = scmp.eq.s32.totalorder %s81, 0
      %s84 = sadd.s32 %s83, 1
      %s85 = scalar_select %p82, %s83, %s84
      %p88 = pneg %p82
      %p89 = scmp.eq.s32.totalorder %s29, 17
      %p90 = por %p88, %p89
      %p91 = scmp.ne.s32.totalorder %s83, %s86
      %p92 = scmp.eq.s32.totalorder %s29, 0
      %p93 = por %p91, %p92
      %p94 = scmp.ne.s32.totalorder %s83, %s86
      %p95 = scmp.eq.s32.totalorder %s34, 17
      %p96 = por %p94, %p95
      %p97 = scmp.ne.s32.totalorder %s86, %s87
      %p98 = scmp.eq.s32.totalorder %s34, 0
      %p99 = por %p97, %p98
      %p100 = scmp.ne.s32.totalorder %s86, %s87
      %p101 = scmp.eq.s32.totalorder %s35, 17
      %p102 = por %p100, %p101
      %p104 = scmp.ne.s32.totalorder %s87, %s103
      %p105 = scmp.eq.s32.totalorder %s35, 0
      %p106 = por %p104, %p105
      %s108 = sadd.s32 %s107, 1
      %p111 = scmp.eq.s32.totalorder %s29, 17
      %p112 = scmp.ne.s32.totalorder %s107, %s109
      %p113 = scmp.eq.s32.totalorder %s29, 0
      %p114 = por %p112, %p113
      %p115 = scmp.ne.s32.totalorder %s107, %s109
      %p116 = scmp.eq.s32.totalorder %s34, 17
      %p117 = por %p115, %p116
      %p118 = scmp.ne.s32.totalorder %s109, %s110
      %p119 = scmp.eq.s32.totalorder %s34, 0
      %p120 = por %p118, %p119
      %p121 = scmp.ne.s32.totalorder %s109, %s110
      %p122 = scmp.eq.s32.totalorder %s35, 17
      %p123 = por %p121, %p122
      %p125 = scmp.ne.s32.totalorder %s110, %s124
      %p126 = scmp.eq.s32.totalorder %s35, 0
      %p127 = por %p125, %p126
      %s129 = sadd.s32 %s128, 1
      %p132 = scmp.eq.s32.totalorder %s29, 17
      %p133 = scmp.ne.s32.totalorder %s128, %s130
      %p134 = scmp.eq.s32.totalorder %s29, 0
      %p135 = por %p133, %p134
      %p136 = scmp.ne.s32.totalorder %s128, %s130
      %p137 = scmp.eq.s32.totalorder %s34, 17
      %p138 = por %p136, %p137
      %p139 = scmp.ne.s32.totalorder %s130, %s131
      %p140 = scmp.eq.s32.totalorder %s34, 0
      %p141 = por %p139, %p140
      %p142 = scmp.ne.s32.totalorder %s130, %s131
      %p143 = scmp.eq.s32.totalorder %s35, 17
      %p144 = por %p142, %p143
      %p146 = scmp.ne.s32.totalorder %s131, %s145
      %p147 = scmp.eq.s32.totalorder %s35, 0
      %p148 = por %p146, %p147
      %s150 = sadd.s32 %s149, 1
      %p153 = scmp.eq.s32.totalorder %s29, 17
      %p154 = scmp.ne.s32.totalorder %s149, %s151
      %p155 = scmp.eq.s32.totalorder %s29, 0
      %p156 = por %p154, %p155
      %p157 = scmp.ne.s32.totalorder %s149, %s151
      %p158 = scmp.eq.s32.totalorder %s34, 17
      %p159 = por %p157, %p158
      %p160 = scmp.ne.s32.totalorder %s151, %s152
      %p161 = scmp.eq.s32.totalorder %s34, 0
      %p162 = por %p160, %p161
      %p163 = scmp.ne.s32.totalorder %s151, %s152
      %p164 = scmp.eq.s32.totalorder %s35, 17
      %p165 = por %p163, %p164
      %p167 = scmp.ne.s32.totalorder %s152, %s166
      %p168 = scmp.eq.s32.totalorder %s35, 0
      %p169 = por %p167, %p168
      %s171 = sadd.s32 %s170, 1
      %p174 = scmp.eq.s32.totalorder %s29, 17
      %p175 = scmp.ne.s32.totalorder %s170, %s172
      %p176 = scmp.eq.s32.totalorder %s29, 0
      %p177 = por %p175, %p176
      %p178 = scmp.ne.s32.totalorder %s170, %s172
      %p179 = scmp.eq.s32.totalorder %s34, 17
      %p180 = por %p178, %p179
      %p181 = scmp.ne.s32.totalorder %s172, %s173
      %p182 = scmp.eq.s32.totalorder %s34, 0
      %p183 = por %p181, %p182
      %p184 = scmp.ne.s32.totalorder %s172, %s173
      %p185 = scmp.eq.s32.totalorder %s35, 17
      %p186 = por %p184, %p185
      %p188 = scmp.ne.s32.totalorder %s173, %s187
      %p189 = scmp.eq.s32.totalorder %s35, 0
      %p190 = por %p188, %p189
      %s192 = sadd.s32 %s191, 1
      %p195 = scmp.eq.s32.totalorder %s29, 17
      %p196 = scmp.ne.s32.totalorder %s191, %s193
      %p197 = scmp.eq.s32.totalorder %s29, 0
      %p198 = por %p196, %p197
      %p199 = scmp.ne.s32.totalorder %s191, %s193
      %p200 = scmp.eq.s32.totalorder %s34, 17
      %p201 = por %p199, %p200
      %p202 = scmp.ne.s32.totalorder %s193, %s194
      %p203 = scmp.eq.s32.totalorder %s34, 0
      %p204 = por %p202, %p203
      %p205 = scmp.ne.s32.totalorder %s193, %s194
      %p206 = scmp.eq.s32.totalorder %s35, 17
      %p207 = por %p205, %p206
      %p209 = scmp.ne.s32.totalorder %s194, %s208
      %p210 = scmp.eq.s32.totalorder %s35, 0
      %p211 = por %p209, %p210
      %s213 = sadd.s32 %s212, 1
      %p216 = scmp.eq.s32.totalorder %s29, 17
      %p217 = scmp.ne.s32.totalorder %s212, %s214
      %p218 = scmp.eq.s32.totalorder %s29, 0
      %p219 = por %p217, %p218
      %p220 = scmp.ne.s32.totalorder %s212, %s214
      %p221 = scmp.eq.s32.totalorder %s34, 17
      %p222 = por %p220, %p221
      %p223 = scmp.ne.s32.totalorder %s214, %s215
      %p224 = scmp.eq.s32.totalorder %s34, 0
      %p225 = por %p223, %p224
      %p226 = scmp.ne.s32.totalorder %s214, %s215
      %p227 = scmp.eq.s32.totalorder %s35, 17
      %p228 = por %p226, %p227
      %p230 = scmp.ne.s32.totalorder %s215, %s229
      %p231 = scmp.eq.s32.totalorder %s35, 0
      %p232 = por %p230, %p231
      %s234 = sadd.s32 %s233, 1
      %p237 = scmp.eq.s32.totalorder %s29, 17
      %p238 = scmp.ne.s32.totalorder %s233, %s235
      %p239 = scmp.eq.s32.totalorder %s29, 0
      %p240 = por %p238, %p239
      %p241 = scmp.ne.s32.totalorder %s233, %s235
      %p242 = scmp.eq.s32.totalorder %s34, 17
      %p243 = por %p241, %p242
      %p244 = scmp.ne.s32.totalorder %s235, %s236
      %p245 = scmp.eq.s32.totalorder %s34, 0
      %p246 = por %p244, %p245
      %p247 = scmp.ne.s32.totalorder %s235, %s236
      %p248 = scmp.eq.s32.totalorder %s35, 17
      %p249 = por %p247, %p248
      %p251 = scmp.ne.s32.totalorder %s236, %s250
      %p252 = scmp.eq.s32.totalorder %s35, 0
      %p253 = por %p251, %p252
      %s255 = sadd.s32 %s254, 1
      %p258 = scmp.eq.s32.totalorder %s29, 17
      %p259 = scmp.ne.s32.totalorder %s254, %s256
      %p260 = scmp.eq.s32.totalorder %s29, 0
      %p261 = por %p259, %p260
      %p262 = scmp.ne.s32.totalorder %s254, %s256
      %p263 = scmp.eq.s32.totalorder %s34, 17
      %p264 = por %p262, %p263
      %p265 = scmp.ne.s32.totalorder %s256, %s257
      %p266 = scmp.eq.s32.totalorder %s34, 0
      %p267 = por %p265, %p266
      %p268 = scmp.ne.s32.totalorder %s256, %s257
      %p269 = scmp.eq.s32.totalorder %s35, 17
      %p270 = por %p268, %p269
      %p272 = scmp.ne.s32.totalorder %s257, %s271
      %p273 = scmp.eq.s32.totalorder %s35, 0
      %p274 = por %p272, %p273
      %s276 = sadd.s32 %s275, 1
      %p279 = scmp.eq.s32.totalorder %s29, 17
      %p280 = scmp.ne.s32.totalorder %s275, %s277
      %p281 = scmp.eq.s32.totalorder %s29, 0
      %p282 = por %p280, %p281
      %p283 = scmp.ne.s32.totalorder %s275, %s277
      %p284 = scmp.eq.s32.totalorder %s34, 17
      %p285 = por %p283, %p284
      %p286 = scmp.ne.s32.totalorder %s277, %s278
      %p287 = scmp.eq.s32.totalorder %s34, 0
      %p288 = por %p286, %p287
      %p289 = scmp.ne.s32.totalorder %s277, %s278
      %p290 = scmp.eq.s32.totalorder %s35, 17
      %p291 = por %p289, %p290
      %p293 = scmp.ne.s32.totalorder %s278, %s292
      %p294 = scmp.eq.s32.totalorder %s35, 0
      %p295 = por %p293, %p294
      %s297 = sadd.s32 %s296, 1
      %p300 = scmp.eq.s32.totalorder %s29, 17
      %p301 = scmp.ne.s32.totalorder %s296, %s298
      %p302 = scmp.eq.s32.totalorder %s29, 0
      %p303 = por %p301, %p302
      %p304 = scmp.ne.s32.totalorder %s296, %s298
      %p305 = scmp.eq.s32.totalorder %s34, 17
      %p306 = por %p304, %p305
      %p307 = scmp.ne.s32.totalorder %s298, %s299
      %p308 = scmp.eq.s32.totalorder %s34, 0
      %p309 = por %p307, %p308
      %p310 = scmp.ne.s32.totalorder %s298, %s299
      %p311 = scmp.eq.s32.totalorder %s35, 17
      %p312 = por %p310, %p311
      %p314 = scmp.ne.s32.totalorder %s299, %s313
      %p315 = scmp.eq.s32.totalorder %s35, 0
      %p316 = por %p314, %p315
      %s318 = sadd.s32 %s317, 1
      %p321 = scmp.eq.s32.totalorder %s29, 17
      %p322 = scmp.ne.s32.totalorder %s317, %s319
      %p323 = scmp.eq.s32.totalorder %s29, 0
      %p324 = por %p322, %p323
      %p325 = scmp.ne.s32.totalorder %s317, %s319
      %p326 = scmp.eq.s32.totalorder %s34, 17
      %p327 = por %p325, %p326
      %p328 = scmp.ne.s32.totalorder %s319, %s320
      %p329 = scmp.eq.s32.totalorder %s34, 0
      %p330 = por %p328, %p329
      %p331 = scmp.ne.s32.totalorder %s319, %s320
      %p332 = scmp.eq.s32.totalorder %s35, 17
      %p333 = por %p331, %p332
      %p335 = scmp.ne.s32.totalorder %s320, %s334
      %p336 = scmp.eq.s32.totalorder %s35, 0
      %p337 = por %p335, %p336
      %s339 = sadd.s32 %s338, 1
      %p342 = scmp.eq.s32.totalorder %s29, 17
      %p343 = scmp.ne.s32.totalorder %s338, %s340
      %p344 = scmp.eq.s32.totalorder %s29, 0
      %p345 = por %p343, %p344
      %p346 = scmp.ne.s32.totalorder %s338, %s340
      %p347 = scmp.eq.s32.totalorder %s34, 17
      %p348 = por %p346, %p347
      %p349 = scmp.ne.s32.totalorder %s340, %s341
      %p350 = scmp.eq.s32.totalorder %s34, 0
      %p351 = por %p349, %p350
      %p352 = scmp.ne.s32.totalorder %s340, %s341
      %p353 = scmp.eq.s32.totalorder %s35, 17
      %p354 = por %p352, %p353
      %p356 = scmp.ne.s32.totalorder %s341, %s355
      %p357 = scmp.eq.s32.totalorder %s35, 0
      %p358 = por %p356, %p357
      %s359 = ssub.s32 %s37, 5
      %p360 = scmp.gt.s32.totalorder %s359, 0
      %s361 = scalar_select %p360, %s359, 0
      %s362 = ssub.s32 %s44, 5
      %p363 = scmp.gt.s32.totalorder %s362, 0
      %s364 = scalar_select %p363, %s362, 0
      %s365 = ssub.s32 %s361, %s364
      %s366 = ssub.s32 %s36, %s48
      %s367 = sor.u32 %s365, %s366
      %p368 = scmp.eq.s32.totalorder %s367, 0
      %s370 = sadd.s32 %s369, 1
      %s371 = scalar_select %p368, %s369, %s370
      %p374 = pneg %p368
      %p375 = scmp.eq.s32.totalorder %s29, 17
      %p376 = por %p374, %p375
      %p377 = scmp.ne.s32.totalorder %s369, %s372
      %p378 = scmp.eq.s32.totalorder %s29, 0
      %p379 = por %p377, %p378
      %p380 = scmp.ne.s32.totalorder %s369, %s372
      %p381 = scmp.eq.s32.totalorder %s34, 17
      %p382 = por %p380, %p381
      %p383 = scmp.ne.s32.totalorder %s372, %s373
      %p384 = scmp.eq.s32.totalorder %s34, 0
      %p385 = por %p383, %p384
      %p386 = scmp.ne.s32.totalorder %s372, %s373
      %p387 = scmp.eq.s32.totalorder %s35, 17
      %p388 = por %p386, %p387
      %p390 = scmp.ne.s32.totalorder %s373, %s389
      %p391 = scmp.eq.s32.totalorder %s35, 0
      %p392 = por %p390, %p391
      %p393 = scmp.le.s32.totalorder 1, %s29
      %p394 = scmp.lt.s32.totalorder %s29, 19
      %p395 = pnand %p393, %p394
      %p396 = pneg %p395
      // Predicated region
      $region9: #{tpu_custom_call.1} parent=5 // pred_check
        _
      $region10: #{tpu_custom_call.1} parent=5 // pred_check_branch
        %398 = sbr.rel (%p395) target = $region12
      $region11: #{tpu_custom_call.1} parent=5 // pred_region
        %s399 = ssub.s32 %s29, 1
        // Predicated region
        $region13: #{tpu_custom_call.1} parent=11 // pred_check
          %p400 = pneg %p120
        $region14: #{tpu_custom_call.1} parent=11 // pred_check_branch
          %402 = sbr.rel (%p400) target = $region16
        $region15: #{tpu_custom_call.1} parent=11 // pred_region
          _
        $region16: #{tpu_custom_call.1} parent=11 // pred_fallthru
          _
        // Predicated region
        $region17: #{tpu_custom_call.1} parent=11 // pred_check
          %p403 = pneg %p141
        $region18: #{tpu_custom_call.1} parent=11 // pred_check_branch
          %405 = sbr.rel (%p403) target = $region20
        $region19: #{tpu_custom_call.1} parent=11 // pred_region
          _
        $region20: #{tpu_custom_call.1} parent=11 // pred_fallthru
          _
        // Predicated region
        $region21: #{tpu_custom_call.1} parent=11 // pred_check
          %p406 = pneg %p162
        $region22: #{tpu_custom_call.1} parent=11 // pred_check_branch
          %408 = sbr.rel (%p406) target = $region24
        $region23: #{tpu_custom_call.1} parent=11 // pred_region
          %s410 = ssub.s32 16384, 16384
          %411 = vsyncadd [#allocation13], %s410
          %s412 = sshll.u32 [#allocation12], 4
          %s413 = int_to_ptr.vmem [resolvable:$true] %s412
          %418 = dma.hbm_to_vmem [thread:$0]  %s4, 16384, %s413, [#allocation13], 256, 256, 16
        $region24: #{tpu_custom_call.1} parent=11 // pred_fallthru
          _
        // Predicated region
        $region25: #{tpu_custom_call.1} parent=11 // pred_check
          %p419 = pneg %p183
        $region26: #{tpu_custom_call.1} parent=11 // pred_check_branch
          %421 = sbr.rel (%p419) target = $region28
        $region27: #{tpu_custom_call.1} parent=11 // pred_region
          _
        $region28: #{tpu_custom_call.1} parent=11 // pred_fallthru
          _
        // Predicated region
        $region29: #{tpu_custom_call.1} parent=11 // pred_check
          %p422 = pneg %p204
        $region30: #{tpu_custom_call.1} parent=11 // pred_check_branch
          %424 = sbr.rel (%p422) target = $region32
        $region31: #{tpu_custom_call.1} parent=11 // pred_region
          _
        $region32: #{tpu_custom_call.1} parent=11 // pred_fallthru
          _
        // Predicated region
        $region33: #{tpu_custom_call.1} parent=11 // pred_check
          %p425 = pneg %p225
        $region34: #{tpu_custom_call.1} parent=11 // pred_check_branch
          %427 = sbr.rel (%p425) target = $region36
        $region35: #{tpu_custom_call.1} parent=11 // pred_region
          _
        $region36: #{tpu_custom_call.1} parent=11 // pred_fallthru
          _
        // Predicated region
        $region37: #{tpu_custom_call.1} parent=11 // pred_check
          %p428 = pneg %p246
        $region38: #{tpu_custom_call.1} parent=11 // pred_check_branch
          %430 = sbr.rel (%p428) target = $region40
        $region39: #{tpu_custom_call.1} parent=11 // pred_region
          %s432 = ssub.s32 2048, 2048
          %433 = vsyncadd [#allocation13], %s432
          %s434 = sshll.u32 [#allocation14], 4
          %s435 = int_to_ptr.vmem [resolvable:$true] %s434
          %440 = dma.hbm_to_vmem [thread:$0]  %s8, 2048, %s435, [#allocation13], 256, 256, 16
        $region40: #{tpu_custom_call.1} parent=11 // pred_fallthru
          _
        // Predicated region
        $region41: #{tpu_custom_call.1} parent=11 // pred_check
          %p441 = pneg %p267
        $region42: #{tpu_custom_call.1} parent=11 // pred_check_branch
          %443 = sbr.rel (%p441) target = $region44
        $region43: #{tpu_custom_call.1} parent=11 // pred_region
          _
        $region44: #{tpu_custom_call.1} parent=11 // pred_fallthru
          _
        // Predicated region
        $region45: #{tpu_custom_call.1} parent=11 // pred_check
          %p444 = pneg %p288
        $region46: #{tpu_custom_call.1} parent=11 // pred_check_branch
          %446 = sbr.rel (%p444) target = $region48
        $region47: #{tpu_custom_call.1} parent=11 // pred_region
          _
        $region48: #{tpu_custom_call.1} parent=11 // pred_fallthru
          _
        // Predicated region
        $region49: #{tpu_custom_call.1} parent=11 // pred_check
          %p447 = pneg %p309
        $region50: #{tpu_custom_call.1} parent=11 // pred_check_branch
          %449 = sbr.rel (%p447) target = $region52
        $region51: #{tpu_custom_call.1} parent=11 // pred_region
          _
        $region52: #{tpu_custom_call.1} parent=11 // pred_fallthru
          _
        // Predicated region
        $region53: #{tpu_custom_call.1} parent=11 // pred_check
          %p450 = pneg %p330
        $region54: #{tpu_custom_call.1} parent=11 // pred_check_branch
          %452 = sbr.rel (%p450) target = $region56
        $region55: #{tpu_custom_call.1} parent=11 // pred_region
          _
        $region56: #{tpu_custom_call.1} parent=11 // pred_fallthru
          _
        // Predicated region
        $region57: #{tpu_custom_call.1} parent=11 // pred_check
          %p453 = pneg %p351
        $region58: #{tpu_custom_call.1} parent=11 // pred_check_branch
          %455 = sbr.rel (%p453) target = $region60
        $region59: #{tpu_custom_call.1} parent=11 // pred_region
          _
        $region60: #{tpu_custom_call.1} parent=11 // pred_fallthru
          _
      $region12: #{tpu_custom_call.1} parent=5 // pred_fallthru
        _
      %p456 = scmp.lt.s32.totalorder %s29, 18
      // Predicated region
      $region61: #{tpu_custom_call.1} parent=5 // pred_check
        %p457 = pneg %p456
      $region62: #{tpu_custom_call.1} parent=5 // pred_check_branch
        %459 = sbr.rel (%p457) target = $region64
      $region63: #{tpu_custom_call.1} parent=5 // pred_region
        // Predicated region
        $region65: #{tpu_custom_call.1} parent=63 // pred_check
          %p460 = pneg %p67
        $region66: #{tpu_custom_call.1} parent=63 // pred_check_branch
          %462 = sbr.rel (%p460) target = $region68
        $region67: #{tpu_custom_call.1} parent=63 // pred_region
          %s463 = sand.u32 %s57, 1
          %s464 = scalar_lea.sflag [#allocation10], %s463
          %s465 = sand.u32 %s57, 1
          %s466 = smul.addr %s465, 2
          %s467 = scalar_lea.vmem [#allocation9], %s466
          %p468 = scmp.lt.s32.totalorder %s37, 5
          %s469 = scalar_select %p468, %s37, 5
          %s471 = ssub.s32 32, 32
          %472 = vsyncadd %s464, %s471
          %s473 = smul.addr %s36, 2
          %s474 = smul.addr %s469, 4
          %s475 = sadd.s32 %s473, %s474
          %s476 = smul.addr %s475, 16
          %s477 = scalar_lea.hbm %s0, %s476
          %s479 = sshll.u32 %s467, 4
          %s480 = int_to_ptr.vmem [resolvable:$true] %s479
          %482 = dma.hbm_to_vmem [thread:$0]  %s477, 32, %s480, %s464
        $region68: #{tpu_custom_call.1} parent=63 // pred_fallthru
          _
        // Predicated region
        $region69: #{tpu_custom_call.1} parent=63 // pred_check
          %p483 = pneg %p93
        $region70: #{tpu_custom_call.1} parent=63 // pred_check_branch
          %485 = sbr.rel (%p483) target = $region72
        $region71: #{tpu_custom_call.1} parent=63 // pred_region
          %p486 = scmp.lt.s32.totalorder %s36, 1
          %s487 = scalar_select %p486, %s36, 1
          %s488 = smul.addr %s487, 2
          %s489 = smul.addr %s488, 4
          %s490 = scalar_lea.vmem %s1, %s489
        $region72: #{tpu_custom_call.1} parent=63 // pred_fallthru
          _
      $region64: #{tpu_custom_call.1} parent=5 // pred_fallthru
        _
      %p491 = scmp.le.s32.totalorder 1, %s29
      %p492 = scmp.lt.s32.totalorder %s29, 19
      %p493 = pnand %p491, %p492
      %p494 = pneg %p493
      // Predicated region
      $region73: #{tpu_custom_call.1} parent=5 // pred_check
        _
      $region74: #{tpu_custom_call.1} parent=5 // pred_check_branch
        %496 = sbr.rel (%p493) target = $region76
      $region75: #{tpu_custom_call.1} parent=5 // pred_region
        %s497 = ssub.s32 %s29, 1
        %s498 = sand.u32 %s60, 1
        %s499 = scalar_lea.sflag [#allocation10], %s498
        %s500 = sand.u32 %s60, 1
        %s501 = smul.addr %s500, 2
        %s502 = scalar_lea.vmem [#allocation9], %s501
        // Predicated region
        $region77: #{tpu_custom_call.1} parent=75 // pred_check
          %p503 = pneg %p73
        $region78: #{tpu_custom_call.1} parent=75 // pred_check_branch
          %505 = sbr.rel (%p503) target = $region80
        $region79: #{tpu_custom_call.1} parent=75 // pred_region
          %506 = dma.done %s499, 32
        $region80: #{tpu_custom_call.1} parent=75 // pred_fallthru
          _
        // Predicated region
        $region81: #{tpu_custom_call.1} parent=75 // pred_check
          %p507 = pneg %p162
        $region82: #{tpu_custom_call.1} parent=75 // pred_check_branch
          %509 = sbr.rel (%p507) target = $region84
        $region83: #{tpu_custom_call.1} parent=75 // pred_region
          %510 = dma.done [#allocation13], 16384
        $region84: #{tpu_custom_call.1} parent=75 // pred_fallthru
          _
        // Predicated region
        $region85: #{tpu_custom_call.1} parent=75 // pred_check
          %p511 = pneg %p246
        $region86: #{tpu_custom_call.1} parent=75 // pred_check_branch
          %513 = sbr.rel (%p511) target = $region88
        $region87: #{tpu_custom_call.1} parent=75 // pred_region
          %514 = dma.done [#allocation13], 2048
        $region88: #{tpu_custom_call.1} parent=75 // pred_fallthru
          _
        %s515 = sand.u32 %s60, 1
        %s516 = scalar_lea.sflag [#allocation10], %s515
        %s517 = sand.u32 %s60, 1
        %s518 = smul.addr %s517, 2
        %s519 = scalar_lea.vmem [#allocation9], %s518
        %p520 = pneg %p73
        %p521 = pneg %p70
        %p522 = scmp.lt.s32.totalorder %s38, 1
        %s523 = scalar_select %p522, %s38, 1
        %s524 = smul.addr %s523, 2
        %s525 = smul.addr %s524, 4
        %s526 = scalar_lea.vmem %s1, %s525
        %p527 = pneg %p99
        %p528 = pneg %p96
        %p529 = pneg %p120
        %p530 = pneg %p117
        %p531 = pneg %p141
        %p532 = pneg %p138
        %p533 = pneg %p162
        %p534 = pneg %p159
        %p535 = pneg %p183
        %p536 = pneg %p180
        %p537 = pneg %p204
        %p538 = pneg %p201
        %p539 = pneg %p225
        %p540 = pneg %p222
        %p541 = pneg %p246
        %p542 = pneg %p243
        %p543 = pneg %p267
        %p544 = pneg %p264
        %p545 = pneg %p288
        %p546 = pneg %p285
        %p547 = pneg %p309
        %p548 = pneg %p306
        %p549 = pneg %p330
        %p550 = pneg %p327
        %p551 = pneg %p351
        %p552 = pneg %p348
        %p553 = pneg %p385
        %p554 = pneg %p382
        %s555 = sand.u32 %s372, 1
        %s556 = scalar_lea.sflag [#allocation11], %s555
        %s557 = sand.u32 %s372, 1
        %s558 = smul.addr %s557, 2
        %s559 = scalar_lea.vmem [#allocation15], %s558
        %p560 = scmp.lt.s32.totalorder %s39, 5
        %s561 = scalar_select %p560, %s39, 5
        %p562 = scmp.lt.s32.totalorder %s38, 1
        %s563 = scalar_select %p562, %s38, 1
        %s564 = smul.addr %s563, 2
        %s565 = smul.addr %s564, 4
        %s566 = scalar_lea.vmem %s1, %s565
        %s567 = ssub.s32 %s39, 5
        %p568 = scmp.gt.s32.totalorder %s567, 0
        %s569 = scalar_select %p568, %s567, 0
        %p570 = scmp.eq.s32.totalorder %s39, 0
        // Predicated region
        $region89: #{tpu_custom_call.1} parent=75 // pred_check
          %p571 = pneg %p570
        $region90: #{tpu_custom_call.1} parent=75 // pred_check_branch
          %573 = sbr.rel (%p571) target = $region92
        $region91: #{tpu_custom_call.1} parent=75 // pred_region
          %574 = vst [vmem:[#allocation3] sm:$0xff] 0.0
          %575 = vst [vmem:[#allocation3 + $0x8] sm:$0xff] 0.0
          %576 = vst [vmem:[#allocation3 + $0x10] sm:$0xff] 0.0
          %577 = vst [vmem:[#allocation3 + $0x18] sm:$0xff] 0.0
          %578 = vst [vmem:[#allocation4] sm:$0xff] 0.0
          %579 = vst [vmem:[#allocation4 + $0x8] sm:$0xff] 0.0
          %580 = vst [vmem:[#allocation4 + $0x10] sm:$0xff] 0.0
          %581 = vst [vmem:[#allocation4 + $0x18] sm:$0xff] 0.0
          %582 = vst [vmem:[#allocation5] sm:$0xff] 0.0
          %583 = vst [vmem:[#allocation5 + $0x8] sm:$0xff] 0.0
          %584 = vst [vmem:[#allocation5 + $0x10] sm:$0xff] 0.0
          %585 = vst [vmem:[#allocation5 + $0x18] sm:$0xff] 0.0
          %586 = vst [vmem:[#allocation6] sm:$0xff] 0.0
          %587 = vst [vmem:[#allocation6 + $0x8] sm:$0xff] 0.0
          %588 = vst [vmem:[#allocation6 + $0x10] sm:$0xff] 0.0
          %589 = vst [vmem:[#allocation6 + $0x18] sm:$0xff] 0.0
          %v590 = vlaneseq
          %vm591 = vcmp.ge.s32.totalorder %v590, 0
          %vm592 = vcmp.lt.s32.totalorder %v590, 256
          %vm593 = vmand %vm591, %vm592
          %594 = vst.msk [vmem:[#allocation7] sm:$0x3] %vm593, 0.0
        $region92: #{tpu_custom_call.1} parent=75 // pred_fallthru
          _
        %p595 = scmp.ge.s32.totalorder %s39, 6
        %s596 = scalar_select %p595, 1, 0
        %s597 = scvt.s32.f32 %s596
        %s598 = ssub.f32 1.0, %s597
        %v599 = vld [vmem:[%s502] sm:$0x3]
        %v600 = vstv %s598
        %v601 = vmul.f32 %v600, %v599
        %v602 = vld [vmem:[#allocation7] sm:$0x3]
        %v603 = vstv %s597
        %v604 = vmul.f32 %v603, %v602
        %v605 = vadd.f32 %v601, %v604
        %v606 = vld [vmem:[%s566] sm:$0x77]
        %v608 = vlaneseq
        %v609 = vshrl.u32 %v608, 7
        %v610 = vsub.s32 0, %v609
        %v611 = vrot.slane %v605, %v610
        %v612 = vlaneseq
        %v613 = vshrl.u32 %v612, 7
        %v614 = vsub.s32 1, %v613
        %v615 = vrot.slane %v605, %v614
        %v619 = vcombine.high %v606, %v606
        %v620 = vrot.slane %v606, 7
        %v621 = vrot.slane %v619, 7
        %vm624 = vcmask 1040384
        %v625 = vsel %vm624, %v611, %v620
        %v626 = vsel %vm624, %v615, %v621
        %vm627 = vcmask 1043456
        %v628 = vsel %vm627, %v625, 0.0
        %v629 = vsel %vm627, %v626, 0.0
        %v630 = vadd.f32 %v628, %v629
        %631 = vadd.xlane.f32.xlu0 %v630
        %v632 = vpop.xlane.xlu0 %631
        %v633 = vrcp.pop 256.0
        %v634 = vmul.f32 %v632, %v633
        %v635 = vsel %vm627, %v625, -inf
        %v636 = vsel %vm627, %v626, -inf
        %v637 = vmax.f32 %v635, %v636
        %638 = vmax.xlane.f32.xlu0 %v637
        %v639 = vpop.xlane.xlu0 %638
        %vm640 = vcmask 7168
        %v641 = vsel %vm640, %v634, %v639
        %v642 = vld [vmem:[%s2] sm:$0x3]
        %vm643 = vcmask 31744
        %v645 = vsel %vm643, %v642, 0
        %v648 = vsel %vm627, %v641, 0
        %650 = vmatprep.subr.mxu0 0.0
        %651 = vmatpush1.msra.mxu0 %v648
        %652 = vmatprep.subr.mxu0 0.0
        %653 = vmatpush1.msra.mxu0 0.0
        %654 = vmatprep.subr.mxu0 0.0
        %655 = vmatpush1.msra.mxu0 0.0
        %656 = vmatprep.subr.mxu0 0.0
        %657 = vmatpush1.msra.mxu0 0.0
        %658 = vmatprep.subr.mxu0 0.0
        %659 = vmatpush1.msra.mxu0 0.0
        %660 = vmatprep.subr.mxu0 0.0
        %661 = vmatpush1.msra.mxu0 0.0
        %662 = vmatprep.subr.mxu0 0.0
        %663 = vmatpush1.msra.mxu0 0.0
        %664 = vmatprep.subr.mxu0 0.0
        %665 = vmatpush1.msra.mxu0 0.0
        %666 = vmatprep.subr.mxu0 0.0
        %667 = vmatpush1.msra.mxu0 0.0
        %668 = vmatprep.subr.mxu0 0.0
        %669 = vmatpush1.msra.mxu0 0.0
        %670 = vmatprep.subr.mxu0 0.0
        %671 = vmatpush1.msra.mxu0 0.0
        %672 = vmatprep.subr.mxu0 0.0
        %673 = vmatpush1.msra.mxu0 0.0
        %674 = vmatprep.subr.mxu0 0.0
        %675 = vmatpush1.msra.mxu0 0.0
        %676 = vmatprep.subr.mxu0 0.0
        %677 = vmatpush1.msra.mxu0 0.0
        %678 = vmatprep.subr.mxu0 0.0
        %679 = vmatpush1.msra.mxu0 0.0
        %680 = vmatprep.subr.mxu0 0.0
        %681 = vmatpush1.msra.mxu0 0.0
        %682 = vmatprep.subr.mxu0 0.0
        %683 = vmatpush1.msra.mxu0 0.0
        %684 = vmatprep.subr.mxu0 0.0
        %685 = vmatpush1.msra.mxu0 0.0
        %686 = vmatprep.subr.mxu0 0.0
        %687 = vmatpush1.msra.mxu0 0.0
        %688 = vmatprep.subr.mxu0 0.0
        %689 = vmatpush1.msra.mxu0 0.0
        %690 = vmatprep.subr.mxu0 0.0
        %691 = vmatpush1.msra.mxu0 0.0
        %692 = vmatprep.subr.mxu0 0.0
        %693 = vmatpush1.msra.mxu0 0.0
        %694 = vmatprep.subr.mxu0 0.0
        %695 = vmatpush1.msra.mxu0 0.0
        %696 = vmatprep.subr.mxu0 0.0
        %697 = vmatpush1.msra.mxu0 0.0
        %698 = vmatprep.subr.mxu0 0.0
        %699 = vmatpush1.msra.mxu0 0.0
        %700 = vmatprep.subr.mxu0 0.0
        %701 = vmatpush1.msra.mxu0 0.0
        %702 = vmatprep.subr.mxu0 0.0
        %703 = vmatpush1.msra.mxu0 0.0
        %704 = vmatprep.subr.mxu0 0.0
        %705 = vmatpush1.msra.mxu0 0.0
        %706 = vmatprep.subr.mxu0 0.0
        %707 = vmatpush1.msra.mxu0 0.0
        %708 = vmatprep.subr.mxu0 0.0
        %709 = vmatpush1.msra.mxu0 0.0
        %710 = vmatprep.subr.mxu0 0.0
        %711 = vmatpush1.msra.mxu0 0.0
        %712 = vmatprep.subr.mxu0 0.0
        %713 = vmatpush1.msra.mxu0 0.0
        %714 = vmatprep.mubr.f32.mxu0 0.0
        %715 = vmatmul.mubr.f32.gmra.mrb[0].mxu0 %v645
        %v716 = vpop.f32.mrb[0].mxu0
        %v717 = vadd.f32 0.0, %v716
        %v718 = vpop.f32.mrb[0].mxu0
        %719 = vdwg.mxu0
        %v720 = vmax.f32 %v717, 0.0
        %v721 = vld [vmem:[%s3] sm:$0xf]
        %vm722 = vcmask 15360
        %v724 = vsel %vm722, %v721, 0
        %vm726 = vcmask 1041408
        %v728 = vsel %vm726, %v720, 0
        %730 = vmatprep.subr.mxu0 0.0
        %731 = vmatpush1.msra.mxu0 %v728
        %732 = vmatprep.subr.mxu0 0.0
        %733 = vmatpush1.msra.mxu0 0.0
        %734 = vmatprep.subr.mxu0 0.0
        %735 = vmatpush1.msra.mxu0 0.0
        %736 = vmatprep.subr.mxu0 0.0
        %737 = vmatpush1.msra.mxu0 0.0
        %738 = vmatprep.subr.mxu0 0.0
        %739 = vmatpush1.msra.mxu0 0.0
        %740 = vmatprep.subr.mxu0 0.0
        %741 = vmatpush1.msra.mxu0 0.0
        %742 = vmatprep.subr.mxu0 0.0
        %743 = vmatpush1.msra.mxu0 0.0
        %744 = vmatprep.subr.mxu0 0.0
        %745 = vmatpush1.msra.mxu0 0.0
        %746 = vmatprep.subr.mxu0 0.0
        %747 = vmatpush1.msra.mxu0 0.0
        %748 = vmatprep.subr.mxu0 0.0
        %749 = vmatpush1.msra.mxu0 0.0
        %750 = vmatprep.subr.mxu0 0.0
        %751 = vmatpush1.msra.mxu0 0.0
        %752 = vmatprep.subr.mxu0 0.0
        %753 = vmatpush1.msra.mxu0 0.0
        %754 = vmatprep.subr.mxu0 0.0
        %755 = vmatpush1.msra.mxu0 0.0
        %756 = vmatprep.subr.mxu0 0.0
        %757 = vmatpush1.msra.mxu0 0.0
        %758 = vmatprep.subr.mxu0 0.0
        %759 = vmatpush1.msra.mxu0 0.0
        %760 = vmatprep.subr.mxu0 0.0
        %761 = vmatpush1.msra.mxu0 0.0
        %762 = vmatprep.subr.mxu0 0.0
        %763 = vmatpush1.msra.mxu0 0.0
        %764 = vmatprep.subr.mxu0 0.0
        %765 = vmatpush1.msra.mxu0 0.0
        %766 = vmatprep.subr.mxu0 0.0
        %767 = vmatpush1.msra.mxu0 0.0
        %768 = vmatprep.subr.mxu0 0.0
        %769 = vmatpush1.msra.mxu0 0.0
        %770 = vmatprep.subr.mxu0 0.0
        %771 = vmatpush1.msra.mxu0 0.0
        %772 = vmatprep.subr.mxu0 0.0
        %773 = vmatpush1.msra.mxu0 0.0
        %774 = vmatprep.subr.mxu0 0.0
        %775 = vmatpush1.msra.mxu0 0.0
        %776 = vmatprep.subr.mxu0 0.0
        %777 = vmatpush1.msra.mxu0 0.0
        %778 = vmatprep.subr.mxu0 0.0
        %779 = vmatpush1.msra.mxu0 0.0
        %780 = vmatprep.subr.mxu0 0.0
        %781 = vmatpush1.msra.mxu0 0.0
        %782 = vmatprep.subr.mxu0 0.0
        %783 = vmatpush1.msra.mxu0 0.0
        %784 = vmatprep.subr.mxu0 0.0
        %785 = vmatpush1.msra.mxu0 0.0
        %786 = vmatprep.subr.mxu0 0.0
        %787 = vmatpush1.msra.mxu0 0.0
        %788 = vmatprep.subr.mxu0 0.0
        %789 = vmatpush1.msra.mxu0 0.0
        %790 = vmatprep.subr.mxu0 0.0
        %791 = vmatpush1.msra.mxu0 0.0
        %792 = vmatprep.subr.mxu0 0.0
        %793 = vmatpush1.msra.mxu0 0.0
        %794 = vmatprep.mubr.f32.mxu0 0.0
        %795 = vmatmul.mubr.f32.gmra.mrb[0].mxu0 %v724
        %v796 = vpop.f32.mrb[0].mxu0
        %v797 = vadd.f32 0.0, %v796
        %v798 = vpop.f32.mrb[0].mxu0
        %799 = vdwg.mxu0
        %801 = vrot.lane.b32.xlu0 %v797, 127
        %v802 = vpop.permute.xlu0 %801
        %v804 = vadd.f32 %v797, %v802
        %v805 = vxor.u32 %v804, 2147483648
        %v806 = vmul.f32 %v805, 1.442695
        %v807 = vpow.pop %v806
        %v808 = vadd.f32 %v807, 1.0
        %v809 = vrcp.pop %v808
        %v810 = vmul.f32 1.0, %v809
        %812 = vset.pattern.permute.xlu0 0
        %813 = vperm.xlu0 %812, %v810
        %v814 = vpop.permute.xlu0 %813
        %v816 = vmul.f32 %v625, %v814
        %v817 = vmul.f32 %v626, %v814
        %v818 = vsel %vm627, %v816, 0.0
        %v819 = vrot.slane %v818, 4
        %v820 = vadd.f32 %v818, %v819
        %v821 = vrot.slane %v820, 2
        %v822 = vadd.f32 %v820, %v821
        %v823 = vrot.slane %v822, 1
        %v824 = vadd.f32 %v822, %v823
        %v825 = vsel %vm627, %v817, 0.0
        %v826 = vrot.slane %v825, 4
        %v827 = vadd.f32 %v825, %v826
        %v828 = vrot.slane %v827, 2
        %v829 = vadd.f32 %v827, %v828
        %v830 = vrot.slane %v829, 1
        %v831 = vadd.f32 %v829, %v830
        %v832 = vrcp.pop 4.0
        %v833 = vmul.f32 %v824, %v832
        %v834 = vmul.f32 %v831, %v832
        %v835 = vsel %vm627, %v816, -inf
        %v836 = vrot.slane %v835, 4
        %v837 = vmax.f32 %v835, %v836
        %v838 = vrot.slane %v837, 2
        %v839 = vmax.f32 %v837, %v838
        %v840 = vrot.slane %v839, 1
        %v841 = vmax.f32 %v839, %v840
        %v842 = vsel %vm627, %v817, -inf
        %v843 = vrot.slane %v842, 4
        %v844 = vmax.f32 %v842, %v843
        %v845 = vrot.slane %v844, 2
        %v846 = vmax.f32 %v844, %v845
        %v847 = vrot.slane %v846, 1
        %v848 = vmax.f32 %v846, %v847
        %v849 = vld [vmem:[#allocation12] sm:$0xff]
        %v850 = vld [vmem:[#allocation12 + $0x8] sm:$0xff]
        %v851 = vld [vmem:[#allocation12 + $0x10] sm:$0xff]
        %v852 = vld [vmem:[#allocation12 + $0x18] sm:$0xff]
        %v853 = vld [vmem:[#allocation12 + $0x20] sm:$0xff]
        %v854 = vld [vmem:[#allocation12 + $0x28] sm:$0xff]
        %v855 = vld [vmem:[#allocation12 + $0x30] sm:$0xff]
        %v856 = vld [vmem:[#allocation12 + $0x38] sm:$0xff]
        %v857 = vld [vmem:[#allocation12 + $0x40] sm:$0xff]
        %v858 = vld [vmem:[#allocation12 + $0x48] sm:$0xff]
        %v859 = vld [vmem:[#allocation12 + $0x50] sm:$0xff]
        %v860 = vld [vmem:[#allocation12 + $0x58] sm:$0xff]
        %v861 = vld [vmem:[#allocation12 + $0x60] sm:$0xff]
        %v862 = vld [vmem:[#allocation12 + $0x68] sm:$0xff]
        %v863 = vld [vmem:[#allocation12 + $0x70] sm:$0xff]
        %v864 = vld [vmem:[#allocation12 + $0x78] sm:$0xff]
        %v865 = vld [vmem:[#allocation12 + $0x80] sm:$0xff]
        %v866 = vld [vmem:[#allocation12 + $0x88] sm:$0xff]
        %v867 = vld [vmem:[#allocation12 + $0x90] sm:$0xff]
        %v868 = vld [vmem:[#allocation12 + $0x98] sm:$0xff]
        %v869 = vld [vmem:[#allocation12 + $0xa0] sm:$0xff]
        %v870 = vld [vmem:[#allocation12 + $0xa8] sm:$0xff]
        %v871 = vld [vmem:[#allocation12 + $0xb0] sm:$0xff]
        %v872 = vld [vmem:[#allocation12 + $0xb8] sm:$0xff]
        %v873 = vld [vmem:[#allocation12 + $0xc0] sm:$0xff]
        %v874 = vld [vmem:[#allocation12 + $0xc8] sm:$0xff]
        %v875 = vld [vmem:[#allocation12 + $0xd0] sm:$0xff]
        %v876 = vld [vmem:[#allocation12 + $0xd8] sm:$0xff]
        %v877 = vld [vmem:[#allocation12 + $0xe0] sm:$0xff]
        %v878 = vld [vmem:[#allocation12 + $0xe8] sm:$0xff]
        %v879 = vld [vmem:[#allocation12 + $0xf0] sm:$0xff]
        %v880 = vld [vmem:[#allocation12 + $0xf8] sm:$0xff]
        %v881 = vld [vmem:[#allocation12 + $0x100] sm:$0xff]
        %v882 = vld [vmem:[#allocation12 + $0x108] sm:$0xff]
        %v883 = vld [vmem:[#allocation12 + $0x110] sm:$0xff]
        %v884 = vld [vmem:[#allocation12 + $0x118] sm:$0xff]
        %v885 = vld [vmem:[#allocation12 + $0x120] sm:$0xff]
        %v886 = vld [vmem:[#allocation12 + $0x128] sm:$0xff]
        %v887 = vld [vmem:[#allocation12 + $0x130] sm:$0xff]
        %v888 = vld [vmem:[#allocation12 + $0x138] sm:$0xff]
        %v889 = vld [vmem:[#allocation12 + $0x140] sm:$0xff]
        %v890 = vld [vmem:[#allocation12 + $0x148] sm:$0xff]
        %v891 = vld [vmem:[#allocation12 + $0x150] sm:$0xff]
        %v892 = vld [vmem:[#allocation12 + $0x158] sm:$0xff]
        %v893 = vld [vmem:[#allocation12 + $0x160] sm:$0xff]
        %v894 = vld [vmem:[#allocation12 + $0x168] sm:$0xff]
        %v895 = vld [vmem:[#allocation12 + $0x170] sm:$0xff]
        %v896 = vld [vmem:[#allocation12 + $0x178] sm:$0xff]
        %v897 = vld [vmem:[#allocation12 + $0x180] sm:$0xff]
        %v898 = vld [vmem:[#allocation12 + $0x188] sm:$0xff]
        %v899 = vld [vmem:[#allocation12 + $0x190] sm:$0xff]
        %v900 = vld [vmem:[#allocation12 + $0x198] sm:$0xff]
        %v901 = vld [vmem:[#allocation12 + $0x1a0] sm:$0xff]
        %v902 = vld [vmem:[#allocation12 + $0x1a8] sm:$0xff]
        %v903 = vld [vmem:[#allocation12 + $0x1b0] sm:$0xff]
        %v904 = vld [vmem:[#allocation12 + $0x1b8] sm:$0xff]
        %v905 = vld [vmem:[#allocation12 + $0x1c0] sm:$0xff]
        %v906 = vld [vmem:[#allocation12 + $0x1c8] sm:$0xff]
        %v907 = vld [vmem:[#allocation12 + $0x1d0] sm:$0xff]
        %v908 = vld [vmem:[#allocation12 + $0x1d8] sm:$0xff]
        %v909 = vld [vmem:[#allocation12 + $0x1e0] sm:$0xff]
        %v910 = vld [vmem:[#allocation12 + $0x1e8] sm:$0xff]
        %v911 = vld [vmem:[#allocation12 + $0x1f0] sm:$0xff]
        %v912 = vld [vmem:[#allocation12 + $0x1f8] sm:$0xff]
        %v913 = vld [vmem:[#allocation12 + $0x200] sm:$0xff]
        %v914 = vld [vmem:[#allocation12 + $0x208] sm:$0xff]
        %v915 = vld [vmem:[#allocation12 + $0x210] sm:$0xff]
        %v916 = vld [vmem:[#allocation12 + $0x218] sm:$0xff]
        %v917 = vld [vmem:[#allocation12 + $0x220] sm:$0xff]
        %v918 = vld [vmem:[#allocation12 + $0x228] sm:$0xff]
        %v919 = vld [vmem:[#allocation12 + $0x230] sm:$0xff]
        %v920 = vld [vmem:[#allocation12 + $0x238] sm:$0xff]
        %v921 = vld [vmem:[#allocation12 + $0x240] sm:$0xff]
        %v922 = vld [vmem:[#allocation12 + $0x248] sm:$0xff]
        %v923 = vld [vmem:[#allocation12 + $0x250] sm:$0xff]
        %v924 = vld [vmem:[#allocation12 + $0x258] sm:$0xff]
        %v925 = vld [vmem:[#allocation12 + $0x260] sm:$0xff]
        %v926 = vld [vmem:[#allocation12 + $0x268] sm:$0xff]
        %v927 = vld [vmem:[#allocation12 + $0x270] sm:$0xff]
        %v928 = vld [vmem:[#allocation12 + $0x278] sm:$0xff]
        %v929 = vld [vmem:[#allocation12 + $0x280] sm:$0xff]
        %v930 = vld [vmem:[#allocation12 + $0x288] sm:$0xff]
        %v931 = vld [vmem:[#allocation12 + $0x290] sm:$0xff]
        %v932 = vld [vmem:[#allocation12 + $0x298] sm:$0xff]
        %v933 = vld [vmem:[#allocation12 + $0x2a0] sm:$0xff]
        %v934 = vld [vmem:[#allocation12 + $0x2a8] sm:$0xff]
        %v935 = vld [vmem:[#allocation12 + $0x2b0] sm:$0xff]
        %v936 = vld [vmem:[#allocation12 + $0x2b8] sm:$0xff]
        %v937 = vld [vmem:[#allocation12 + $0x2c0] sm:$0xff]
        %v938 = vld [vmem:[#allocation12 + $0x2c8] sm:$0xff]
        %v939 = vld [vmem:[#allocation12 + $0x2d0] sm:$0xff]
        %v940 = vld [vmem:[#allocation12 + $0x2d8] sm:$0xff]
        %v941 = vld [vmem:[#allocation12 + $0x2e0] sm:$0xff]
        %v942 = vld [vmem:[#allocation12 + $0x2e8] sm:$0xff]
        %v943 = vld [vmem:[#allocation12 + $0x2f0] sm:$0xff]
        %v944 = vld [vmem:[#allocation12 + $0x2f8] sm:$0xff]
        %v945 = vld [vmem:[#allocation12 + $0x300] sm:$0xff]
        %v946 = vld [vmem:[#allocation12 + $0x308] sm:$0xff]
        %v947 = vld [vmem:[#allocation12 + $0x310] sm:$0xff]
        %v948 = vld [vmem:[#allocation12 + $0x318] sm:$0xff]
        %v949 = vld [vmem:[#allocation12 + $0x320] sm:$0xff]
        %v950 = vld [vmem:[#allocation12 + $0x328] sm:$0xff]
        %v951 = vld [vmem:[#allocation12 + $0x330] sm:$0xff]
        %v952 = vld [vmem:[#allocation12 + $0x338] sm:$0xff]
        %v953 = vld [vmem:[#allocation12 + $0x340] sm:$0xff]
        %v954 = vld [vmem:[#allocation12 + $0x348] sm:$0xff]
        %v955 = vld [vmem:[#allocation12 + $0x350] sm:$0xff]
        %v956 = vld [vmem:[#allocation12 + $0x358] sm:$0xff]
        %v957 = vld [vmem:[#allocation12 + $0x360] sm:$0xff]
        %v958 = vld [vmem:[#allocation12 + $0x368] sm:$0xff]
        %v959 = vld [vmem:[#allocation12 + $0x370] sm:$0xff]
        %v960 = vld [vmem:[#allocation12 + $0x378] sm:$0xff]
        %v961 = vld [vmem:[#allocation12 + $0x380] sm:$0xff]
        %v962 = vld [vmem:[#allocation12 + $0x388] sm:$0xff]
        %v963 = vld [vmem:[#allocation12 + $0x390] sm:$0xff]
        %v964 = vld [vmem:[#allocation12 + $0x398] sm:$0xff]
        %v965 = vld [vmem:[#allocation12 + $0x3a0] sm:$0xff]
        %v966 = vld [vmem:[#allocation12 + $0x3a8] sm:$0xff]
        %v967 = vld [vmem:[#allocation12 + $0x3b0] sm:$0xff]
        %v968 = vld [vmem:[#allocation12 + $0x3b8] sm:$0xff]
        %v969 = vld [vmem:[#allocation12 + $0x3c0] sm:$0xff]
        %v970 = vld [vmem:[#allocation12 + $0x3c8] sm:$0xff]
        %v971 = vld [vmem:[#allocation12 + $0x3d0] sm:$0xff]
        %v972 = vld [vmem:[#allocation12 + $0x3d8] sm:$0xff]
        %v973 = vld [vmem:[#allocation12 + $0x3e0] sm:$0xff]
        %v974 = vld [vmem:[#allocation12 + $0x3e8] sm:$0xff]
        %v975 = vld [vmem:[#allocation12 + $0x3f0] sm:$0xff]
        %v976 = vld [vmem:[#allocation12 + $0x3f8] sm:$0xff]
        %977 = vmatprep.subr.mxu0 %v850
        %978 = vmatpush1.msra.mxu0 %v849
        %979 = vmatprep.subr.mxu0 %v852
        %980 = vmatpush1.msra.mxu0 %v851
        %981 = vmatprep.subr.mxu0 %v854
        %982 = vmatpush1.msra.mxu0 %v853
        %983 = vmatprep.subr.mxu0 %v856
        %984 = vmatpush1.msra.mxu0 %v855
        %985 = vmatprep.subr.mxu0 %v858
        %986 = vmatpush1.msra.mxu0 %v857
        %987 = vmatprep.subr.mxu0 %v860
        %988 = vmatpush1.msra.mxu0 %v859
        %989 = vmatprep.subr.mxu0 %v862
        %990 = vmatpush1.msra.mxu0 %v861
        %991 = vmatprep.subr.mxu0 %v864
        %992 = vmatpush1.msra.mxu0 %v863
        %993 = vmatprep.subr.mxu0 %v866
        %994 = vmatpush1.msra.mxu0 %v865
        %995 = vmatprep.subr.mxu0 %v868
        %996 = vmatpush1.msra.mxu0 %v867
        %997 = vmatprep.subr.mxu0 %v870
        %998 = vmatpush1.msra.mxu0 %v869
        %999 = vmatprep.subr.mxu0 %v872
        %1000 = vmatpush1.msra.mxu0 %v871
        %1001 = vmatprep.subr.mxu0 %v874
        %1002 = vmatpush1.msra.mxu0 %v873
        %1003 = vmatprep.subr.mxu0 %v876
        %1004 = vmatpush1.msra.mxu0 %v875
        %1005 = vmatprep.subr.mxu0 %v878
        %1006 = vmatpush1.msra.mxu0 %v877
        %1007 = vmatprep.subr.mxu0 %v880
        %1008 = vmatpush1.msra.mxu0 %v879
        %1009 = vmatprep.subr.mxu0 %v882
        %1010 = vmatpush1.msra.mxu0 %v881
        %1011 = vmatprep.subr.mxu0 %v884
        %1012 = vmatpush1.msra.mxu0 %v883
        %1013 = vmatprep.subr.mxu0 %v886
        %1014 = vmatpush1.msra.mxu0 %v885
        %1015 = vmatprep.subr.mxu0 %v888
        %1016 = vmatpush1.msra.mxu0 %v887
        %1017 = vmatprep.subr.mxu0 %v890
        %1018 = vmatpush1.msra.mxu0 %v889
        %1019 = vmatprep.subr.mxu0 %v892
        %1020 = vmatpush1.msra.mxu0 %v891
        %1021 = vmatprep.subr.mxu0 %v894
        %1022 = vmatpush1.msra.mxu0 %v893
        %1023 = vmatprep.subr.mxu0 %v896
        %1024 = vmatpush1.msra.mxu0 %v895
        %1025 = vmatprep.subr.mxu0 %v898
        %1026 = vmatpush1.msra.mxu0 %v897
        %1027 = vmatprep.subr.mxu0 %v900
        %1028 = vmatpush1.msra.mxu0 %v899
        %1029 = vmatprep.subr.mxu0 %v902
        %1030 = vmatpush1.msra.mxu0 %v901
        %1031 = vmatprep.subr.mxu0 %v904
        %1032 = vmatpush1.msra.mxu0 %v903
        %1033 = vmatprep.subr.mxu0 %v906
        %1034 = vmatpush1.msra.mxu0 %v905
        %1035 = vmatprep.subr.mxu0 %v908
        %1036 = vmatpush1.msra.mxu0 %v907
        %1037 = vmatprep.subr.mxu0 %v910
        %1038 = vmatpush1.msra.mxu0 %v909
        %1039 = vmatprep.subr.mxu0 %v912
        %1040 = vmatpush1.msra.mxu0 %v911
        %1041 = vmatprep.mubr.f32.mxu0 %v834
        %1042 = vmatmul.mubr.f32.gmra.mrb[0].mxu0 %v833
        %v1043 = vpop.f32.mrb[0].mxu0
        %v1044 = vadd.f32 0.0, %v1043
        %v1045 = vpop.f32.mrb[0].mxu0
        %v1046 = vadd.f32 0.0, %v1045
        %1047 = vdwg.mxu0
        %1048 = vmatprep.subr.mxu0 %v914
        %1049 = vmatpush1.msra.mxu0 %v913
        %1050 = vmatprep.subr.mxu0 %v916
        %1051 = vmatpush1.msra.mxu0 %v915
        %1052 = vmatprep.subr.mxu0 %v918
        %1053 = vmatpush1.msra.mxu0 %v917
        %1054 = vmatprep.subr.mxu0 %v920
        %1055 = vmatpush1.msra.mxu0 %v919
        %1056 = vmatprep.subr.mxu0 %v922
        %1057 = vmatpush1.msra.mxu0 %v921
        %1058 = vmatprep.subr.mxu0 %v924
        %1059 = vmatpush1.msra.mxu0 %v923
        %1060 = vmatprep.subr.mxu0 %v926
        %1061 = vmatpush1.msra.mxu0 %v925
        %1062 = vmatprep.subr.mxu0 %v928
        %1063 = vmatpush1.msra.mxu0 %v927
        %1064 = vmatprep.subr.mxu0 %v930
        %1065 = vmatpush1.msra.mxu0 %v929
        %1066 = vmatprep.subr.mxu0 %v932
        %1067 = vmatpush1.msra.mxu0 %v931
        %1068 = vmatprep.subr.mxu0 %v934
        %1069 = vmatpush1.msra.mxu0 %v933
        %1070 = vmatprep.subr.mxu0 %v936
        %1071 = vmatpush1.msra.mxu0 %v935
        %1072 = vmatprep.subr.mxu0 %v938
        %1073 = vmatpush1.msra.mxu0 %v937
        %1074 = vmatprep.subr.mxu0 %v940
        %1075 = vmatpush1.msra.mxu0 %v939
        %1076 = vmatprep.subr.mxu0 %v942
        %1077 = vmatpush1.msra.mxu0 %v941
        %1078 = vmatprep.subr.mxu0 %v944
        %1079 = vmatpush1.msra.mxu0 %v943
        %1080 = vmatprep.subr.mxu0 %v946
        %1081 = vmatpush1.msra.mxu0 %v945
        %1082 = vmatprep.subr.mxu0 %v948
        %1083 = vmatpush1.msra.mxu0 %v947
        %1084 = vmatprep.subr.mxu0 %v950
        %1085 = vmatpush1.msra.mxu0 %v949
        %1086 = vmatprep.subr.mxu0 %v952
        %1087 = vmatpush1.msra.mxu0 %v951
        %1088 = vmatprep.subr.mxu0 %v954
        %1089 = vmatpush1.msra.mxu0 %v953
        %1090 = vmatprep.subr.mxu0 %v956
        %1091 = vmatpush1.msra.mxu0 %v955
        %1092 = vmatprep.subr.mxu0 %v958
        %1093 = vmatpush1.msra.mxu0 %v957
        %1094 = vmatprep.subr.mxu0 %v960
        %1095 = vmatpush1.msra.mxu0 %v959
        %1096 = vmatprep.subr.mxu0 %v962
        %1097 = vmatpush1.msra.mxu0 %v961
        %1098 = vmatprep.subr.mxu0 %v964
        %1099 = vmatpush1.msra.mxu0 %v963
        %1100 = vmatprep.subr.mxu0 %v966
        %1101 = vmatpush1.msra.mxu0 %v965
        %1102 = vmatprep.subr.mxu0 %v968
        %1103 = vmatpush1.msra.mxu0 %v967
        %1104 = vmatprep.subr.mxu0 %v970
        %1105 = vmatpush1.msra.mxu0 %v969
        %1106 = vmatprep.subr.mxu0 %v972
        %1107 = vmatpush1.msra.mxu0 %v971
        %1108 = vmatprep.subr.mxu0 %v974
        %1109 = vmatpush1.msra.mxu0 %v973
        %1110 = vmatprep.subr.mxu0 %v976
        %1111 = vmatpush1.msra.mxu0 %v975
        %1112 = vmatprep.mubr.f32.mxu0 %v848
        %1113 = vmatmul.mubr.f32.gmra.mrb[0].mxu0 %v841
        %v1114 = vpop.f32.mrb[0].mxu0
        %v1115 = vadd.f32 %v1044, %v1114
        %v1116 = vpop.f32.mrb[0].mxu0
        %v1117 = vadd.f32 %v1046, %v1116
        %1118 = vdwg.mxu0
        %v1119 = vxor.u32 %v1115, 2147483648
        %v1120 = vxor.u32 %v1117, 2147483648
        %v1121 = vmul.f32 %v1119, 1.442695
        %v1122 = vpow.pop %v1121
        %v1123 = vmul.f32 %v1120, 1.442695
        %v1124 = vpow.pop %v1123
        %v1125 = vadd.f32 %v1122, 1.0
        %v1126 = vadd.f32 %v1124, 1.0
        %v1127 = vrcp.pop %v1125
        %v1128 = vmul.f32 1.0, %v1127
        %v1129 = vrcp.pop %v1126
        %v1130 = vmul.f32 1.0, %v1129
        %v1131 = vlaneseq
        %v1132 = vshrl.u32 %v1131, 7
        %v1133 = vsub.s32 0, %v1132
        %v1134 = vrot.slane %v1128, %v1133
        %v1135 = vlaneseq
        %v1136 = vshrl.u32 %v1135, 7
        %v1137 = vsub.s32 0, %v1136
        %v1138 = vrot.slane %v1130, %v1137
        %v1139 = vmul.f32 %v816, %v1134
        %v1140 = vmul.f32 %v817, %v1138
        %v1141 = vld [vmem:[%s5] sm:$0xff]
        %v1142 = vld [vmem:[%s6] sm:$0xff]
        %1144 = vset.pattern.permute.xlu0 0
        %1145 = vperm.xlu0 %1144, %v1142
        %v1146 = vpop.permute.xlu0 %1145
        %v1149 = vsel %vm643, %v1141, 0
        %v1152 = vsel %vm627, %v1139, 0
        %v1155 = vsel %vm627, %v1140, 0
        %1157 = vmatprep.subr.mxu0 %v1155
        %1158 = vmatpush1.msra.mxu0 %v1152
        %1159 = vmatprep.subr.mxu0 0.0
        %1160 = vmatpush1.msra.mxu0 0.0
        %1161 = vmatprep.subr.mxu0 0.0
        %1162 = vmatpush1.msra.mxu0 0.0
        %1163 = vmatprep.subr.mxu0 0.0
        %1164 = vmatpush1.msra.mxu0 0.0
        %1165 = vmatprep.subr.mxu0 0.0
        %1166 = vmatpush1.msra.mxu0 0.0
        %1167 = vmatprep.subr.mxu0 0.0
        %1168 = vmatpush1.msra.mxu0 0.0
        %1169 = vmatprep.subr.mxu0 0.0
        %1170 = vmatpush1.msra.mxu0 0.0
        %1171 = vmatprep.subr.mxu0 0.0
        %1172 = vmatpush1.msra.mxu0 0.0
        %1173 = vmatprep.subr.mxu0 0.0
        %1174 = vmatpush1.msra.mxu0 0.0
        %1175 = vmatprep.subr.mxu0 0.0
        %1176 = vmatpush1.msra.mxu0 0.0
        %1177 = vmatprep.subr.mxu0 0.0
        %1178 = vmatpush1.msra.mxu0 0.0
        %1179 = vmatprep.subr.mxu0 0.0
        %1180 = vmatpush1.msra.mxu0 0.0
        %1181 = vmatprep.subr.mxu0 0.0
        %1182 = vmatpush1.msra.mxu0 0.0
        %1183 = vmatprep.subr.mxu0 0.0
        %1184 = vmatpush1.msra.mxu0 0.0
        %1185 = vmatprep.subr.mxu0 0.0
        %1186 = vmatpush1.msra.mxu0 0.0
        %1187 = vmatprep.subr.mxu0 0.0
        %1188 = vmatpush1.msra.mxu0 0.0
        %1189 = vmatprep.subr.mxu0 0.0
        %1190 = vmatpush1.msra.mxu0 0.0
        %1191 = vmatprep.subr.mxu0 0.0
        %1192 = vmatpush1.msra.mxu0 0.0
        %1193 = vmatprep.subr.mxu0 0.0
        %1194 = vmatpush1.msra.mxu0 0.0
        %1195 = vmatprep.subr.mxu0 0.0
        %1196 = vmatpush1.msra.mxu0 0.0
        %1197 = vmatprep.subr.mxu0 0.0
        %1198 = vmatpush1.msra.mxu0 0.0
        %1199 = vmatprep.subr.mxu0 0.0
        %1200 = vmatpush1.msra.mxu0 0.0
        %1201 = vmatprep.subr.mxu0 0.0
        %1202 = vmatpush1.msra.mxu0 0.0
        %1203 = vmatprep.subr.mxu0 0.0
        %1204 = vmatpush1.msra.mxu0 0.0
        %1205 = vmatprep.subr.mxu0 0.0
        %1206 = vmatpush1.msra.mxu0 0.0
        %1207 = vmatprep.subr.mxu0 0.0
        %1208 = vmatpush1.msra.mxu0 0.0
        %1209 = vmatprep.subr.mxu0 0.0
        %1210 = vmatpush1.msra.mxu0 0.0
        %1211 = vmatprep.subr.mxu0 0.0
        %1212 = vmatpush1.msra.mxu0 0.0
        %1213 = vmatprep.subr.mxu0 0.0
        %1214 = vmatpush1.msra.mxu0 0.0
        %1215 = vmatprep.subr.mxu0 0.0
        %1216 = vmatpush1.msra.mxu0 0.0
        %1217 = vmatprep.subr.mxu0 0.0
        %1218 = vmatpush1.msra.mxu0 0.0
        %1219 = vmatprep.subr.mxu0 0.0
        %1220 = vmatpush1.msra.mxu0 0.0
        %1221 = vmatprep.mubr.f32.mxu0 0.0
        %1222 = vmatmul.mubr.f32.gmra.mrb[0].mxu0 %v1149
        %v1223 = vpop.f32.mrb[0].mxu0
        %v1224 = vadd.f32 %v1146, %v1223
        %v1225 = vpop.f32.mrb[0].mxu0
        %v1226 = vadd.f32 %v1146, %v1225
        %1227 = vdwg.mxu0
        %v1228 = vmax.f32 %v1224, 0.0
        %v1229 = vmax.f32 %v1226, 0.0
        %v1230 = vld [vmem:[#allocation3] sm:$0xff]
        %v1231 = vld [vmem:[#allocation3 + $0x8] sm:$0xff]
        %v1232 = vld [vmem:[#allocation3 + $0x10] sm:$0xff]
        %v1233 = vld [vmem:[#allocation3 + $0x18] sm:$0xff]
        %1237 = vrot.lane.b32.xlu0 %v1229, 17
        %v1238 = vpop.permute.xlu0 %1237
        %1239 = vrot.lane.b32.xlu0 %v1231, 17
        %v1240 = vpop.permute.xlu0 %1239
        %1241 = vrot.lane.b32.xlu0 %v1233, 17
        %v1242 = vpop.permute.xlu0 %1241
        %1249 = vrot.lane.b32.xlu0 %v1228, 17
        %v1250 = vpop.permute.xlu0 %1249
        %1251 = vrot.lane.b32.xlu0 %v1230, 17
        %v1252 = vpop.permute.xlu0 %1251
        %1253 = vrot.lane.b32.xlu0 %v1232, 17
        %v1254 = vpop.permute.xlu0 %1253
        %vm1255 = vcmask 138240
        %v1256 = vsel %vm1255, %v1250, %v1238
        %v1257 = vsel %vm1255, %v1252, %v1240
        %v1258 = vsel %vm1255, %v1254, %v1242
        %v1265 = vsel %vm1255, %v1238, %v1250
        %v1266 = vsel %vm1255, %v1240, %v1252
        %v1267 = vsel %vm1255, %v1242, %v1254
        %v1268 = vld [vmem:[%s7] ss:$8 sm:$0x3]
        %v1270 = vlaneseq
        %v1271 = vshrl.u32 %v1270, 7
        %v1272 = vsub.s32 0, %v1271
        %v1273 = vrot.slane %v1268, %v1272
        %v1274 = vlaneseq
        %v1275 = vshrl.u32 %v1274, 7
        %v1276 = vsub.s32 1, %v1275
        %v1277 = vrot.slane %v1268, %v1276
        %v1280 = vmul.f32 %v1265, %v1273
        %v1281 = vmul.f32 %v1256, %v1277
        %v1282 = vmul.f32 %v1266, %v1273
        %v1283 = vmul.f32 %v1257, %v1277
        %v1284 = vmul.f32 %v1267, %v1273
        %v1285 = vmul.f32 %v1258, %v1277
        %1286 = vst [vmem:[#allocation2] sm:$0xff] %v1280
        %1287 = vst [vmem:[#allocation2 + $0x8] sm:$0xff] %v1281
        %1288 = vst [vmem:[#allocation2 + $0x10] sm:$0xff] %v1282
        %1289 = vst [vmem:[#allocation2 + $0x18] sm:$0xff] %v1283
        %1290 = vst [vmem:[#allocation2 + $0x20] sm:$0xff] %v1284
        %1291 = vst [vmem:[#allocation2 + $0x28] sm:$0xff] %v1285
        %1292 = vrot.lane.b32.xlu0 %v1229, 16
        %v1293 = vpop.permute.xlu0 %1292
        %1294 = vrot.lane.b32.xlu0 %v1231, 16
        %v1295 = vpop.permute.xlu0 %1294
        %1296 = vrot.lane.b32.xlu0 %v1233, 16
        %v1297 = vpop.permute.xlu0 %1296
        %1301 = vrot.lane.b32.xlu0 %v1228, 16
        %v1302 = vpop.permute.xlu0 %1301
        %1303 = vrot.lane.b32.xlu0 %v1230, 16
        %v1304 = vpop.permute.xlu0 %1303
        %1305 = vrot.lane.b32.xlu0 %v1232, 16
        %v1306 = vpop.permute.xlu0 %1305
        %vm1307 = vcmask 130048
        %v1308 = vsel %vm1307, %v1302, %v1293
        %v1309 = vsel %vm1307, %v1304, %v1295
        %v1310 = vsel %vm1307, %v1306, %v1297
        %v1317 = vsel %vm1307, %v1293, %v1302
        %v1318 = vsel %vm1307, %v1295, %v1304
        %v1319 = vsel %vm1307, %v1297, %v1306
        %s1320 = scalar_lea.vmem %s7, 1
        %v1321 = vld [vmem:[%s1320] ss:$8 sm:$0x3]
        %v1323 = vlaneseq
        %v1324 = vshrl.u32 %v1323, 7
        %v1325 = vsub.s32 0, %v1324
        %v1326 = vrot.slane %v1321, %v1325
        %v1327 = vlaneseq
        %v1328 = vshrl.u32 %v1327, 7
        %v1329 = vsub.s32 1, %v1328
        %v1330 = vrot.slane %v1321, %v1329
        %v1333 = vmul.f32 %v1317, %v1326
        %v1334 = vmul.f32 %v1308, %v1330
        %v1335 = vmul.f32 %v1318, %v1326
        %v1336 = vmul.f32 %v1309, %v1330
        %v1337 = vmul.f32 %v1319, %v1326
        %v1338 = vmul.f32 %v1310, %v1330
        %1339 = vst [vmem:[#allocation2 + $0x30] sm:$0xff] %v1333
        %1340 = vst [vmem:[#allocation2 + $0x38] sm:$0xff] %v1334
        %1341 = vst [vmem:[#allocation2 + $0x40] sm:$0xff] %v1335
        %1342 = vst [vmem:[#allocation2 + $0x48] sm:$0xff] %v1336
        %1343 = vst [vmem:[#allocation2 + $0x50] sm:$0xff] %v1337
        %1344 = vst [vmem:[#allocation2 + $0x58] sm:$0xff] %v1338
        %1345 = vrot.lane.b32.xlu0 %v1229, 15
        %v1346 = vpop.permute.xlu0 %1345
        %1347 = vrot.lane.b32.xlu0 %v1231, 15
        %v1348 = vpop.permute.xlu0 %1347
        %1349 = vrot.lane.b32.xlu0 %v1233, 15
        %v1350 = vpop.permute.xlu0 %1349
        %1354 = vrot.lane.b32.xlu0 %v1228, 15
        %v1355 = vpop.permute.xlu0 %1354
        %1356 = vrot.lane.b32.xlu0 %v1230, 15
        %v1357 = vpop.permute.xlu0 %1356
        %1358 = vrot.lane.b32.xlu0 %v1232, 15
        %v1359 = vpop.permute.xlu0 %1358
        %vm1360 = vcmask 121856
        %v1361 = vsel %vm1360, %v1355, %v1346
        %v1362 = vsel %vm1360, %v1357, %v1348
        %v1363 = vsel %vm1360, %v1359, %v1350
        %v1370 = vsel %vm1360, %v1346, %v1355
        %v1371 = vsel %vm1360, %v1348, %v1357
        %v1372 = vsel %vm1360, %v1350, %v1359
        %s1373 = scalar_lea.vmem %s7, 2
        %v1374 = vld [vmem:[%s1373] ss:$8 sm:$0x3]
        %v1376 = vlaneseq
        %v1377 = vshrl.u32 %v1376, 7
        %v1378 = vsub.s32 0, %v1377
        %v1379 = vrot.slane %v1374, %v1378
        %v1380 = vlaneseq
        %v1381 = vshrl.u32 %v1380, 7
        %v1382 = vsub.s32 1, %v1381
        %v1383 = vrot.slane %v1374, %v1382
        %v1386 = vmul.f32 %v1370, %v1379
        %v1387 = vmul.f32 %v1361, %v1383
        %v1388 = vmul.f32 %v1371, %v1379
        %v1389 = vmul.f32 %v1362, %v1383
        %v1390 = vmul.f32 %v1372, %v1379
        %v1391 = vmul.f32 %v1363, %v1383
        %1392 = vst [vmem:[#allocation2 + $0x60] sm:$0xff] %v1386
        %1393 = vst [vmem:[#allocation2 + $0x68] sm:$0xff] %v1387
        %1394 = vst [vmem:[#allocation2 + $0x70] sm:$0xff] %v1388
        %1395 = vst [vmem:[#allocation2 + $0x78] sm:$0xff] %v1389
        %1396 = vst [vmem:[#allocation2 + $0x80] sm:$0xff] %v1390
        %1397 = vst [vmem:[#allocation2 + $0x88] sm:$0xff] %v1391
        %1398 = vrot.lane.b32.xlu0 %v1229, 1
        %v1399 = vpop.permute.xlu0 %1398
        %1400 = vrot.lane.b32.xlu0 %v1231, 1
        %v1401 = vpop.permute.xlu0 %1400
        %1402 = vrot.lane.b32.xlu0 %v1233, 1
        %v1403 = vpop.permute.xlu0 %1402
        %1407 = vrot.lane.b32.xlu0 %v1228, 1
        %v1408 = vpop.permute.xlu0 %1407
        %1409 = vrot.lane.b32.xlu0 %v1230, 1
        %v1410 = vpop.permute.xlu0 %1409
        %1411 = vrot.lane.b32.xlu0 %v1232, 1
        %v1412 = vpop.permute.xlu0 %1411
        %v1413 = vsel %vm640, %v1408, %v1399
        %v1414 = vsel %vm640, %v1410, %v1401
        %v1415 = vsel %vm640, %v1412, %v1403
        %v1422 = vsel %vm640, %v1399, %v1408
        %v1423 = vsel %vm640, %v1401, %v1410
        %v1424 = vsel %vm640, %v1403, %v1412
        %s1425 = scalar_lea.vmem %s7, 3
        %v1426 = vld [vmem:[%s1425] ss:$8 sm:$0x3]
        %v1428 = vlaneseq
        %v1429 = vshrl.u32 %v1428, 7
        %v1430 = vsub.s32 0, %v1429
        %v1431 = vrot.slane %v1426, %v1430
        %v1432 = vlaneseq
        %v1433 = vshrl.u32 %v1432, 7
        %v1434 = vsub.s32 1, %v1433
        %v1435 = vrot.slane %v1426, %v1434
        %v1438 = vmul.f32 %v1422, %v1431
        %v1439 = vmul.f32 %v1413, %v1435
        %v1440 = vmul.f32 %v1423, %v1431
        %v1441 = vmul.f32 %v1414, %v1435
        %v1442 = vmul.f32 %v1424, %v1431
        %v1443 = vmul.f32 %v1415, %v1435
        %1444 = vst [vmem:[#allocation2 + $0x90] sm:$0xff] %v1438
        %1445 = vst [vmem:[#allocation2 + $0x98] sm:$0xff] %v1439
        %1446 = vst [vmem:[#allocation2 + $0xa0] sm:$0xff] %v1440
        %1447 = vst [vmem:[#allocation2 + $0xa8] sm:$0xff] %v1441
        %1448 = vst [vmem:[#allocation2 + $0xb0] sm:$0xff] %v1442
        %1449 = vst [vmem:[#allocation2 + $0xb8] sm:$0xff] %v1443
        %1450 = vst [vmem:[#allocation2 + $0xc0] sm:$0xff] %v1228
        %1451 = vst [vmem:[#allocation2 + $0xc8] sm:$0xff] %v1229
        %1452 = vst [vmem:[#allocation2 + $0xd0] sm:$0xff] %v1230
        %1453 = vst [vmem:[#allocation2 + $0xd8] sm:$0xff] %v1231
        %1454 = vst [vmem:[#allocation2 + $0xe0] sm:$0xff] %v1232
        %1455 = vst [vmem:[#allocation2 + $0xe8] sm:$0xff] %v1233
        %1456 = vrot.lane.b32.xlu0 %v1228, 127
        %v1457 = vpop.permute.xlu0 %1456
        %1458 = vrot.lane.b32.xlu0 %v1229, 127
        %v1459 = vpop.permute.xlu0 %1458
        %1460 = vrot.lane.b32.xlu0 %v1230, 127
        %v1461 = vpop.permute.xlu0 %1460
        %1462 = vrot.lane.b32.xlu0 %v1231, 127
        %v1463 = vpop.permute.xlu0 %1462
        %1464 = vrot.lane.b32.xlu0 %v1232, 127
        %v1465 = vpop.permute.xlu0 %1464
        %1466 = vrot.lane.b32.xlu0 %v1233, 127
        %v1467 = vpop.permute.xlu0 %1466
        %vm1468 = vcmask 1039360
        %v1469 = vsel %vm1468, %v1457, %v1459
        %v1470 = vsel %vm1468, %v1461, %v1463
        %v1471 = vsel %vm1468, %v1465, %v1467
        %v1481 = vsel %vm1468, %v1459, %v1457
        %v1482 = vsel %vm1468, %v1463, %v1461
        %v1483 = vsel %vm1468, %v1467, %v1465
        %s1484 = scalar_lea.vmem %s7, 5
        %v1485 = vld [vmem:[%s1484] ss:$8 sm:$0x3]
        %v1487 = vlaneseq
        %v1488 = vshrl.u32 %v1487, 7
        %v1489 = vsub.s32 0, %v1488
        %v1490 = vrot.slane %v1485, %v1489
        %v1491 = vlaneseq
        %v1492 = vshrl.u32 %v1491, 7
        %v1493 = vsub.s32 1, %v1492
        %v1494 = vrot.slane %v1485, %v1493
        %v1497 = vmul.f32 %v1469, %v1490
        %v1498 = vmul.f32 %v1481, %v1494
        %v1499 = vmul.f32 %v1470, %v1490
        %v1500 = vmul.f32 %v1482, %v1494
        %v1501 = vmul.f32 %v1471, %v1490
        %v1502 = vmul.f32 %v1483, %v1494
        %1503 = vst [vmem:[#allocation2 + $0xf0] sm:$0xff] %v1497
        %1504 = vst [vmem:[#allocation2 + $0xf8] sm:$0xff] %v1498
        %1505 = vst [vmem:[#allocation2 + $0x100] sm:$0xff] %v1499
        %1506 = vst [vmem:[#allocation2 + $0x108] sm:$0xff] %v1500
        %1507 = vst [vmem:[#allocation2 + $0x110] sm:$0xff] %v1501
        %1508 = vst [vmem:[#allocation2 + $0x118] sm:$0xff] %v1502
        %1509 = vrot.lane.b32.xlu0 %v1228, 113
        %v1510 = vpop.permute.xlu0 %1509
        %1511 = vrot.lane.b32.xlu0 %v1229, 113
        %v1512 = vpop.permute.xlu0 %1511
        %1513 = vrot.lane.b32.xlu0 %v1230, 113
        %v1514 = vpop.permute.xlu0 %1513
        %1515 = vrot.lane.b32.xlu0 %v1231, 113
        %v1516 = vpop.permute.xlu0 %1515
        %1517 = vrot.lane.b32.xlu0 %v1232, 113
        %v1518 = vpop.permute.xlu0 %1517
        %1519 = vrot.lane.b32.xlu0 %v1233, 113
        %v1520 = vpop.permute.xlu0 %1519
        %vm1521 = vcmask 924672
        %v1522 = vsel %vm1521, %v1510, %v1512
        %v1523 = vsel %vm1521, %v1514, %v1516
        %v1524 = vsel %vm1521, %v1518, %v1520
        %v1534 = vsel %vm1521, %v1512, %v1510
        %v1535 = vsel %vm1521, %v1516, %v1514
        %v1536 = vsel %vm1521, %v1520, %v1518
        %s1537 = scalar_lea.vmem %s7, 6
        %v1538 = vld [vmem:[%s1537] ss:$8 sm:$0x3]
        %v1540 = vlaneseq
        %v1541 = vshrl.u32 %v1540, 7
        %v1542 = vsub.s32 0, %v1541
        %v1543 = vrot.slane %v1538, %v1542
        %v1544 = vlaneseq
        %v1545 = vshrl.u32 %v1544, 7
        %v1546 = vsub.s32 1, %v1545
        %v1547 = vrot.slane %v1538, %v1546
        %v1550 = vmul.f32 %v1522, %v1543
        %v1551 = vmul.f32 %v1534, %v1547
        %v1552 = vmul.f32 %v1523, %v1543
        %v1553 = vmul.f32 %v1535, %v1547
        %v1554 = vmul.f32 %v1524, %v1543
        %v1555 = vmul.f32 %v1536, %v1547
        %1556 = vst [vmem:[#allocation2 + $0x120] sm:$0xff] %v1550
        %1557 = vst [vmem:[#allocation2 + $0x128] sm:$0xff] %v1551
        %1558 = vst [vmem:[#allocation2 + $0x130] sm:$0xff] %v1552
        %1559 = vst [vmem:[#allocation2 + $0x138] sm:$0xff] %v1553
        %1560 = vst [vmem:[#allocation2 + $0x140] sm:$0xff] %v1554
        %1561 = vst [vmem:[#allocation2 + $0x148] sm:$0xff] %v1555
        %1562 = vrot.lane.b32.xlu0 %v1228, 112
        %v1563 = vpop.permute.xlu0 %1562
        %1564 = vrot.lane.b32.xlu0 %v1229, 112
        %v1565 = vpop.permute.xlu0 %1564
        %1566 = vrot.lane.b32.xlu0 %v1230, 112
        %v1567 = vpop.permute.xlu0 %1566
        %1568 = vrot.lane.b32.xlu0 %v1231, 112
        %v1569 = vpop.permute.xlu0 %1568
        %1570 = vrot.lane.b32.xlu0 %v1232, 112
        %v1571 = vpop.permute.xlu0 %1570
        %1572 = vrot.lane.b32.xlu0 %v1233, 112
        %v1573 = vpop.permute.xlu0 %1572
        %vm1574 = vcmask 916480
        %v1575 = vsel %vm1574, %v1563, %v1565
        %v1576 = vsel %vm1574, %v1567, %v1569
        %v1577 = vsel %vm1574, %v1571, %v1573
        %v1587 = vsel %vm1574, %v1565, %v1563
        %v1588 = vsel %vm1574, %v1569, %v1567
        %v1589 = vsel %vm1574, %v1573, %v1571
        %s1590 = scalar_lea.vmem %s7, 7
        %v1591 = vld [vmem:[%s1590] ss:$8 sm:$0x3]
        %v1593 = vlaneseq
        %v1594 = vshrl.u32 %v1593, 7
        %v1595 = vsub.s32 0, %v1594
        %v1596 = vrot.slane %v1591, %v1595
        %v1597 = vlaneseq
        %v1598 = vshrl.u32 %v1597, 7
        %v1599 = vsub.s32 1, %v1598
        %v1600 = vrot.slane %v1591, %v1599
        %v1603 = vmul.f32 %v1575, %v1596
        %v1604 = vmul.f32 %v1587, %v1600
        %v1605 = vmul.f32 %v1576, %v1596
        %v1606 = vmul.f32 %v1588, %v1600
        %v1607 = vmul.f32 %v1577, %v1596
        %v1608 = vmul.f32 %v1589, %v1600
        %1609 = vst [vmem:[#allocation2 + $0x150] sm:$0xff] %v1603
        %1610 = vst [vmem:[#allocation2 + $0x158] sm:$0xff] %v1604
        %1611 = vst [vmem:[#allocation2 + $0x160] sm:$0xff] %v1605
        %1612 = vst [vmem:[#allocation2 + $0x168] sm:$0xff] %v1606
        %1613 = vst [vmem:[#allocation2 + $0x170] sm:$0xff] %v1607
        %1614 = vst [vmem:[#allocation2 + $0x178] sm:$0xff] %v1608
        %1615 = vrot.lane.b32.xlu0 %v1228, 111
        %v1616 = vpop.permute.xlu0 %1615
        %1617 = vrot.lane.b32.xlu0 %v1229, 111
        %v1618 = vpop.permute.xlu0 %1617
        %1619 = vrot.lane.b32.xlu0 %v1230, 111
        %v1620 = vpop.permute.xlu0 %1619
        %1621 = vrot.lane.b32.xlu0 %v1231, 111
        %v1622 = vpop.permute.xlu0 %1621
        %1623 = vrot.lane.b32.xlu0 %v1232, 111
        %v1624 = vpop.permute.xlu0 %1623
        %1625 = vrot.lane.b32.xlu0 %v1233, 111
        %v1626 = vpop.permute.xlu0 %1625
        %vm1627 = vcmask 908288
        %v1628 = vsel %vm1627, %v1616, %v1618
        %v1629 = vsel %vm1627, %v1620, %v1622
        %v1630 = vsel %vm1627, %v1624, %v1626
        %v1640 = vsel %vm1627, %v1618, %v1616
        %v1641 = vsel %vm1627, %v1622, %v1620
        %v1642 = vsel %vm1627, %v1626, %v1624
        %s1643 = scalar_lea.vmem %s7, 16
        %v1644 = vld [vmem:[%s1643] ss:$8 sm:$0x3]
        %v1646 = vlaneseq
        %v1647 = vshrl.u32 %v1646, 7
        %v1648 = vsub.s32 0, %v1647
        %v1649 = vrot.slane %v1644, %v1648
        %v1650 = vlaneseq
        %v1651 = vshrl.u32 %v1650, 7
        %v1652 = vsub.s32 1, %v1651
        %v1653 = vrot.slane %v1644, %v1652
        %v1656 = vmul.f32 %v1628, %v1649
        %v1657 = vmul.f32 %v1640, %v1653
        %v1658 = vmul.f32 %v1629, %v1649
        %v1659 = vmul.f32 %v1641, %v1653
        %v1660 = vmul.f32 %v1630, %v1649
        %v1661 = vmul.f32 %v1642, %v1653
        %1662 = vst [vmem:[#allocation2 + $0x180] sm:$0xff] %v1656
        %1663 = vst [vmem:[#allocation2 + $0x188] sm:$0xff] %v1657
        %1664 = vst [vmem:[#allocation2 + $0x190] sm:$0xff] %v1658
        %1665 = vst [vmem:[#allocation2 + $0x198] sm:$0xff] %v1659
        %1666 = vst [vmem:[#allocation2 + $0x1a0] sm:$0xff] %v1660
        %1667 = vst [vmem:[#allocation2 + $0x1a8] sm:$0xff] %v1661
        %v1668 = vld [vmem:[#allocation14] sm:$0xff]
        %v1669 = vld [vmem:[#allocation14 + $0x8] sm:$0xff]
        %v1670 = vld [vmem:[#allocation14 + $0x10] sm:$0xff]
        %v1671 = vld [vmem:[#allocation14 + $0x18] sm:$0xff]
        %v1672 = vld [vmem:[#allocation14 + $0x20] sm:$0xff]
        %v1673 = vld [vmem:[#allocation14 + $0x28] sm:$0xff]
        %v1674 = vld [vmem:[#allocation14 + $0x30] sm:$0xff]
        %v1675 = vld [vmem:[#allocation14 + $0x38] sm:$0xff]
        %v1676 = vld [vmem:[#allocation14 + $0x40] sm:$0xff]
        %v1677 = vld [vmem:[#allocation14 + $0x48] sm:$0xff]
        %v1678 = vld [vmem:[#allocation14 + $0x50] sm:$0xff]
        %v1679 = vld [vmem:[#allocation14 + $0x58] sm:$0xff]
        %v1680 = vld [vmem:[#allocation14 + $0x60] sm:$0xff]
        %v1681 = vld [vmem:[#allocation14 + $0x68] sm:$0xff]
        %v1682 = vld [vmem:[#allocation14 + $0x70] sm:$0xff]
        %v1683 = vld [vmem:[#allocation14 + $0x78] sm:$0xff]
        %v1684 = vld [vmem:[#allocation2] sm:$0xff]
        %v1685 = vld [vmem:[#allocation2 + $0x8] sm:$0xff]
        %v1686 = vld [vmem:[#allocation2 + $0x10] sm:$0xff]
        %v1687 = vld [vmem:[#allocation2 + $0x18] sm:$0xff]
        %v1688 = vld [vmem:[#allocation2 + $0x20] sm:$0xff]
        %v1689 = vld [vmem:[#allocation2 + $0x28] sm:$0xff]
        %v1690 = vld [vmem:[#allocation2 + $0x30] sm:$0xff]
        %v1691 = vld [vmem:[#allocation2 + $0x38] sm:$0xff]
        %v1692 = vld [vmem:[#allocation2 + $0x40] sm:$0xff]
        %v1693 = vld [vmem:[#allocation2 + $0x48] sm:$0xff]
        %v1694 = vld [vmem:[#allocation2 + $0x50] sm:$0xff]
        %v1695 = vld [vmem:[#allocation2 + $0x58] sm:$0xff]
        %v1696 = vld [vmem:[#allocation2 + $0x60] sm:$0xff]
        %v1697 = vld [vmem:[#allocation2 + $0x68] sm:$0xff]
        %v1698 = vld [vmem:[#allocation2 + $0x70] sm:$0xff]
        %v1699 = vld [vmem:[#allocation2 + $0x78] sm:$0xff]
        %v1700 = vld [vmem:[#allocation2 + $0x80] sm:$0xff]
        %v1701 = vld [vmem:[#allocation2 + $0x88] sm:$0xff]
        %v1702 = vld [vmem:[#allocation2 + $0x90] sm:$0xff]
        %v1703 = vld [vmem:[#allocation2 + $0x98] sm:$0xff]
        %v1704 = vld [vmem:[#allocation2 + $0xa0] sm:$0xff]
        %v1705 = vld [vmem:[#allocation2 + $0xa8] sm:$0xff]
        %v1706 = vld [vmem:[#allocation2 + $0xb0] sm:$0xff]
        %v1707 = vld [vmem:[#allocation2 + $0xb8] sm:$0xff]
        %v1708 = vld [vmem:[#allocation2 + $0xc0] sm:$0xff]
        %v1709 = vld [vmem:[#allocation2 + $0xc8] sm:$0xff]
        %v1710 = vld [vmem:[#allocation2 + $0xd0] sm:$0xff]
        %v1711 = vld [vmem:[#allocation2 + $0xd8] sm:$0xff]
        %v1712 = vld [vmem:[#allocation2 + $0xe0] sm:$0xff]
        %v1713 = vld [vmem:[#allocation2 + $0xe8] sm:$0xff]
        %v1714 = vld [vmem:[#allocation2 + $0xf0] sm:$0xff]
        %v1715 = vld [vmem:[#allocation2 + $0xf8] sm:$0xff]
        %v1716 = vld [vmem:[#allocation2 + $0x100] sm:$0xff]
        %v1717 = vld [vmem:[#allocation2 + $0x108] sm:$0xff]
        %v1718 = vld [vmem:[#allocation2 + $0x110] sm:$0xff]
        %v1719 = vld [vmem:[#allocation2 + $0x118] sm:$0xff]
        %v1720 = vld [vmem:[#allocation2 + $0x120] sm:$0xff]
        %v1721 = vld [vmem:[#allocation2 + $0x128] sm:$0xff]
        %v1722 = vld [vmem:[#allocation2 + $0x130] sm:$0xff]
        %v1723 = vld [vmem:[#allocation2 + $0x138] sm:$0xff]
        %v1724 = vld [vmem:[#allocation2 + $0x140] sm:$0xff]
        %v1725 = vld [vmem:[#allocation2 + $0x148] sm:$0xff]
        %v1726 = vld [vmem:[#allocation2 + $0x150] sm:$0xff]
        %v1727 = vld [vmem:[#allocation2 + $0x158] sm:$0xff]
        %v1728 = vld [vmem:[#allocation2 + $0x160] sm:$0xff]
        %v1729 = vld [vmem:[#allocation2 + $0x168] sm:$0xff]
        %v1730 = vld [vmem:[#allocation2 + $0x170] sm:$0xff]
        %v1731 = vld [vmem:[#allocation2 + $0x178] sm:$0xff]
        %v1732 = vld [vmem:[#allocation2 + $0x180] sm:$0xff]
        %v1733 = vld [vmem:[#allocation2 + $0x188] sm:$0xff]
        %v1734 = vld [vmem:[#allocation2 + $0x190] sm:$0xff]
        %v1735 = vld [vmem:[#allocation2 + $0x198] sm:$0xff]
        %v1736 = vld [vmem:[#allocation2 + $0x1a0] sm:$0xff]
        %v1737 = vld [vmem:[#allocation2 + $0x1a8] sm:$0xff]
        %v1738 = vld [vmem:[%s9] sm:$0xff]
        %v1739 = vld [vmem:[%s9 + $0x8] sm:$0xff]
        %v1740 = vld [vmem:[%s9 + $0x10] sm:$0xff]
        %v1741 = vld [vmem:[%s9 + $0x18] sm:$0xff]
        %v1742 = vld [vmem:[%s9 + $0x20] sm:$0xff]
        %v1743 = vld [vmem:[%s9 + $0x28] sm:$0xff]
        %v1744 = vld [vmem:[%s9 + $0x30] sm:$0xff]
        %v1745 = vld [vmem:[%s9 + $0x38] sm:$0xff]
        %1747 = vset.pattern.permute.xlu0 0
        %1748 = vperm.xlu0 %1747, %v1738
        %v1749 = vpop.permute.xlu0 %1748
        %1752 = vset.pattern.permute.xlu0 0
        %1753 = vperm.xlu0 %1752, %v1739
        %v1754 = vpop.permute.xlu0 %1753
        %1757 = vset.pattern.permute.xlu0 0
        %1758 = vperm.xlu0 %1757, %v1740
        %v1759 = vpop.permute.xlu0 %1758
        %1762 = vset.pattern.permute.xlu0 0
        %1763 = vperm.xlu0 %1762, %v1741
        %v1764 = vpop.permute.xlu0 %1763
        %1767 = vset.pattern.permute.xlu0 0
        %1768 = vperm.xlu0 %1767, %v1742
        %v1769 = vpop.permute.xlu0 %1768
        %1772 = vset.pattern.permute.xlu0 0
        %1773 = vperm.xlu0 %1772, %v1743
        %v1774 = vpop.permute.xlu0 %1773
        %1777 = vset.pattern.permute.xlu0 0
        %1778 = vperm.xlu0 %1777, %v1744
        %v1779 = vpop.permute.xlu0 %1778
        %1782 = vset.pattern.permute.xlu0 0
        %1783 = vperm.xlu0 %1782, %v1745
        %v1784 = vpop.permute.xlu0 %1783
        %vm1786 = vcmask 719872
        %v1788 = vsel %vm1786, %v1669, 0
        %v1791 = vsel %vm1786, %v1671, 0
        %v1794 = vsel %vm1786, %v1673, 0
        %v1797 = vsel %vm1786, %v1675, 0
        %v1800 = vsel %vm1786, %v1677, 0
        %v1803 = vsel %vm1786, %v1679, 0
        %v1806 = vsel %vm1786, %v1681, 0
        %v1809 = vsel %vm1786, %v1683, 0
        %1811 = vmatprep.subr.mxu0 %v1685
        %1812 = vmatpush1.msra.mxu0 %v1684
        %1813 = vmatprep.subr.mxu0 %v1687
        %1814 = vmatpush1.msra.mxu0 %v1686
        %1815 = vmatprep.subr.mxu0 %v1689
        %1816 = vmatpush1.msra.mxu0 %v1688
        %1817 = vmatprep.subr.mxu0 %v1691
        %1818 = vmatpush1.msra.mxu0 %v1690
        %1819 = vmatprep.subr.mxu0 %v1693
        %1820 = vmatpush1.msra.mxu0 %v1692
        %1821 = vmatprep.subr.mxu0 %v1695
        %1822 = vmatpush1.msra.mxu0 %v1694
        %1823 = vmatprep.subr.mxu0 %v1697
        %1824 = vmatpush1.msra.mxu0 %v1696
        %1825 = vmatprep.subr.mxu0 %v1699
        %1826 = vmatpush1.msra.mxu0 %v1698
        %1827 = vmatprep.subr.mxu0 %v1701
        %1828 = vmatpush1.msra.mxu0 %v1700
        %1829 = vmatprep.subr.mxu0 %v1703
        %1830 = vmatpush1.msra.mxu0 %v1702
        %1831 = vmatprep.subr.mxu0 %v1705
        %1832 = vmatpush1.msra.mxu0 %v1704
        %1833 = vmatprep.subr.mxu0 %v1707
        %1834 = vmatpush1.msra.mxu0 %v1706
        %1835 = vmatprep.subr.mxu0 %v1709
        %1836 = vmatpush1.msra.mxu0 %v1708
        %1837 = vmatprep.subr.mxu0 %v1711
        %1838 = vmatpush1.msra.mxu0 %v1710
        %1839 = vmatprep.subr.mxu0 %v1713
        %1840 = vmatpush1.msra.mxu0 %v1712
        %1841 = vmatprep.subr.mxu0 %v1715
        %1842 = vmatpush1.msra.mxu0 %v1714
        %1843 = vmatprep.subr.mxu0 %v1717
        %1844 = vmatpush1.msra.mxu0 %v1716
        %1845 = vmatprep.subr.mxu0 %v1719
        %1846 = vmatpush1.msra.mxu0 %v1718
        %1847 = vmatprep.subr.mxu0 %v1721
        %1848 = vmatpush1.msra.mxu0 %v1720
        %1849 = vmatprep.subr.mxu0 %v1723
        %1850 = vmatpush1.msra.mxu0 %v1722
        %1851 = vmatprep.subr.mxu0 %v1725
        %1852 = vmatpush1.msra.mxu0 %v1724
        %1853 = vmatprep.subr.mxu0 %v1727
        %1854 = vmatpush1.msra.mxu0 %v1726
        %1855 = vmatprep.subr.mxu0 %v1729
        %1856 = vmatpush1.msra.mxu0 %v1728
        %1857 = vmatprep.subr.mxu0 %v1731
        %1858 = vmatpush1.msra.mxu0 %v1730
        %1859 = vmatprep.subr.mxu0 %v1733
        %1860 = vmatpush1.msra.mxu0 %v1732
        %1861 = vmatprep.subr.mxu0 %v1735
        %1862 = vmatpush1.msra.mxu0 %v1734
        %1863 = vmatprep.subr.mxu0 %v1737
        %1864 = vmatpush1.msra.mxu0 %v1736
        %1865 = vmatprep.subr.mxu0 0.0
        %1866 = vmatpush1.msra.mxu0 0.0
        %1867 = vmatprep.subr.mxu0 0.0
        %1868 = vmatpush1.msra.mxu0 0.0
        %1869 = vmatprep.subr.mxu0 0.0
        %1870 = vmatpush1.msra.mxu0 0.0
        %1871 = vmatprep.subr.mxu0 0.0
        %1872 = vmatpush1.msra.mxu0 0.0
        %1873 = vmatprep.subr.mxu0 0.0
        %1874 = vmatpush1.msra.mxu0 0.0
        %1875 = vmatprep.mubr.f32.mxu0 %v1788
        %1876 = vmatmul.mubr.f32.gmra.mrb[0].mxu0 %v1668
        %v1877 = vpop.f32.mrb[0].mxu0
        %v1878 = vadd.f32 %v1749, %v1877
        %v1879 = vpop.f32.mrb[0].mxu0
        %v1880 = vadd.f32 %v1749, %v1879
        %1881 = vmatprep.mubr.f32.mxu0 %v1791
        %1882 = vmatmul.mubr.f32.gmra.mrb[0].mxu0 %v1670
        %v1883 = vpop.f32.mrb[0].mxu0
        %v1884 = vadd.f32 %v1754, %v1883
        %v1885 = vpop.f32.mrb[0].mxu0
        %v1886 = vadd.f32 %v1754, %v1885
        %1887 = vmatprep.mubr.f32.mxu0 %v1794
        %1888 = vmatmul.mubr.f32.gmra.mrb[0].mxu0 %v1672
        %v1889 = vpop.f32.mrb[0].mxu0
        %v1890 = vadd.f32 %v1759, %v1889
        %v1891 = vpop.f32.mrb[0].mxu0
        %v1892 = vadd.f32 %v1759, %v1891
        %1893 = vmatprep.mubr.f32.mxu0 %v1797
        %1894 = vmatmul.mubr.f32.gmra.mrb[0].mxu0 %v1674
        %v1895 = vpop.f32.mrb[0].mxu0
        %v1896 = vadd.f32 %v1764, %v1895
        %v1897 = vpop.f32.mrb[0].mxu0
        %v1898 = vadd.f32 %v1764, %v1897
        %1899 = vmatprep.mubr.f32.mxu0 %v1800
        %1900 = vmatmul.mubr.f32.gmra.mrb[0].mxu0 %v1676
        %v1901 = vpop.f32.mrb[0].mxu0
        %v1902 = vadd.f32 %v1769, %v1901
        %v1903 = vpop.f32.mrb[0].mxu0
        %v1904 = vadd.f32 %v1769, %v1903
        %1905 = vmatprep.mubr.f32.mxu0 %v1803
        %1906 = vmatmul.mubr.f32.gmra.mrb[0].mxu0 %v1678
        %v1907 = vpop.f32.mrb[0].mxu0
        %v1908 = vadd.f32 %v1774, %v1907
        %v1909 = vpop.f32.mrb[0].mxu0
        %v1910 = vadd.f32 %v1774, %v1909
        %1911 = vmatprep.mubr.f32.mxu0 %v1806
        %1912 = vmatmul.mubr.f32.gmra.mrb[0].mxu0 %v1680
        %v1913 = vpop.f32.mrb[0].mxu0
        %v1914 = vadd.f32 %v1779, %v1913
        %v1915 = vpop.f32.mrb[0].mxu0
        %v1916 = vadd.f32 %v1779, %v1915
        %1917 = vmatprep.mubr.f32.mxu0 %v1809
        %1918 = vmatmul.mubr.f32.gmra.mrb[0].mxu0 %v1682
        %v1919 = vpop.f32.mrb[0].mxu0
        %v1920 = vadd.f32 %v1784, %v1919
        %v1921 = vpop.f32.mrb[0].mxu0
        %v1922 = vadd.f32 %v1784, %v1921
        %1923 = vdwg.mxu0
        %v1924 = vxor.u32 %v1878, 2147483648
        %v1925 = vxor.u32 %v1880, 2147483648
        %v1926 = vxor.u32 %v1884, 2147483648
        %v1927 = vxor.u32 %v1886, 2147483648
        %v1928 = vmul.f32 %v1924, 1.442695
        %v1929 = vpow.pop %v1928
        %v1930 = vmul.f32 %v1925, 1.442695
        %v1931 = vpow.pop %v1930
        %v1932 = vmul.f32 %v1926, 1.442695
        %v1933 = vpow.pop %v1932
        %v1934 = vmul.f32 %v1927, 1.442695
        %v1935 = vpow.pop %v1934
        %v1936 = vadd.f32 %v1929, 1.0
        %v1937 = vadd.f32 %v1931, 1.0
        %v1938 = vadd.f32 %v1933, 1.0
        %v1939 = vadd.f32 %v1935, 1.0
        %v1940 = vrcp.pop %v1936
        %v1941 = vmul.f32 1.0, %v1940
        %v1942 = vrcp.pop %v1937
        %v1943 = vmul.f32 1.0, %v1942
        %v1944 = vrcp.pop %v1938
        %v1945 = vmul.f32 1.0, %v1944
        %v1946 = vrcp.pop %v1939
        %v1947 = vmul.f32 1.0, %v1946
        %v1948 = vxor.u32 %v1890, 2147483648
        %v1949 = vxor.u32 %v1892, 2147483648
        %v1950 = vxor.u32 %v1896, 2147483648
        %v1951 = vxor.u32 %v1898, 2147483648
        %v1952 = vmul.f32 %v1948, 1.442695
        %v1953 = vpow.pop %v1952
        %v1954 = vmul.f32 %v1949, 1.442695
        %v1955 = vpow.pop %v1954
        %v1956 = vmul.f32 %v1950, 1.442695
        %v1957 = vpow.pop %v1956
        %v1958 = vmul.f32 %v1951, 1.442695
        %v1959 = vpow.pop %v1958
        %v1960 = vadd.f32 %v1953, 1.0
        %v1961 = vadd.f32 %v1955, 1.0
        %v1962 = vadd.f32 %v1957, 1.0
        %v1963 = vadd.f32 %v1959, 1.0
        %v1964 = vrcp.pop %v1960
        %v1965 = vmul.f32 1.0, %v1964
        %v1966 = vrcp.pop %v1961
        %v1967 = vmul.f32 1.0, %v1966
        %v1968 = vrcp.pop %v1962
        %v1969 = vmul.f32 1.0, %v1968
        %v1970 = vrcp.pop %v1963
        %v1971 = vmul.f32 1.0, %v1970
        %v1972 = vxor.u32 %v1902, 2147483648
        %v1973 = vxor.u32 %v1904, 2147483648
        %v1974 = vxor.u32 %v1908, 2147483648
        %v1975 = vxor.u32 %v1910, 2147483648
        %v1976 = vmul.f32 %v1972, 1.442695
        %v1977 = vpow.pop %v1976
        %v1978 = vmul.f32 %v1973, 1.442695
        %v1979 = vpow.pop %v1978
        %v1980 = vmul.f32 %v1974, 1.442695
        %v1981 = vpow.pop %v1980
        %v1982 = vmul.f32 %v1975, 1.442695
        %v1983 = vpow.pop %v1982
        %v1984 = vadd.f32 %v1977, 1.0
        %v1985 = vadd.f32 %v1979, 1.0
        %v1986 = vadd.f32 %v1981, 1.0
        %v1987 = vadd.f32 %v1983, 1.0
        %v1988 = vrcp.pop %v1984
        %v1989 = vmul.f32 1.0, %v1988
        %v1990 = vrcp.pop %v1985
        %v1991 = vmul.f32 1.0, %v1990
        %v1992 = vrcp.pop %v1986
        %v1993 = vmul.f32 1.0, %v1992
        %v1994 = vrcp.pop %v1987
        %v1995 = vmul.f32 1.0, %v1994
        %v1996 = vtanh.pop %v1914
        %v1997 = vtanh.pop %v1916
        %v1998 = vtanh.pop %v1920
        %v1999 = vtanh.pop %v1922
        %v2000 = vld [vmem:[#allocation4] sm:$0xff]
        %v2001 = vld [vmem:[#allocation4 + $0x8] sm:$0xff]
        %v2002 = vld [vmem:[#allocation4 + $0x10] sm:$0xff]
        %v2003 = vld [vmem:[#allocation4 + $0x18] sm:$0xff]
        %v2004 = vmul.f32 %v1965, %v2000
        %v2005 = vmul.f32 %v1967, %v2001
        %v2006 = vmul.f32 %v1969, %v2002
        %v2007 = vmul.f32 %v1971, %v2003
        %v2008 = vmul.f32 %v1941, %v1996
        %v2009 = vmul.f32 %v1943, %v1997
        %v2010 = vmul.f32 %v1945, %v1998
        %v2011 = vmul.f32 %v1947, %v1999
        %v2012 = vadd.f32 %v2004, %v2008
        %v2013 = vadd.f32 %v2005, %v2009
        %v2014 = vadd.f32 %v2006, %v2010
        %v2015 = vadd.f32 %v2007, %v2011
        %v2016 = vtanh.pop %v2012
        %v2017 = vtanh.pop %v2013
        %v2018 = vtanh.pop %v2014
        %v2019 = vtanh.pop %v2015
        %v2020 = vmul.f32 %v1989, %v2016
        %v2021 = vmul.f32 %v1991, %v2017
        %v2022 = vmul.f32 %v1993, %v2018
        %v2023 = vmul.f32 %v1995, %v2019
        %2024 = vst [vmem:[#allocation4] sm:$0xff] %v2012
        %2025 = vst [vmem:[#allocation4 + $0x8] sm:$0xff] %v2013
        %2026 = vst [vmem:[#allocation4 + $0x10] sm:$0xff] %v2014
        %2027 = vst [vmem:[#allocation4 + $0x18] sm:$0xff] %v2015
        %2028 = vst [vmem:[#allocation3] sm:$0xff] %v2020
        %2029 = vst [vmem:[#allocation3 + $0x8] sm:$0xff] %v2021
        %2030 = vst [vmem:[#allocation3 + $0x10] sm:$0xff] %v2022
        %2031 = vst [vmem:[#allocation3 + $0x18] sm:$0xff] %v2023
        %v2032 = vld [vmem:[#allocation5] sm:$0xff]
        %v2033 = vld [vmem:[#allocation5 + $0x8] sm:$0xff]
        %v2034 = vld [vmem:[#allocation5 + $0x10] sm:$0xff]
        %v2035 = vld [vmem:[#allocation5 + $0x18] sm:$0xff]
        %2040 = vrot.lane.b32.xlu0 %v2021, 17
        %v2041 = vpop.permute.xlu0 %2040
        %2042 = vrot.lane.b32.xlu0 %v2023, 17
        %v2043 = vpop.permute.xlu0 %2042
        %2044 = vrot.lane.b32.xlu0 %v2033, 17
        %v2045 = vpop.permute.xlu0 %2044
        %2046 = vrot.lane.b32.xlu0 %v2035, 17
        %v2047 = vpop.permute.xlu0 %2046
        %2056 = vrot.lane.b32.xlu0 %v2020, 17
        %v2057 = vpop.permute.xlu0 %2056
        %2058 = vrot.lane.b32.xlu0 %v2022, 17
        %v2059 = vpop.permute.xlu0 %2058
        %2060 = vrot.lane.b32.xlu0 %v2032, 17
        %v2061 = vpop.permute.xlu0 %2060
        %2062 = vrot.lane.b32.xlu0 %v2034, 17
        %v2063 = vpop.permute.xlu0 %2062
        %v2064 = vsel %vm1255, %v2057, %v2041
        %v2065 = vsel %vm1255, %v2059, %v2043
        %v2066 = vsel %vm1255, %v2061, %v2045
        %v2067 = vsel %vm1255, %v2063, %v2047
        %v2076 = vsel %vm1255, %v2041, %v2057
        %v2077 = vsel %vm1255, %v2043, %v2059
        %v2078 = vsel %vm1255, %v2045, %v2061
        %v2079 = vsel %vm1255, %v2047, %v2063
        %v2080 = vld [vmem:[%s7] ss:$8 sm:$0x3]
        %v2082 = vlaneseq
        %v2083 = vshrl.u32 %v2082, 7
        %v2084 = vsub.s32 0, %v2083
        %v2085 = vrot.slane %v2080, %v2084
        %v2086 = vlaneseq
        %v2087 = vshrl.u32 %v2086, 7
        %v2088 = vsub.s32 1, %v2087
        %v2089 = vrot.slane %v2080, %v2088
        %v2092 = vmul.f32 %v2076, %v2085
        %v2093 = vmul.f32 %v2064, %v2089
        %v2094 = vmul.f32 %v2077, %v2085
        %v2095 = vmul.f32 %v2065, %v2089
        %v2096 = vmul.f32 %v2078, %v2085
        %v2097 = vmul.f32 %v2066, %v2089
        %v2098 = vmul.f32 %v2079, %v2085
        %v2099 = vmul.f32 %v2067, %v2089
        %2100 = vst [vmem:[#allocation2] sm:$0xff] %v2092
        %2101 = vst [vmem:[#allocation2 + $0x8] sm:$0xff] %v2093
        %2102 = vst [vmem:[#allocation2 + $0x10] sm:$0xff] %v2094
        %2103 = vst [vmem:[#allocation2 + $0x18] sm:$0xff] %v2095
        %2104 = vst [vmem:[#allocation2 + $0x20] sm:$0xff] %v2096
        %2105 = vst [vmem:[#allocation2 + $0x28] sm:$0xff] %v2097
        %2106 = vst [vmem:[#allocation2 + $0x30] sm:$0xff] %v2098
        %2107 = vst [vmem:[#allocation2 + $0x38] sm:$0xff] %v2099
        %2108 = vrot.lane.b32.xlu0 %v2021, 16
        %v2109 = vpop.permute.xlu0 %2108
        %2110 = vrot.lane.b32.xlu0 %v2023, 16
        %v2111 = vpop.permute.xlu0 %2110
        %2112 = vrot.lane.b32.xlu0 %v2033, 16
        %v2113 = vpop.permute.xlu0 %2112
        %2114 = vrot.lane.b32.xlu0 %v2035, 16
        %v2115 = vpop.permute.xlu0 %2114
        %2120 = vrot.lane.b32.xlu0 %v2020, 16
        %v2121 = vpop.permute.xlu0 %2120
        %2122 = vrot.lane.b32.xlu0 %v2022, 16
        %v2123 = vpop.permute.xlu0 %2122
        %2124 = vrot.lane.b32.xlu0 %v2032, 16
        %v2125 = vpop.permute.xlu0 %2124
        %2126 = vrot.lane.b32.xlu0 %v2034, 16
        %v2127 = vpop.permute.xlu0 %2126
        %v2128 = vsel %vm1307, %v2121, %v2109
        %v2129 = vsel %vm1307, %v2123, %v2111
        %v2130 = vsel %vm1307, %v2125, %v2113
        %v2131 = vsel %vm1307, %v2127, %v2115
        %v2140 = vsel %vm1307, %v2109, %v2121
        %v2141 = vsel %vm1307, %v2111, %v2123
        %v2142 = vsel %vm1307, %v2113, %v2125
        %v2143 = vsel %vm1307, %v2115, %v2127
        %v2144 = vld [vmem:[%s1320] ss:$8 sm:$0x3]
        %v2146 = vlaneseq
        %v2147 = vshrl.u32 %v2146, 7
        %v2148 = vsub.s32 0, %v2147
        %v2149 = vrot.slane %v2144, %v2148
        %v2150 = vlaneseq
        %v2151 = vshrl.u32 %v2150, 7
        %v2152 = vsub.s32 1, %v2151
        %v2153 = vrot.slane %v2144, %v2152
        %v2156 = vmul.f32 %v2140, %v2149
        %v2157 = vmul.f32 %v2128, %v2153
        %v2158 = vmul.f32 %v2141, %v2149
        %v2159 = vmul.f32 %v2129, %v2153
        %v2160 = vmul.f32 %v2142, %v2149
        %v2161 = vmul.f32 %v2130, %v2153
        %v2162 = vmul.f32 %v2143, %v2149
        %v2163 = vmul.f32 %v2131, %v2153
        %2164 = vst [vmem:[#allocation2 + $0x40] sm:$0xff] %v2156
        %2165 = vst [vmem:[#allocation2 + $0x48] sm:$0xff] %v2157
        %2166 = vst [vmem:[#allocation2 + $0x50] sm:$0xff] %v2158
        %2167 = vst [vmem:[#allocation2 + $0x58] sm:$0xff] %v2159
        %2168 = vst [vmem:[#allocation2 + $0x60] sm:$0xff] %v2160
        %2169 = vst [vmem:[#allocation2 + $0x68] sm:$0xff] %v2161
        %2170 = vst [vmem:[#allocation2 + $0x70] sm:$0xff] %v2162
        %2171 = vst [vmem:[#allocation2 + $0x78] sm:$0xff] %v2163
        %2172 = vrot.lane.b32.xlu0 %v2021, 15
        %v2173 = vpop.permute.xlu0 %2172
        %2174 = vrot.lane.b32.xlu0 %v2023, 15
        %v2175 = vpop.permute.xlu0 %2174
        %2176 = vrot.lane.b32.xlu0 %v2033, 15
        %v2177 = vpop.permute.xlu0 %2176
        %2178 = vrot.lane.b32.xlu0 %v2035, 15
        %v2179 = vpop.permute.xlu0 %2178
        %2184 = vrot.lane.b32.xlu0 %v2020, 15
        %v2185 = vpop.permute.xlu0 %2184
        %2186 = vrot.lane.b32.xlu0 %v2022, 15
        %v2187 = vpop.permute.xlu0 %2186
        %2188 = vrot.lane.b32.xlu0 %v2032, 15
        %v2189 = vpop.permute.xlu0 %2188
        %2190 = vrot.lane.b32.xlu0 %v2034, 15
        %v2191 = vpop.permute.xlu0 %2190
        %v2192 = vsel %vm1360, %v2185, %v2173
        %v2193 = vsel %vm1360, %v2187, %v2175
        %v2194 = vsel %vm1360, %v2189, %v2177
        %v2195 = vsel %vm1360, %v2191, %v2179
        %v2204 = vsel %vm1360, %v2173, %v2185
        %v2205 = vsel %vm1360, %v2175, %v2187
        %v2206 = vsel %vm1360, %v2177, %v2189
        %v2207 = vsel %vm1360, %v2179, %v2191
        %v2208 = vld [vmem:[%s1373] ss:$8 sm:$0x3]
        %v2210 = vlaneseq
        %v2211 = vshrl.u32 %v2210, 7
        %v2212 = vsub.s32 0, %v2211
        %v2213 = vrot.slane %v2208, %v2212
        %v2214 = vlaneseq
        %v2215 = vshrl.u32 %v2214, 7
        %v2216 = vsub.s32 1, %v2215
        %v2217 = vrot.slane %v2208, %v2216
        %v2220 = vmul.f32 %v2204, %v2213
        %v2221 = vmul.f32 %v2192, %v2217
        %v2222 = vmul.f32 %v2205, %v2213
        %v2223 = vmul.f32 %v2193, %v2217
        %v2224 = vmul.f32 %v2206, %v2213
        %v2225 = vmul.f32 %v2194, %v2217
        %v2226 = vmul.f32 %v2207, %v2213
        %v2227 = vmul.f32 %v2195, %v2217
        %2228 = vst [vmem:[#allocation2 + $0x80] sm:$0xff] %v2220
        %2229 = vst [vmem:[#allocation2 + $0x88] sm:$0xff] %v2221
        %2230 = vst [vmem:[#allocation2 + $0x90] sm:$0xff] %v2222
        %2231 = vst [vmem:[#allocation2 + $0x98] sm:$0xff] %v2223
        %2232 = vst [vmem:[#allocation2 + $0xa0] sm:$0xff] %v2224
        %2233 = vst [vmem:[#allocation2 + $0xa8] sm:$0xff] %v2225
        %2234 = vst [vmem:[#allocation2 + $0xb0] sm:$0xff] %v2226
        %2235 = vst [vmem:[#allocation2 + $0xb8] sm:$0xff] %v2227
        %2236 = vrot.lane.b32.xlu0 %v2021, 1
        %v2237 = vpop.permute.xlu0 %2236
        %2238 = vrot.lane.b32.xlu0 %v2023, 1
        %v2239 = vpop.permute.xlu0 %2238
        %2240 = vrot.lane.b32.xlu0 %v2033, 1
        %v2241 = vpop.permute.xlu0 %2240
        %2242 = vrot.lane.b32.xlu0 %v2035, 1
        %v2243 = vpop.permute.xlu0 %2242
        %2248 = vrot.lane.b32.xlu0 %v2020, 1
        %v2249 = vpop.permute.xlu0 %2248
        %2250 = vrot.lane.b32.xlu0 %v2022, 1
        %v2251 = vpop.permute.xlu0 %2250
        %2252 = vrot.lane.b32.xlu0 %v2032, 1
        %v2253 = vpop.permute.xlu0 %2252
        %2254 = vrot.lane.b32.xlu0 %v2034, 1
        %v2255 = vpop.permute.xlu0 %2254
        %v2256 = vsel %vm640, %v2249, %v2237
        %v2257 = vsel %vm640, %v2251, %v2239
        %v2258 = vsel %vm640, %v2253, %v2241
        %v2259 = vsel %vm640, %v2255, %v2243
        %v2268 = vsel %vm640, %v2237, %v2249
        %v2269 = vsel %vm640, %v2239, %v2251
        %v2270 = vsel %vm640, %v2241, %v2253
        %v2271 = vsel %vm640, %v2243, %v2255
        %v2272 = vld [vmem:[%s1425] ss:$8 sm:$0x3]
        %v2274 = vlaneseq
        %v2275 = vshrl.u32 %v2274, 7
        %v2276 = vsub.s32 0, %v2275
        %v2277 = vrot.slane %v2272, %v2276
        %v2278 = vlaneseq
        %v2279 = vshrl.u32 %v2278, 7
        %v2280 = vsub.s32 1, %v2279
        %v2281 = vrot.slane %v2272, %v2280
        %v2284 = vmul.f32 %v2268, %v2277
        %v2285 = vmul.f32 %v2256, %v2281
        %v2286 = vmul.f32 %v2269, %v2277
        %v2287 = vmul.f32 %v2257, %v2281
        %v2288 = vmul.f32 %v2270, %v2277
        %v2289 = vmul.f32 %v2258, %v2281
        %v2290 = vmul.f32 %v2271, %v2277
        %v2291 = vmul.f32 %v2259, %v2281
        %2292 = vst [vmem:[#allocation2 + $0xc0] sm:$0xff] %v2284
        %2293 = vst [vmem:[#allocation2 + $0xc8] sm:$0xff] %v2285
        %2294 = vst [vmem:[#allocation2 + $0xd0] sm:$0xff] %v2286
        %2295 = vst [vmem:[#allocation2 + $0xd8] sm:$0xff] %v2287
        %2296 = vst [vmem:[#allocation2 + $0xe0] sm:$0xff] %v2288
        %2297 = vst [vmem:[#allocation2 + $0xe8] sm:$0xff] %v2289
        %2298 = vst [vmem:[#allocation2 + $0xf0] sm:$0xff] %v2290
        %2299 = vst [vmem:[#allocation2 + $0xf8] sm:$0xff] %v2291
        %2300 = vst [vmem:[#allocation2 + $0x100] sm:$0xff] %v2020
        %2301 = vst [vmem:[#allocation2 + $0x108] sm:$0xff] %v2021
        %2302 = vst [vmem:[#allocation2 + $0x110] sm:$0xff] %v2022
        %2303 = vst [vmem:[#allocation2 + $0x118] sm:$0xff] %v2023
        %2304 = vst [vmem:[#allocation2 + $0x120] sm:$0xff] %v2032
        %2305 = vst [vmem:[#allocation2 + $0x128] sm:$0xff] %v2033
        %2306 = vst [vmem:[#allocation2 + $0x130] sm:$0xff] %v2034
        %2307 = vst [vmem:[#allocation2 + $0x138] sm:$0xff] %v2035
        %2308 = vrot.lane.b32.xlu0 %v2020, 127
        %v2309 = vpop.permute.xlu0 %2308
        %2310 = vrot.lane.b32.xlu0 %v2021, 127
        %v2311 = vpop.permute.xlu0 %2310
        %2312 = vrot.lane.b32.xlu0 %v2022, 127
        %v2313 = vpop.permute.xlu0 %2312
        %2314 = vrot.lane.b32.xlu0 %v2023, 127
        %v2315 = vpop.permute.xlu0 %2314
        %2316 = vrot.lane.b32.xlu0 %v2032, 127
        %v2317 = vpop.permute.xlu0 %2316
        %2318 = vrot.lane.b32.xlu0 %v2033, 127
        %v2319 = vpop.permute.xlu0 %2318
        %2320 = vrot.lane.b32.xlu0 %v2034, 127
        %v2321 = vpop.permute.xlu0 %2320
        %2322 = vrot.lane.b32.xlu0 %v2035, 127
        %v2323 = vpop.permute.xlu0 %2322
        %v2324 = vsel %vm1468, %v2309, %v2311
        %v2325 = vsel %vm1468, %v2313, %v2315
        %v2326 = vsel %vm1468, %v2317, %v2319
        %v2327 = vsel %vm1468, %v2321, %v2323
        %v2340 = vsel %vm1468, %v2311, %v2309
        %v2341 = vsel %vm1468, %v2315, %v2313
        %v2342 = vsel %vm1468, %v2319, %v2317
        %v2343 = vsel %vm1468, %v2323, %v2321
        %v2344 = vld [vmem:[%s1484] ss:$8 sm:$0x3]
        %v2346 = vlaneseq
        %v2347 = vshrl.u32 %v2346, 7
        %v2348 = vsub.s32 0, %v2347
        %v2349 = vrot.slane %v2344, %v2348
        %v2350 = vlaneseq
        %v2351 = vshrl.u32 %v2350, 7
        %v2352 = vsub.s32 1, %v2351
        %v2353 = vrot.slane %v2344, %v2352
        %v2356 = vmul.f32 %v2324, %v2349
        %v2357 = vmul.f32 %v2340, %v2353
        %v2358 = vmul.f32 %v2325, %v2349
        %v2359 = vmul.f32 %v2341, %v2353
        %v2360 = vmul.f32 %v2326, %v2349
        %v2361 = vmul.f32 %v2342, %v2353
        %v2362 = vmul.f32 %v2327, %v2349
        %v2363 = vmul.f32 %v2343, %v2353
        %2364 = vst [vmem:[#allocation2 + $0x140] sm:$0xff] %v2356
        %2365 = vst [vmem:[#allocation2 + $0x148] sm:$0xff] %v2357
        %2366 = vst [vmem:[#allocation2 + $0x150] sm:$0xff] %v2358
        %2367 = vst [vmem:[#allocation2 + $0x158] sm:$0xff] %v2359
        %2368 = vst [vmem:[#allocation2 + $0x160] sm:$0xff] %v2360
        %2369 = vst [vmem:[#allocation2 + $0x168] sm:$0xff] %v2361
        %2370 = vst [vmem:[#allocation2 + $0x170] sm:$0xff] %v2362
        %2371 = vst [vmem:[#allocation2 + $0x178] sm:$0xff] %v2363
        %2372 = vrot.lane.b32.xlu0 %v2020, 113
        %v2373 = vpop.permute.xlu0 %2372
        %2374 = vrot.lane.b32.xlu0 %v2021, 113
        %v2375 = vpop.permute.xlu0 %2374
        %2376 = vrot.lane.b32.xlu0 %v2022, 113
        %v2377 = vpop.permute.xlu0 %2376
        %2378 = vrot.lane.b32.xlu0 %v2023, 113
        %v2379 = vpop.permute.xlu0 %2378
        %2380 = vrot.lane.b32.xlu0 %v2032, 113
        %v2381 = vpop.permute.xlu0 %2380
        %2382 = vrot.lane.b32.xlu0 %v2033, 113
        %v2383 = vpop.permute.xlu0 %2382
        %2384 = vrot.lane.b32.xlu0 %v2034, 113
        %v2385 = vpop.permute.xlu0 %2384
        %2386 = vrot.lane.b32.xlu0 %v2035, 113
        %v2387 = vpop.permute.xlu0 %2386
        %v2388 = vsel %vm1521, %v2373, %v2375
        %v2389 = vsel %vm1521, %v2377, %v2379
        %v2390 = vsel %vm1521, %v2381, %v2383
        %v2391 = vsel %vm1521, %v2385, %v2387
        %v2404 = vsel %vm1521, %v2375, %v2373
        %v2405 = vsel %vm1521, %v2379, %v2377
        %v2406 = vsel %vm1521, %v2383, %v2381
        %v2407 = vsel %vm1521, %v2387, %v2385
        %v2408 = vld [vmem:[%s1537] ss:$8 sm:$0x3]
        %v2410 = vlaneseq
        %v2411 = vshrl.u32 %v2410, 7
        %v2412 = vsub.s32 0, %v2411
        %v2413 = vrot.slane %v2408, %v2412
        %v2414 = vlaneseq
        %v2415 = vshrl.u32 %v2414, 7
        %v2416 = vsub.s32 1, %v2415
        %v2417 = vrot.slane %v2408, %v2416
        %v2420 = vmul.f32 %v2388, %v2413
        %v2421 = vmul.f32 %v2404, %v2417
        %v2422 = vmul.f32 %v2389, %v2413
        %v2423 = vmul.f32 %v2405, %v2417
        %v2424 = vmul.f32 %v2390, %v2413
        %v2425 = vmul.f32 %v2406, %v2417
        %v2426 = vmul.f32 %v2391, %v2413
        %v2427 = vmul.f32 %v2407, %v2417
        %2428 = vst [vmem:[#allocation2 + $0x180] sm:$0xff] %v2420
        %2429 = vst [vmem:[#allocation2 + $0x188] sm:$0xff] %v2421
        %2430 = vst [vmem:[#allocation2 + $0x190] sm:$0xff] %v2422
        %2431 = vst [vmem:[#allocation2 + $0x198] sm:$0xff] %v2423
        %2432 = vst [vmem:[#allocation2 + $0x1a0] sm:$0xff] %v2424
        %2433 = vst [vmem:[#allocation2 + $0x1a8] sm:$0xff] %v2425
        %2434 = vst [vmem:[#allocation2 + $0x1b0] sm:$0xff] %v2426
        %2435 = vst [vmem:[#allocation2 + $0x1b8] sm:$0xff] %v2427
        %2436 = vrot.lane.b32.xlu0 %v2020, 112
        %v2437 = vpop.permute.xlu0 %2436
        %2438 = vrot.lane.b32.xlu0 %v2021, 112
        %v2439 = vpop.permute.xlu0 %2438
        %2440 = vrot.lane.b32.xlu0 %v2022, 112
        %v2441 = vpop.permute.xlu0 %2440
        %2442 = vrot.lane.b32.xlu0 %v2023, 112
        %v2443 = vpop.permute.xlu0 %2442
        %2444 = vrot.lane.b32.xlu0 %v2032, 112
        %v2445 = vpop.permute.xlu0 %2444
        %2446 = vrot.lane.b32.xlu0 %v2033, 112
        %v2447 = vpop.permute.xlu0 %2446
        %2448 = vrot.lane.b32.xlu0 %v2034, 112
        %v2449 = vpop.permute.xlu0 %2448
        %2450 = vrot.lane.b32.xlu0 %v2035, 112
        %v2451 = vpop.permute.xlu0 %2450
        %v2452 = vsel %vm1574, %v2437, %v2439
        %v2453 = vsel %vm1574, %v2441, %v2443
        %v2454 = vsel %vm1574, %v2445, %v2447
        %v2455 = vsel %vm1574, %v2449, %v2451
        %v2468 = vsel %vm1574, %v2439, %v2437
        %v2469 = vsel %vm1574, %v2443, %v2441
        %v2470 = vsel %vm1574, %v2447, %v2445
        %v2471 = vsel %vm1574, %v2451, %v2449
        %v2472 = vld [vmem:[%s1590] ss:$8 sm:$0x3]
        %v2474 = vlaneseq
        %v2475 = vshrl.u32 %v2474, 7
        %v2476 = vsub.s32 0, %v2475
        %v2477 = vrot.slane %v2472, %v2476
        %v2478 = vlaneseq
        %v2479 = vshrl.u32 %v2478, 7
        %v2480 = vsub.s32 1, %v2479
        %v2481 = vrot.slane %v2472, %v2480
        %v2484 = vmul.f32 %v2452, %v2477
        %v2485 = vmul.f32 %v2468, %v2481
        %v2486 = vmul.f32 %v2453, %v2477
        %v2487 = vmul.f32 %v2469, %v2481
        %v2488 = vmul.f32 %v2454, %v2477
        %v2489 = vmul.f32 %v2470, %v2481
        %v2490 = vmul.f32 %v2455, %v2477
        %v2491 = vmul.f32 %v2471, %v2481
        %2492 = vst [vmem:[#allocation2 + $0x1c0] sm:$0xff] %v2484
        %2493 = vst [vmem:[#allocation2 + $0x1c8] sm:$0xff] %v2485
        %2494 = vst [vmem:[#allocation2 + $0x1d0] sm:$0xff] %v2486
        %2495 = vst [vmem:[#allocation2 + $0x1d8] sm:$0xff] %v2487
        %2496 = vst [vmem:[#allocation2 + $0x1e0] sm:$0xff] %v2488
        %2497 = vst [vmem:[#allocation2 + $0x1e8] sm:$0xff] %v2489
        %2498 = vst [vmem:[#allocation2 + $0x1f0] sm:$0xff] %v2490
        %2499 = vst [vmem:[#allocation2 + $0x1f8] sm:$0xff] %v2491
        %2500 = vrot.lane.b32.xlu0 %v2020, 111
        %v2501 = vpop.permute.xlu0 %2500
        %2502 = vrot.lane.b32.xlu0 %v2021, 111
        %v2503 = vpop.permute.xlu0 %2502
        %2504 = vrot.lane.b32.xlu0 %v2022, 111
        %v2505 = vpop.permute.xlu0 %2504
        %2506 = vrot.lane.b32.xlu0 %v2023, 111
        %v2507 = vpop.permute.xlu0 %2506
        %2508 = vrot.lane.b32.xlu0 %v2032, 111
        %v2509 = vpop.permute.xlu0 %2508
        %2510 = vrot.lane.b32.xlu0 %v2033, 111
        %v2511 = vpop.permute.xlu0 %2510
        %2512 = vrot.lane.b32.xlu0 %v2034, 111
        %v2513 = vpop.permute.xlu0 %2512
        %2514 = vrot.lane.b32.xlu0 %v2035, 111
        %v2515 = vpop.permute.xlu0 %2514
        %v2516 = vsel %vm1627, %v2501, %v2503
        %v2517 = vsel %vm1627, %v2505, %v2507
        %v2518 = vsel %vm1627, %v2509, %v2511
        %v2519 = vsel %vm1627, %v2513, %v2515
        %v2532 = vsel %vm1627, %v2503, %v2501
        %v2533 = vsel %vm1627, %v2507, %v2505
        %v2534 = vsel %vm1627, %v2511, %v2509
        %v2535 = vsel %vm1627, %v2515, %v2513
        %v2536 = vld [vmem:[%s1643] ss:$8 sm:$0x3]
        %v2538 = vlaneseq
        %v2539 = vshrl.u32 %v2538, 7
        %v2540 = vsub.s32 0, %v2539
        %v2541 = vrot.slane %v2536, %v2540
        %v2542 = vlaneseq
        %v2543 = vshrl.u32 %v2542, 7
        %v2544 = vsub.s32 1, %v2543
        %v2545 = vrot.slane %v2536, %v2544
        %v2548 = vmul.f32 %v2516, %v2541
        %v2549 = vmul.f32 %v2532, %v2545
        %v2550 = vmul.f32 %v2517, %v2541
        %v2551 = vmul.f32 %v2533, %v2545
        %v2552 = vmul.f32 %v2518, %v2541
        %v2553 = vmul.f32 %v2534, %v2545
        %v2554 = vmul.f32 %v2519, %v2541
        %v2555 = vmul.f32 %v2535, %v2545
        %2556 = vst [vmem:[#allocation2 + $0x200] sm:$0xff] %v2548
        %2557 = vst [vmem:[#allocation2 + $0x208] sm:$0xff] %v2549
        %2558 = vst [vmem:[#allocation2 + $0x210] sm:$0xff] %v2550
        %2559 = vst [vmem:[#allocation2 + $0x218] sm:$0xff] %v2551
        %2560 = vst [vmem:[#allocation2 + $0x220] sm:$0xff] %v2552
        %2561 = vst [vmem:[#allocation2 + $0x228] sm:$0xff] %v2553
        %2562 = vst [vmem:[#allocation2 + $0x230] sm:$0xff] %v2554
        %2563 = vst [vmem:[#allocation2 + $0x238] sm:$0xff] %v2555
        %v2564 = vld [vmem:[%s10] sm:$0xff]
        %v2565 = vld [vmem:[%s10 + $0x8] sm:$0xff]
        %v2566 = vld [vmem:[%s10 + $0x10] sm:$0xff]
        %v2567 = vld [vmem:[%s10 + $0x18] sm:$0xff]
        %v2568 = vld [vmem:[%s10 + $0x20] sm:$0xff]
        %v2569 = vld [vmem:[%s10 + $0x28] sm:$0xff]
        %v2570 = vld [vmem:[%s10 + $0x30] sm:$0xff]
        %v2571 = vld [vmem:[%s10 + $0x38] sm:$0xff]
        %v2572 = vld [vmem:[%s10 + $0x40] sm:$0xff]
        %v2573 = vld [vmem:[%s10 + $0x48] sm:$0xff]
        %v2574 = vld [vmem:[%s10 + $0x50] sm:$0xff]
        %v2575 = vld [vmem:[%s10 + $0x58] sm:$0xff]
        %v2576 = vld [vmem:[%s10 + $0x60] sm:$0xff]
        %v2577 = vld [vmem:[%s10 + $0x68] sm:$0xff]
        %v2578 = vld [vmem:[%s10 + $0x70] sm:$0xff]
        %v2579 = vld [vmem:[%s10 + $0x78] sm:$0xff]
        %v2580 = vld [vmem:[%s10 + $0x80] sm:$0xff]
        %v2581 = vld [vmem:[%s10 + $0x88] sm:$0xff]
        %v2582 = vld [vmem:[%s10 + $0x90] sm:$0xff]
        %v2583 = vld [vmem:[%s10 + $0x98] sm:$0xff]
        %v2584 = vld [vmem:[%s10 + $0xa0] sm:$0xff]
        %v2585 = vld [vmem:[%s10 + $0xa8] sm:$0xff]
        %v2586 = vld [vmem:[%s10 + $0xb0] sm:$0xff]
        %v2587 = vld [vmem:[%s10 + $0xb8] sm:$0xff]
        %v2588 = vld [vmem:[#allocation2] sm:$0xff]
        %v2589 = vld [vmem:[#allocation2 + $0x8] sm:$0xff]
        %v2590 = vld [vmem:[#allocation2 + $0x10] sm:$0xff]
        %v2591 = vld [vmem:[#allocation2 + $0x18] sm:$0xff]
        %v2592 = vld [vmem:[#allocation2 + $0x20] sm:$0xff]
        %v2593 = vld [vmem:[#allocation2 + $0x28] sm:$0xff]
        %v2594 = vld [vmem:[#allocation2 + $0x30] sm:$0xff]
        %v2595 = vld [vmem:[#allocation2 + $0x38] sm:$0xff]
        %v2596 = vld [vmem:[#allocation2 + $0x40] sm:$0xff]
        %v2597 = vld [vmem:[#allocation2 + $0x48] sm:$0xff]
        %v2598 = vld [vmem:[#allocation2 + $0x50] sm:$0xff]
        %v2599 = vld [vmem:[#allocation2 + $0x58] sm:$0xff]
        %v2600 = vld [vmem:[#allocation2 + $0x60] sm:$0xff]
        %v2601 = vld [vmem:[#allocation2 + $0x68] sm:$0xff]
        %v2602 = vld [vmem:[#allocation2 + $0x70] sm:$0xff]
        %v2603 = vld [vmem:[#allocation2 + $0x78] sm:$0xff]
        %v2604 = vld [vmem:[#allocation2 + $0x80] sm:$0xff]
        %v2605 = vld [vmem:[#allocation2 + $0x88] sm:$0xff]
        %v2606 = vld [vmem:[#allocation2 + $0x90] sm:$0xff]
        %v2607 = vld [vmem:[#allocation2 + $0x98] sm:$0xff]
        %v2608 = vld [vmem:[#allocation2 + $0xa0] sm:$0xff]
        %v2609 = vld [vmem:[#allocation2 + $0xa8] sm:$0xff]
        %v2610 = vld [vmem:[#allocation2 + $0xb0] sm:$0xff]
        %v2611 = vld [vmem:[#allocation2 + $0xb8] sm:$0xff]
        %v2612 = vld [vmem:[#allocation2 + $0xc0] sm:$0xff]
        %v2613 = vld [vmem:[#allocation2 + $0xc8] sm:$0xff]
        %v2614 = vld [vmem:[#allocation2 + $0xd0] sm:$0xff]
        %v2615 = vld [vmem:[#allocation2 + $0xd8] sm:$0xff]
        %v2616 = vld [vmem:[#allocation2 + $0xe0] sm:$0xff]
        %v2617 = vld [vmem:[#allocation2 + $0xe8] sm:$0xff]
        %v2618 = vld [vmem:[#allocation2 + $0xf0] sm:$0xff]
        %v2619 = vld [vmem:[#allocation2 + $0xf8] sm:$0xff]
        %v2620 = vld [vmem:[#allocation2 + $0x100] sm:$0xff]
        %v2621 = vld [vmem:[#allocation2 + $0x108] sm:$0xff]
        %v2622 = vld [vmem:[#allocation2 + $0x110] sm:$0xff]
        %v2623 = vld [vmem:[#allocation2 + $0x118] sm:$0xff]
        %v2624 = vld [vmem:[#allocation2 + $0x120] sm:$0xff]
        %v2625 = vld [vmem:[#allocation2 + $0x128] sm:$0xff]
        %v2626 = vld [vmem:[#allocation2 + $0x130] sm:$0xff]
        %v2627 = vld [vmem:[#allocation2 + $0x138] sm:$0xff]
        %v2628 = vld [vmem:[#allocation2 + $0x140] sm:$0xff]
        %v2629 = vld [vmem:[#allocation2 + $0x148] sm:$0xff]
        %v2630 = vld [vmem:[#allocation2 + $0x150] sm:$0xff]
        %v2631 = vld [vmem:[#allocation2 + $0x158] sm:$0xff]
        %v2632 = vld [vmem:[#allocation2 + $0x160] sm:$0xff]
        %v2633 = vld [vmem:[#allocation2 + $0x168] sm:$0xff]
        %v2634 = vld [vmem:[#allocation2 + $0x170] sm:$0xff]
        %v2635 = vld [vmem:[#allocation2 + $0x178] sm:$0xff]
        %v2636 = vld [vmem:[#allocation2 + $0x180] sm:$0xff]
        %v2637 = vld [vmem:[#allocation2 + $0x188] sm:$0xff]
        %v2638 = vld [vmem:[#allocation2 + $0x190] sm:$0xff]
        %v2639 = vld [vmem:[#allocation2 + $0x198] sm:$0xff]
        %v2640 = vld [vmem:[#allocation2 + $0x1a0] sm:$0xff]
        %v2641 = vld [vmem:[#allocation2 + $0x1a8] sm:$0xff]
        %v2642 = vld [vmem:[#allocation2 + $0x1b0] sm:$0xff]
        %v2643 = vld [vmem:[#allocation2 + $0x1b8] sm:$0xff]
        %v2644 = vld [vmem:[#allocation2 + $0x1c0] sm:$0xff]
        %v2645 = vld [vmem:[#allocation2 + $0x1c8] sm:$0xff]
        %v2646 = vld [vmem:[#allocation2 + $0x1d0] sm:$0xff]
        %v2647 = vld [vmem:[#allocation2 + $0x1d8] sm:$0xff]
        %v2648 = vld [vmem:[#allocation2 + $0x1e0] sm:$0xff]
        %v2649 = vld [vmem:[#allocation2 + $0x1e8] sm:$0xff]
        %v2650 = vld [vmem:[#allocation2 + $0x1f0] sm:$0xff]
        %v2651 = vld [vmem:[#allocation2 + $0x1f8] sm:$0xff]
        %v2652 = vld [vmem:[#allocation2 + $0x200] sm:$0xff]
        %v2653 = vld [vmem:[#allocation2 + $0x208] sm:$0xff]
        %v2654 = vld [vmem:[#allocation2 + $0x210] sm:$0xff]
        %v2655 = vld [vmem:[#allocation2 + $0x218] sm:$0xff]
        %v2656 = vld [vmem:[#allocation2 + $0x220] sm:$0xff]
        %v2657 = vld [vmem:[#allocation2 + $0x228] sm:$0xff]
        %v2658 = vld [vmem:[#allocation2 + $0x230] sm:$0xff]
        %v2659 = vld [vmem:[#allocation2 + $0x238] sm:$0xff]
        %v2660 = vld [vmem:[%s11] sm:$0xff]
        %v2661 = vld [vmem:[%s11 + $0x8] sm:$0xff]
        %v2662 = vld [vmem:[%s11 + $0x10] sm:$0xff]
        %v2663 = vld [vmem:[%s11 + $0x18] sm:$0xff]
        %v2664 = vld [vmem:[%s11 + $0x20] sm:$0xff]
        %v2665 = vld [vmem:[%s11 + $0x28] sm:$0xff]
        %v2666 = vld [vmem:[%s11 + $0x30] sm:$0xff]
        %v2667 = vld [vmem:[%s11 + $0x38] sm:$0xff]
        %2669 = vset.pattern.permute.xlu0 0
        %2670 = vperm.xlu0 %2669, %v2660
        %v2671 = vpop.permute.xlu0 %2670
        %2674 = vset.pattern.permute.xlu0 0
        %2675 = vperm.xlu0 %2674, %v2661
        %v2676 = vpop.permute.xlu0 %2675
        %2679 = vset.pattern.permute.xlu0 0
        %2680 = vperm.xlu0 %2679, %v2662
        %v2681 = vpop.permute.xlu0 %2680
        %2684 = vset.pattern.permute.xlu0 0
        %2685 = vperm.xlu0 %2684, %v2663
        %v2686 = vpop.permute.xlu0 %2685
        %2689 = vset.pattern.permute.xlu0 0
        %2690 = vperm.xlu0 %2689, %v2664
        %v2691 = vpop.permute.xlu0 %2690
        %2694 = vset.pattern.permute.xlu0 0
        %2695 = vperm.xlu0 %2694, %v2665
        %v2696 = vpop.permute.xlu0 %2695
        %2699 = vset.pattern.permute.xlu0 0
        %2700 = vperm.xlu0 %2699, %v2666
        %v2701 = vpop.permute.xlu0 %2700
        %2704 = vset.pattern.permute.xlu0 0
        %2705 = vperm.xlu0 %2704, %v2667
        %v2706 = vpop.permute.xlu0 %2705
        %vm2708 = vcmask 261120
        %v2710 = vsel %vm2708, %v2566, 0
        %v2713 = vsel %vm2708, %v2569, 0
        %v2716 = vsel %vm2708, %v2572, 0
        %v2719 = vsel %vm2708, %v2575, 0
        %v2722 = vsel %vm2708, %v2578, 0
        %v2725 = vsel %vm2708, %v2581, 0
        %v2728 = vsel %vm2708, %v2584, 0
        %v2731 = vsel %vm2708, %v2587, 0
        %2733 = vmatprep.subr.mxu0 %v2589
        %2734 = vmatpush1.msra.mxu0 %v2588
        %2735 = vmatprep.subr.mxu0 %v2591
        %2736 = vmatpush1.msra.mxu0 %v2590
        %2737 = vmatprep.subr.mxu0 %v2593
        %2738 = vmatpush1.msra.mxu0 %v2592
        %2739 = vmatprep.subr.mxu0 %v2595
        %2740 = vmatpush1.msra.mxu0 %v2594
        %2741 = vmatprep.subr.mxu0 %v2597
        %2742 = vmatpush1.msra.mxu0 %v2596
        %2743 = vmatprep.subr.mxu0 %v2599
        %2744 = vmatpush1.msra.mxu0 %v2598
        %2745 = vmatprep.subr.mxu0 %v2601
        %2746 = vmatpush1.msra.mxu0 %v2600
        %2747 = vmatprep.subr.mxu0 %v2603
        %2748 = vmatpush1.msra.mxu0 %v2602
        %2749 = vmatprep.subr.mxu0 %v2605
        %2750 = vmatpush1.msra.mxu0 %v2604
        %2751 = vmatprep.subr.mxu0 %v2607
        %2752 = vmatpush1.msra.mxu0 %v2606
        %2753 = vmatprep.subr.mxu0 %v2609
        %2754 = vmatpush1.msra.mxu0 %v2608
        %2755 = vmatprep.subr.mxu0 %v2611
        %2756 = vmatpush1.msra.mxu0 %v2610
        %2757 = vmatprep.subr.mxu0 %v2613
        %2758 = vmatpush1.msra.mxu0 %v2612
        %2759 = vmatprep.subr.mxu0 %v2615
        %2760 = vmatpush1.msra.mxu0 %v2614
        %2761 = vmatprep.subr.mxu0 %v2617
        %2762 = vmatpush1.msra.mxu0 %v2616
        %2763 = vmatprep.subr.mxu0 %v2619
        %2764 = vmatpush1.msra.mxu0 %v2618
        %2765 = vmatprep.subr.mxu0 %v2621
        %2766 = vmatpush1.msra.mxu0 %v2620
        %2767 = vmatprep.subr.mxu0 %v2623
        %2768 = vmatpush1.msra.mxu0 %v2622
        %2769 = vmatprep.subr.mxu0 %v2625
        %2770 = vmatpush1.msra.mxu0 %v2624
        %2771 = vmatprep.subr.mxu0 %v2627
        %2772 = vmatpush1.msra.mxu0 %v2626
        %2773 = vmatprep.subr.mxu0 %v2629
        %2774 = vmatpush1.msra.mxu0 %v2628
        %2775 = vmatprep.subr.mxu0 %v2631
        %2776 = vmatpush1.msra.mxu0 %v2630
        %2777 = vmatprep.subr.mxu0 %v2633
        %2778 = vmatpush1.msra.mxu0 %v2632
        %2779 = vmatprep.subr.mxu0 %v2635
        %2780 = vmatpush1.msra.mxu0 %v2634
        %2781 = vmatprep.subr.mxu0 %v2637
        %2782 = vmatpush1.msra.mxu0 %v2636
        %2783 = vmatprep.subr.mxu0 %v2639
        %2784 = vmatpush1.msra.mxu0 %v2638
        %2785 = vmatprep.subr.mxu0 %v2641
        %2786 = vmatpush1.msra.mxu0 %v2640
        %2787 = vmatprep.subr.mxu0 %v2643
        %2788 = vmatpush1.msra.mxu0 %v2642
        %2789 = vmatprep.subr.mxu0 %v2645
        %2790 = vmatpush1.msra.mxu0 %v2644
        %2791 = vmatprep.subr.mxu0 %v2647
        %2792 = vmatpush1.msra.mxu0 %v2646
        %2793 = vmatprep.subr.mxu0 %v2649
        %2794 = vmatpush1.msra.mxu0 %v2648
        %2795 = vmatprep.subr.mxu0 %v2651
        %2796 = vmatpush1.msra.mxu0 %v2650
        %2797 = vmatprep.mubr.f32.mxu0 %v2565
        %2798 = vmatmul.mubr.f32.gmra.mrb[0].mxu0 %v2564
        %v2799 = vpop.f32.mrb[0].mxu0
        %v2800 = vadd.f32 %v2671, %v2799
        %v2801 = vpop.f32.mrb[0].mxu0
        %v2802 = vadd.f32 %v2671, %v2801
        %2803 = vmatprep.mubr.f32.mxu0 %v2568
        %2804 = vmatmul.mubr.f32.gmra.mrb[0].mxu0 %v2567
        %v2805 = vpop.f32.mrb[0].mxu0
        %v2806 = vadd.f32 %v2676, %v2805
        %v2807 = vpop.f32.mrb[0].mxu0
        %v2808 = vadd.f32 %v2676, %v2807
        %2809 = vmatprep.mubr.f32.mxu0 %v2571
        %2810 = vmatmul.mubr.f32.gmra.mrb[0].mxu0 %v2570
        %v2811 = vpop.f32.mrb[0].mxu0
        %v2812 = vadd.f32 %v2681, %v2811
        %v2813 = vpop.f32.mrb[0].mxu0
        %v2814 = vadd.f32 %v2681, %v2813
        %2815 = vmatprep.mubr.f32.mxu0 %v2574
        %2816 = vmatmul.mubr.f32.gmra.mrb[0].mxu0 %v2573
        %v2817 = vpop.f32.mrb[0].mxu0
        %v2818 = vadd.f32 %v2686, %v2817
        %v2819 = vpop.f32.mrb[0].mxu0
        %v2820 = vadd.f32 %v2686, %v2819
        %2821 = vmatprep.mubr.f32.mxu0 %v2577
        %2822 = vmatmul.mubr.f32.gmra.mrb[0].mxu0 %v2576
        %v2823 = vpop.f32.mrb[0].mxu0
        %v2824 = vadd.f32 %v2691, %v2823
        %v2825 = vpop.f32.mrb[0].mxu0
        %v2826 = vadd.f32 %v2691, %v2825
        %2827 = vmatprep.mubr.f32.mxu0 %v2580
        %2828 = vmatmul.mubr.f32.gmra.mrb[0].mxu0 %v2579
        %v2829 = vpop.f32.mrb[0].mxu0
        %v2830 = vadd.f32 %v2696, %v2829
        %v2831 = vpop.f32.mrb[0].mxu0
        %v2832 = vadd.f32 %v2696, %v2831
        %2833 = vmatprep.mubr.f32.mxu0 %v2583
        %2834 = vmatmul.mubr.f32.gmra.mrb[0].mxu0 %v2582
        %v2835 = vpop.f32.mrb[0].mxu0
        %v2836 = vadd.f32 %v2701, %v2835
        %v2837 = vpop.f32.mrb[0].mxu0
        %v2838 = vadd.f32 %v2701, %v2837
        %2839 = vmatprep.mubr.f32.mxu0 %v2586
        %2840 = vmatmul.mubr.f32.gmra.mrb[0].mxu0 %v2585
        %v2841 = vpop.f32.mrb[0].mxu0
        %v2842 = vadd.f32 %v2706, %v2841
        %v2843 = vpop.f32.mrb[0].mxu0
        %v2844 = vadd.f32 %v2706, %v2843
        %2845 = vdwg.mxu0
        %2846 = vmatprep.subr.mxu0 %v2653
        %2847 = vmatpush1.msra.mxu0 %v2652
        %2848 = vmatprep.subr.mxu0 %v2655
        %2849 = vmatpush1.msra.mxu0 %v2654
        %2850 = vmatprep.subr.mxu0 %v2657
        %2851 = vmatpush1.msra.mxu0 %v2656
        %2852 = vmatprep.subr.mxu0 %v2659
        %2853 = vmatpush1.msra.mxu0 %v2658
        %2854 = vmatprep.subr.mxu0 0.0
        %2855 = vmatpush1.msra.mxu0 0.0
        %2856 = vmatprep.subr.mxu0 0.0
        %2857 = vmatpush1.msra.mxu0 0.0
        %2858 = vmatprep.subr.mxu0 0.0
        %2859 = vmatpush1.msra.mxu0 0.0
        %2860 = vmatprep.subr.mxu0 0.0
        %2861 = vmatpush1.msra.mxu0 0.0
        %2862 = vmatprep.subr.mxu0 0.0
        %2863 = vmatpush1.msra.mxu0 0.0
        %2864 = vmatprep.subr.mxu0 0.0
        %2865 = vmatpush1.msra.mxu0 0.0
        %2866 = vmatprep.subr.mxu0 0.0
        %2867 = vmatpush1.msra.mxu0 0.0
        %2868 = vmatprep.subr.mxu0 0.0
        %2869 = vmatpush1.msra.mxu0 0.0
        %2870 = vmatprep.subr.mxu0 0.0
        %2871 = vmatpush1.msra.mxu0 0.0
        %2872 = vmatprep.subr.mxu0 0.0
        %2873 = vmatpush1.msra.mxu0 0.0
        %2874 = vmatprep.subr.mxu0 0.0
        %2875 = vmatpush1.msra.mxu0 0.0
        %2876 = vmatprep.subr.mxu0 0.0
        %2877 = vmatpush1.msra.mxu0 0.0
        %2878 = vmatprep.subr.mxu0 0.0
        %2879 = vmatpush1.msra.mxu0 0.0
        %2880 = vmatprep.subr.mxu0 0.0
        %2881 = vmatpush1.msra.mxu0 0.0
        %2882 = vmatprep.subr.mxu0 0.0
        %2883 = vmatpush1.msra.mxu0 0.0
        %2884 = vmatprep.subr.mxu0 0.0
        %2885 = vmatpush1.msra.mxu0 0.0
        %2886 = vmatprep.subr.mxu0 0.0
        %2887 = vmatpush1.msra.mxu0 0.0
        %2888 = vmatprep.subr.mxu0 0.0
        %2889 = vmatpush1.msra.mxu0 0.0
        %2890 = vmatprep.subr.mxu0 0.0
        %2891 = vmatpush1.msra.mxu0 0.0
        %2892 = vmatprep.subr.mxu0 0.0
        %2893 = vmatpush1.msra.mxu0 0.0
        %2894 = vmatprep.subr.mxu0 0.0
        %2895 = vmatpush1.msra.mxu0 0.0
        %2896 = vmatprep.subr.mxu0 0.0
        %2897 = vmatpush1.msra.mxu0 0.0
        %2898 = vmatprep.subr.mxu0 0.0
        %2899 = vmatpush1.msra.mxu0 0.0
        %2900 = vmatprep.subr.mxu0 0.0
        %2901 = vmatpush1.msra.mxu0 0.0
        %2902 = vmatprep.subr.mxu0 0.0
        %2903 = vmatpush1.msra.mxu0 0.0
        %2904 = vmatprep.subr.mxu0 0.0
        %2905 = vmatpush1.msra.mxu0 0.0
        %2906 = vmatprep.subr.mxu0 0.0
        %2907 = vmatpush1.msra.mxu0 0.0
        %2908 = vmatprep.subr.mxu0 0.0
        %2909 = vmatpush1.msra.mxu0 0.0
        %2910 = vmatprep.mubr.f32.mxu0 0.0
        %2911 = vmatmul.mubr.f32.gmra.mrb[0].mxu0 %v2710
        %v2912 = vpop.f32.mrb[0].mxu0
        %v2913 = vadd.f32 %v2800, %v2912
        %v2914 = vpop.f32.mrb[0].mxu0
        %v2915 = vadd.f32 %v2802, %v2914
        %2916 = vmatprep.mubr.f32.mxu0 0.0
        %2917 = vmatmul.mubr.f32.gmra.mrb[0].mxu0 %v2713
        %v2918 = vpop.f32.mrb[0].mxu0
        %v2919 = vadd.f32 %v2806, %v2918
        %v2920 = vpop.f32.mrb[0].mxu0
        %v2921 = vadd.f32 %v2808, %v2920
        %2922 = vmatprep.mubr.f32.mxu0 0.0
        %2923 = vmatmul.mubr.f32.gmra.mrb[0].mxu0 %v2716
        %v2924 = vpop.f32.mrb[0].mxu0
        %v2925 = vadd.f32 %v2812, %v2924
        %v2926 = vpop.f32.mrb[0].mxu0
        %v2927 = vadd.f32 %v2814, %v2926
        %2928 = vmatprep.mubr.f32.mxu0 0.0
        %2929 = vmatmul.mubr.f32.gmra.mrb[0].mxu0 %v2719
        %v2930 = vpop.f32.mrb[0].mxu0
        %v2931 = vadd.f32 %v2818, %v2930
        %v2932 = vpop.f32.mrb[0].mxu0
        %v2933 = vadd.f32 %v2820, %v2932
        %2934 = vmatprep.mubr.f32.mxu0 0.0
        %2935 = vmatmul.mubr.f32.gmra.mrb[0].mxu0 %v2722
        %v2936 = vpop.f32.mrb[0].mxu0
        %v2937 = vadd.f32 %v2824, %v2936
        %v2938 = vpop.f32.mrb[0].mxu0
        %v2939 = vadd.f32 %v2826, %v2938
        %2940 = vmatprep.mubr.f32.mxu0 0.0
        %2941 = vmatmul.mubr.f32.gmra.mrb[0].mxu0 %v2725
        %v2942 = vpop.f32.mrb[0].mxu0
        %v2943 = vadd.f32 %v2830, %v2942
        %v2944 = vpop.f32.mrb[0].mxu0
        %v2945 = vadd.f32 %v2832, %v2944
        %2946 = vmatprep.mubr.f32.mxu0 0.0
        %2947 = vmatmul.mubr.f32.gmra.mrb[0].mxu0 %v2728
        %v2948 = vpop.f32.mrb[0].mxu0
        %v2949 = vadd.f32 %v2836, %v2948
        %v2950 = vpop.f32.mrb[0].mxu0
        %v2951 = vadd.f32 %v2838, %v2950
        %2952 = vmatprep.mubr.f32.mxu0 0.0
        %2953 = vmatmul.mubr.f32.gmra.mrb[0].mxu0 %v2731
        %v2954 = vpop.f32.mrb[0].mxu0
        %v2955 = vadd.f32 %v2842, %v2954
        %v2956 = vpop.f32.mrb[0].mxu0
        %v2957 = vadd.f32 %v2844, %v2956
        %2958 = vdwg.mxu0
        %v2959 = vxor.u32 %v2913, 2147483648
        %v2960 = vxor.u32 %v2915, 2147483648
        %v2961 = vxor.u32 %v2919, 2147483648
        %v2962 = vxor.u32 %v2921, 2147483648
        %v2963 = vmul.f32 %v2959, 1.442695
        %v2964 = vpow.pop %v2963
        %v2965 = vmul.f32 %v2960, 1.442695
        %v2966 = vpow.pop %v2965
        %v2967 = vmul.f32 %v2961, 1.442695
        %v2968 = vpow.pop %v2967
        %v2969 = vmul.f32 %v2962, 1.442695
        %v2970 = vpow.pop %v2969
        %v2971 = vadd.f32 %v2964, 1.0
        %v2972 = vadd.f32 %v2966, 1.0
        %v2973 = vadd.f32 %v2968, 1.0
        %v2974 = vadd.f32 %v2970, 1.0
        %v2975 = vrcp.pop %v2971
        %v2976 = vmul.f32 1.0, %v2975
        %v2977 = vrcp.pop %v2972
        %v2978 = vmul.f32 1.0, %v2977
        %v2979 = vrcp.pop %v2973
        %v2980 = vmul.f32 1.0, %v2979
        %v2981 = vrcp.pop %v2974
        %v2982 = vmul.f32 1.0, %v2981
        %v2983 = vxor.u32 %v2925, 2147483648
        %v2984 = vxor.u32 %v2927, 2147483648
        %v2985 = vxor.u32 %v2931, 2147483648
        %v2986 = vxor.u32 %v2933, 2147483648
        %v2987 = vmul.f32 %v2983, 1.442695
        %v2988 = vpow.pop %v2987
        %v2989 = vmul.f32 %v2984, 1.442695
        %v2990 = vpow.pop %v2989
        %v2991 = vmul.f32 %v2985, 1.442695
        %v2992 = vpow.pop %v2991
        %v2993 = vmul.f32 %v2986, 1.442695
        %v2994 = vpow.pop %v2993
        %v2995 = vadd.f32 %v2988, 1.0
        %v2996 = vadd.f32 %v2990, 1.0
        %v2997 = vadd.f32 %v2992, 1.0
        %v2998 = vadd.f32 %v2994, 1.0
        %v2999 = vrcp.pop %v2995
        %v3000 = vmul.f32 1.0, %v2999
        %v3001 = vrcp.pop %v2996
        %v3002 = vmul.f32 1.0, %v3001
        %v3003 = vrcp.pop %v2997
        %v3004 = vmul.f32 1.0, %v3003
        %v3005 = vrcp.pop %v2998
        %v3006 = vmul.f32 1.0, %v3005
        %v3007 = vxor.u32 %v2937, 2147483648
        %v3008 = vxor.u32 %v2939, 2147483648
        %v3009 = vxor.u32 %v2943, 2147483648
        %v3010 = vxor.u32 %v2945, 2147483648
        %v3011 = vmul.f32 %v3007, 1.442695
        %v3012 = vpow.pop %v3011
        %v3013 = vmul.f32 %v3008, 1.442695
        %v3014 = vpow.pop %v3013
        %v3015 = vmul.f32 %v3009, 1.442695
        %v3016 = vpow.pop %v3015
        %v3017 = vmul.f32 %v3010, 1.442695
        %v3018 = vpow.pop %v3017
        %v3019 = vadd.f32 %v3012, 1.0
        %v3020 = vadd.f32 %v3014, 1.0
        %v3021 = vadd.f32 %v3016, 1.0
        %v3022 = vadd.f32 %v3018, 1.0
        %v3023 = vrcp.pop %v3019
        %v3024 = vmul.f32 1.0, %v3023
        %v3025 = vrcp.pop %v3020
        %v3026 = vmul.f32 1.0, %v3025
        %v3027 = vrcp.pop %v3021
        %v3028 = vmul.f32 1.0, %v3027
        %v3029 = vrcp.pop %v3022
        %v3030 = vmul.f32 1.0, %v3029
        %v3031 = vtanh.pop %v2949
        %v3032 = vtanh.pop %v2951
        %v3033 = vtanh.pop %v2955
        %v3034 = vtanh.pop %v2957
        %v3035 = vld [vmem:[#allocation6] sm:$0xff]
        %v3036 = vld [vmem:[#allocation6 + $0x8] sm:$0xff]
        %v3037 = vld [vmem:[#allocation6 + $0x10] sm:$0xff]
        %v3038 = vld [vmem:[#allocation6 + $0x18] sm:$0xff]
        %v3039 = vmul.f32 %v3000, %v3035
        %v3040 = vmul.f32 %v3002, %v3036
        %v3041 = vmul.f32 %v3004, %v3037
        %v3042 = vmul.f32 %v3006, %v3038
        %v3043 = vmul.f32 %v2976, %v3031
        %v3044 = vmul.f32 %v2978, %v3032
        %v3045 = vmul.f32 %v2980, %v3033
        %v3046 = vmul.f32 %v2982, %v3034
        %v3047 = vadd.f32 %v3039, %v3043
        %v3048 = vadd.f32 %v3040, %v3044
        %v3049 = vadd.f32 %v3041, %v3045
        %v3050 = vadd.f32 %v3042, %v3046
        %v3051 = vtanh.pop %v3047
        %v3052 = vtanh.pop %v3048
        %v3053 = vtanh.pop %v3049
        %v3054 = vtanh.pop %v3050
        %v3055 = vmul.f32 %v3024, %v3051
        %v3056 = vmul.f32 %v3026, %v3052
        %v3057 = vmul.f32 %v3028, %v3053
        %v3058 = vmul.f32 %v3030, %v3054
        %3059 = vst [vmem:[#allocation6] sm:$0xff] %v3047
        %3060 = vst [vmem:[#allocation6 + $0x8] sm:$0xff] %v3048
        %3061 = vst [vmem:[#allocation6 + $0x10] sm:$0xff] %v3049
        %3062 = vst [vmem:[#allocation6 + $0x18] sm:$0xff] %v3050
        %3063 = vst [vmem:[#allocation5] sm:$0xff] %v3055
        %3064 = vst [vmem:[#allocation5 + $0x8] sm:$0xff] %v3056
        %3065 = vst [vmem:[#allocation5 + $0x10] sm:$0xff] %v3057
        %3066 = vst [vmem:[#allocation5 + $0x18] sm:$0xff] %v3058
        %p3067 = scmp.ge.s32.totalorder %s39, 5
        // Predicated region
        $region93: #{tpu_custom_call.1} parent=75 // pred_check
          %p3068 = pneg %p3067
        $region94: #{tpu_custom_call.1} parent=75 // pred_check_branch
          %3070 = sbr.rel (%p3068) target = $region96
        $region95: #{tpu_custom_call.1} parent=75 // pred_region
          %v3071 = vld [vmem:[%s12] sm:$0x1]
          %v3072 = vld [vmem:[#allocation8] sm:$0x1]
          %3074 = vset.pattern.permute.xlu0 0
          %3075 = vperm.xlu0 %3074, %v3072
          %v3076 = vpop.permute.xlu0 %3075
          %v3078 = vlaneseq
          %v3079 = vshrl.u32 %v3078, 7
          %v3080 = vsub.s32 0, %v3079
          %v3081 = vrot.slane %v3076, %v3080
          %v3083 = vsel %vm1307, %v3071, 0
          %3085 = vmatprep.subr.mxu0 %v3056
          %3086 = vmatpush1.msra.mxu0 %v3055
          %3087 = vmatprep.subr.mxu0 %v3058
          %3088 = vmatpush1.msra.mxu0 %v3057
          %3089 = vmatprep.subr.mxu0 0.0
          %3090 = vmatpush1.msra.mxu0 0.0
          %3091 = vmatprep.subr.mxu0 0.0
          %3092 = vmatpush1.msra.mxu0 0.0
          %3093 = vmatprep.subr.mxu0 0.0
          %3094 = vmatpush1.msra.mxu0 0.0
          %3095 = vmatprep.subr.mxu0 0.0
          %3096 = vmatpush1.msra.mxu0 0.0
          %3097 = vmatprep.subr.mxu0 0.0
          %3098 = vmatpush1.msra.mxu0 0.0
          %3099 = vmatprep.subr.mxu0 0.0
          %3100 = vmatpush1.msra.mxu0 0.0
          %3101 = vmatprep.subr.mxu0 0.0
          %3102 = vmatpush1.msra.mxu0 0.0
          %3103 = vmatprep.subr.mxu0 0.0
          %3104 = vmatpush1.msra.mxu0 0.0
          %3105 = vmatprep.subr.mxu0 0.0
          %3106 = vmatpush1.msra.mxu0 0.0
          %3107 = vmatprep.subr.mxu0 0.0
          %3108 = vmatpush1.msra.mxu0 0.0
          %3109 = vmatprep.subr.mxu0 0.0
          %3110 = vmatpush1.msra.mxu0 0.0
          %3111 = vmatprep.subr.mxu0 0.0
          %3112 = vmatpush1.msra.mxu0 0.0
          %3113 = vmatprep.subr.mxu0 0.0
          %3114 = vmatpush1.msra.mxu0 0.0
          %3115 = vmatprep.subr.mxu0 0.0
          %3116 = vmatpush1.msra.mxu0 0.0
          %3117 = vmatprep.subr.mxu0 0.0
          %3118 = vmatpush1.msra.mxu0 0.0
          %3119 = vmatprep.subr.mxu0 0.0
          %3120 = vmatpush1.msra.mxu0 0.0
          %3121 = vmatprep.subr.mxu0 0.0
          %3122 = vmatpush1.msra.mxu0 0.0
          %3123 = vmatprep.subr.mxu0 0.0
          %3124 = vmatpush1.msra.mxu0 0.0
          %3125 = vmatprep.subr.mxu0 0.0
          %3126 = vmatpush1.msra.mxu0 0.0
          %3127 = vmatprep.subr.mxu0 0.0
          %3128 = vmatpush1.msra.mxu0 0.0
          %3129 = vmatprep.subr.mxu0 0.0
          %3130 = vmatpush1.msra.mxu0 0.0
          %3131 = vmatprep.subr.mxu0 0.0
          %3132 = vmatpush1.msra.mxu0 0.0
          %3133 = vmatprep.subr.mxu0 0.0
          %3134 = vmatpush1.msra.mxu0 0.0
          %3135 = vmatprep.subr.mxu0 0.0
          %3136 = vmatpush1.msra.mxu0 0.0
          %3137 = vmatprep.subr.mxu0 0.0
          %3138 = vmatpush1.msra.mxu0 0.0
          %3139 = vmatprep.subr.mxu0 0.0
          %3140 = vmatpush1.msra.mxu0 0.0
          %3141 = vmatprep.subr.mxu0 0.0
          %3142 = vmatpush1.msra.mxu0 0.0
          %3143 = vmatprep.subr.mxu0 0.0
          %3144 = vmatpush1.msra.mxu0 0.0
          %3145 = vmatprep.subr.mxu0 0.0
          %3146 = vmatpush1.msra.mxu0 0.0
          %3147 = vmatprep.subr.mxu0 0.0
          %3148 = vmatpush1.msra.mxu0 0.0
          %3149 = vmatprep.mubr.f32.mxu0 0.0
          %3150 = vmatmul.mubr.f32.gmra.mrb[0].mxu0 %v3083
          %v3151 = vpop.f32.mrb[0].mxu0
          %v3152 = vadd.f32 %v3081, %v3151
          %v3153 = vpop.f32.mrb[0].mxu0
          %v3154 = vadd.f32 %v3081, %v3153
          %3155 = vdwg.mxu0
          %v3156 = vxor.u32 %v3152, 2147483648
          %v3157 = vxor.u32 %v3154, 2147483648
          %v3158 = vmul.f32 %v3156, 1.442695
          %v3159 = vpow.pop %v3158
          %v3160 = vmul.f32 %v3157, 1.442695
          %v3161 = vpow.pop %v3160
          %v3162 = vadd.f32 %v3159, 1.0
          %v3163 = vadd.f32 %v3161, 1.0
          %v3164 = vrcp.pop %v3162
          %v3165 = vmul.f32 1.0, %v3164
          %v3166 = vrcp.pop %v3163
          %v3167 = vmul.f32 1.0, %v3166
          %v3170 = vcombine.low %v3165, %v3167
          %v3172 = vunpack.c.l.s4 1966171168
          %v3173 = vunpack.c.0.s8 %v3172
          %v3174 = vlaneseq
          %v3175 = vshrl.u32 %v3174, 7
          %v3176 = vsub.s32 %v3173, %v3175
          %v3177 = vrot.slane %v3170, %v3176
          %v3179 = vunpack.c.l.s4 1966171168
          %v3180 = vunpack.c.0.s8 %v3179
          %v3181 = vlaneseq
          %v3182 = vshrl.u32 %v3181, 7
          %v3183 = vsub.s32 %v3180, %v3182
          %v3184 = vrot.slane %v3177, %v3183
          %v3186 = vlaneseq
          %vm3187 = vcmp.ge.s32.totalorder %v3186, 0
          %vm3188 = vcmp.lt.s32.totalorder %v3186, 256
          %vm3189 = vmand %vm3187, %vm3188
          %3190 = vst.msk [vmem:[#allocation7] sm:$0x3] %vm3189, %v3184
          %3191 = vst.msk [vmem:[%s559] sm:$0x3] %vm3189, %v3184
        $region96: #{tpu_custom_call.1} parent=75 // pred_fallthru
          _
        %s3192 = sand.u32 %s372, 1
        %s3193 = scalar_lea.sflag [#allocation11], %s3192
        %s3194 = sand.u32 %s372, 1
        %s3195 = smul.addr %s3194, 2
        %s3196 = scalar_lea.vmem [#allocation15], %s3195
        // Predicated region
        $region97: #{tpu_custom_call.1} parent=75 // pred_check
          %p3197 = pneg %p382
        $region98: #{tpu_custom_call.1} parent=75 // pred_check_branch
          %3199 = sbr.rel (%p3197) target = $region100
        $region99: #{tpu_custom_call.1} parent=75 // pred_region
          %s3200 = ssub.s32 %s39, 5
          %p3201 = scmp.gt.s32.totalorder %s3200, 0
          %s3202 = scalar_select %p3201, %s3200, 0
          %s3204 = ssub.s32 32, 32
          %3205 = vsyncadd %s3193, %s3204
          %s3206 = smul.addr %s38, 2
          %s3207 = smul.addr %s3202, 4
          %s3208 = sadd.s32 %s3206, %s3207
          %s3209 = smul.addr %s3208, 16
          %s3210 = scalar_lea.hbm %s14, %s3209
          %s3212 = sshll.u32 %s3196, 4
          %s3213 = int_to_ptr.vmem [resolvable:$true] %s3212
          %3215 = dma.vmem_to_hbm [thread:$0]  %s3213, 32, %s3210, %s3193
        $region100: #{tpu_custom_call.1} parent=75 // pred_fallthru
          _
      $region76: #{tpu_custom_call.1} parent=5 // pred_fallthru
        _
      %p3216 = scmp.le.s32.totalorder 2, %s29
      // Predicated region
      $region101: #{tpu_custom_call.1} parent=5 // pred_check
        %p3217 = pneg %p3216
      $region102: #{tpu_custom_call.1} parent=5 // pred_check_branch
        %3219 = sbr.rel (%p3217) target = $region104
      $region103: #{tpu_custom_call.1} parent=5 // pred_region
        %s3220 = ssub.s32 %s29, 2
        // Predicated region
        $region105: #{tpu_custom_call.1} parent=103 // pred_check
          %p3221 = pneg %p388
        $region106: #{tpu_custom_call.1} parent=103 // pred_check_branch
          %3223 = sbr.rel (%p3221) target = $region108
        $region107: #{tpu_custom_call.1} parent=103 // pred_region
          %s3224 = sand.u32 %s373, 1
          %s3225 = scalar_lea.sflag [#allocation11], %s3224
          %s3226 = sand.u32 %s373, 1
          %s3227 = smul.addr %s3226, 2
          %s3228 = scalar_lea.vmem [#allocation15], %s3227
          %3229 = dma.done %s3225, 32
        $region108: #{tpu_custom_call.1} parent=103 // pred_fallthru
          _
      $region104: #{tpu_custom_call.1} parent=5 // pred_fallthru
        _
    $region6: #{tpu_custom_call.1} parent=1 // loop_footer
      %s33 = sadd.s32 1, %s29
    $region7: #{tpu_custom_call.1} parent=1 // loop_footer_branch
      %28 = sbr.rel target = $region3
    $region8: #{tpu_custom_call.1} parent=1 // loop_exit
      _
    %3230 = vsyncpa [#allocation10], 1
    %s3231 = scalar_lea.sflag [#allocation10], 1
    %3232 = vsyncpa %s3231, 1
    %3233 = vsyncpa [#allocation13], 1
    %3234 = vsyncpa [#allocation11], 1
    %s3235 = scalar_lea.sflag [#allocation11], 1
    %3236 = vsyncpa %s3235, 1

</llo_original>
